<compile_context>
chip_gen: v6e
topology: v6e:2x2x1
jax: 0.10.0
libtpu: 0.0.40
codegen_flags: <defaults>
</compile_context>

<pallas_src>
import jax
import jax.numpy as jnp
import numpy as np
from jax.experimental import pallas as pl
from jax.experimental.pallas import tpu as pltpu


# --------------------------------------------------------------------------- #
# Pallas kernel: one batch tile (B samples) per grid step.
# GATv2Conv (lin_l / lin_r, precomputed edge projection, leaky-relu attention,
# masked softmax, aggregation, bias) -> ReLU -> Flatten -> Linear -> ReLU.
# --------------------------------------------------------------------------- #
def gnn_kernel(x_ref, maskb_ref, ep_ref,
               wl_ref, bl_ref, wr_ref, br_ref, att_ref, bias_ref,
               wd_ref, bd_ref, o_ref):
    B, n, d = x_ref.shape
    c = wl_ref.shape[1]

    # Node projections: one MXU matmul over all B*n nodes in the tile.
    x = x_ref[...].reshape(B * n, d)
    xl = (jnp.dot(x, wl_ref[...], preferred_element_type=jnp.float32)
          + bl_ref[...]).reshape(B, n, c)          # W_l x (source / message term)
    xr = (jnp.dot(x, wr_ref[...], preferred_element_type=jnp.float32)
          + br_ref[...]).reshape(B, n, c)          # W_r x (target term)

    # GATv2 attention logits: a^T leaky_relu(W_r x_t + W_l x_s + W_e e_ts)
    ep = ep_ref[...]                                               # (n, n, c), batch-invariant
    h = xr[:, :, None, :] + xl[:, None, :, :] + ep[None, :, :, :]  # (B, n, n, c)
    h = jnp.where(h >= 0, h, 0.2 * h)                              # leaky_relu(0.2)
    scores = jnp.sum(h * att_ref[...][None, None, :, :], axis=-1)  # (B, n, n)

    # Masked softmax over source nodes (additive 0/-1e30 bias precomputed in wrapper).
    scores = scores + maskb_ref[...][None, :, :]
    scores = scores - jnp.max(scores, axis=-1, keepdims=True)
    w = jnp.exp(scores)
    inv = pl.reciprocal(jnp.sum(w, axis=-1, keepdims=True), approx=True)
    alpha = w * inv

    # Message aggregation + conv bias, then model.activation_fn (ReLU).
    node_out = jnp.einsum("bts,bsc->btc", alpha, xl,
                          preferred_element_type=jnp.float32) + bias_ref[...]
    node_out = jnp.maximum(node_out, 0.0)

    # Flatten + DenseLayer (Linear + ReLU) as a single contraction; output lanes
    # are padded to 128 so the store is an unmasked, lane-dense vst.
    flat = node_out.reshape(B, n * c)
    y = jnp.dot(flat, wd_ref[...], preferred_element_type=jnp.float32) + bd_ref[...]
    o_ref[...] = jnp.maximum(y, 0.0)


def gnn_forward(node_features, mask, ef_flat, params, *, batch_tile=8):
    bs, n, d = node_features.shape
    c = params["wl"].shape[1]
    out_dim = params["wd"].shape[2]

    B = min(batch_tile, bs)
    assert bs % B == 0, "batch must be divisible by the batch tile"

    # ---- batch-invariant precompute (hoisted out of the grid loop, done by XLA) ----
    ep = (ef_flat @ params["we"]).reshape(n, n, c).astype(jnp.float32)   # lin_edge
    mask_bias = jnp.where(mask > 0, 0.0, -1e30).astype(jnp.float32)      # additive mask

    # ---- lane-dense dense head: pad out_dim up to a multiple of 128 lanes ----
    out_pad = ((out_dim + 127) // 128) * 128
    wd2 = params["wd"].reshape(n * c, out_dim)
    wd2 = jnp.pad(wd2, ((0, 0), (0, out_pad - out_dim)))
    bd = jnp.pad(params["bd"], ((0, 0), (0, out_pad - out_dim)))

    def full(shape):
        nd = len(shape)
        return pl.BlockSpec(shape, lambda b, _nd=nd: (0,) * _nd)

    out = pl.pallas_call(
        gnn_kernel,
        out_shape=jax.ShapeDtypeStruct((bs, out_pad), jnp.float32),
        grid=(bs // B,),
        in_specs=[
            pl.BlockSpec((B, n, d), lambda b: (b, 0, 0)),   # node features (tiled on batch)
            full(mask_bias.shape),
            full(ep.shape),
            full(params["wl"].shape),
            full(params["bl"].shape),
            full(params["wr"].shape),
            full(params["br"].shape),
            full(params["att"].shape),
            full(params["bias"].shape),
            full(wd2.shape),
            full(bd.shape),
        ],
        out_specs=pl.BlockSpec((B, out_pad), lambda b: (b, 0)),
        compiler_params=pltpu.CompilerParams(dimension_semantics=("parallel",)),
    )(node_features, mask_bias, ep,
      params["wl"], params["bl"], params["wr"], params["br"],
      params["att"], params["bias"], wd2, bd)
    return out[:, :out_dim]


# --------------------------------------------------------------------------- #
# Pure-JAX reference (same math) for correctness check.
# --------------------------------------------------------------------------- #
def reference_forward(node_features, mask, ef_flat, params):
    bs, n, d = node_features.shape
    c = params["wl"].shape[1]

    def one(x):
        xl = x @ params["wl"] + params["bl"]
        xr = x @ params["wr"] + params["br"]
        ep = (ef_flat @ params["we"]).reshape(n, n, c)
        h = xr[:, None, :] + xl[None, :, :] + ep
        h = jnp.where(h >= 0, h, 0.2 * h)
        s = jnp.sum(h * params["att"][0][None, None, :], axis=-1)
        s = jnp.where(mask > 0, s, -1e30)
        s = s - s.max(axis=1, keepdims=True)
        w = jnp.exp(s)
        alpha = w / w.sum(axis=1, keepdims=True)
        out = jnp.maximum(alpha @ xl + params["bias"], 0.0)
        flat = out.reshape(1, n * c)
        wd2 = params["wd"].reshape(n * c, -1)
        return jnp.maximum(flat @ wd2 + params["bd"], 0.0)[0]

    return jax.vmap(one)(node_features)


# --------------------------------------------------------------------------- #
# Glue: dense adjacency mask / dense edge-feature tensor from the edge list,
# mirroring GATv2Conv's add_self_loops(fill_value='mean').
# --------------------------------------------------------------------------- #
def build_dense_graph(edge_index, edge_features, n_nodes):
    src = edge_index[0]
    dst = edge_index[1]
    edge_dim = edge_features.shape[1]

    mask = jnp.zeros((n_nodes, n_nodes), jnp.float32).at[dst, src].set(1.0)
    diag = jnp.arange(n_nodes)
    mask = mask.at[diag, diag].set(1.0)                              # self loops

    ef3 = jnp.zeros((n_nodes, n_nodes, edge_dim), jnp.float32).at[dst, src].set(edge_features)
    sums = jnp.zeros((n_nodes, edge_dim), jnp.float32).at[dst].add(edge_features)
    counts = jnp.zeros((n_nodes,), jnp.float32).at[dst].add(1.0)
    mean_attr = sums / jnp.maximum(counts, 1.0)[:, None]             # fill_value='mean'
    ef3 = ef3.at[diag, diag].set(mean_attr)
    return mask, ef3.reshape(n_nodes * n_nodes, edge_dim)


if __name__ == "__main__":
    # Small shapes consistent with the module (input_dim == hidden_dim, see notes).
    bs = 16                # >= 2 batch tiles so both v7x TensorCores get grid steps
    n_nodes = 8            # == n_genes
    input_dim = 16         # == hidden_dim
    output_dim = 8
    edge_dim = 4

    key = jax.random.PRNGKey(0)
    ks = jax.random.split(key, 12)

    # Directed ring in both directions (no self loops, no duplicates).
    src = np.concatenate([np.arange(n_nodes), (np.arange(n_nodes) + 1) % n_nodes])
    dst = np.concatenate([(np.arange(n_nodes) + 1) % n_nodes, np.arange(n_nodes)])
    edge_index = jnp.asarray(np.stack([src, dst]), jnp.int32)        # (2, 16)
    edge_features = jax.random.normal(ks[0], (edge_index.shape[1], edge_dim), jnp.float32)

    node_features = jax.random.normal(ks[1], (bs, n_nodes, input_dim), jnp.float32)

    # Deterministic parameters of the (only effective) final GATv2Conv + dense head.
    s = 0.2
    params = {
        "wl":   s * jax.random.normal(ks[2], (input_dim, output_dim), jnp.float32),
        "bl":   s * jax.random.normal(ks[3], (1, output_dim), jnp.float32),
        "wr":   s * jax.random.normal(ks[4], (input_dim, output_dim), jnp.float32),
        "br":   s * jax.random.normal(ks[5], (1, output_dim), jnp.float32),
        "we":   s * jax.random.normal(ks[6], (edge_dim, output_dim), jnp.float32),
        "att":  s * jax.random.normal(ks[7], (1, output_dim), jnp.float32),
        "bias": s * jax.random.normal(ks[8], (1, output_dim), jnp.float32),
        "wd":   s * jax.random.normal(ks[9], (n_nodes, output_dim, output_dim), jnp.float32),
        "bd":   s * jax.random.normal(ks[10], (1, output_dim), jnp.float32),
    }

    # All batch elements share the same graph (as with `same_edge_indices`), so the
    # batched edge index / repeated edge features reduce to one dense mask/EF tensor.
    mask, ef_flat = build_dense_graph(edge_index, edge_features, n_nodes)

    y = gnn_forward(node_features, mask, ef_flat, params, batch_tile=8)
    y = jax.block_until_ready(y)

    y_ref = jax.block_until_ready(reference_forward(node_features, mask, ef_flat, params))
    np.testing.assert_allclose(np.asarray(y), np.asarray(y_ref), rtol=1e-2, atol=1e-2)
    assert y.shape == (bs, output_dim)

    print("KERNEL_OK")
</pallas_src>

<mosaic_0001>
module attributes {stable_mosaic.version = 11 : i64} {
  func.func @gnn_kernel(%arg0: i32, %arg1: memref<8x8x16xf32, #tpu.memory_space<vmem>>, %arg2: memref<8x8xf32, #tpu.memory_space<vmem>>, %arg3: memref<8x8x8xf32, #tpu.memory_space<vmem>>, %arg4: memref<16x8xf32, #tpu.memory_space<vmem>>, %arg5: memref<1x8xf32, #tpu.memory_space<vmem>>, %arg6: memref<16x8xf32, #tpu.memory_space<vmem>>, %arg7: memref<1x8xf32, #tpu.memory_space<vmem>>, %arg8: memref<1x8xf32, #tpu.memory_space<vmem>>, %arg9: memref<1x8xf32, #tpu.memory_space<vmem>>, %arg10: memref<64x128xf32, #tpu.memory_space<vmem>>, %arg11: memref<1x128xf32, #tpu.memory_space<vmem>>, %arg12: memref<8x128xf32, #tpu.memory_space<vmem>>) attributes {dimension_semantics = [#tpu.dimension_semantics<parallel>], iteration_bounds = array<i64: 2>, scalar_prefetch = 0 : i64, scratch_operands = 0 : i64, tpu.core_type = #tpu.core_type<tc>, window_params = [{transform_indices = @transform_0, window_bounds = array<i64: 8, 8, 16>}, {pipeline_mode = #tpu.pipeline_mode<synchronous>, transform_indices = @transform_1, window_bounds = array<i64: 8, 8>}, {pipeline_mode = #tpu.pipeline_mode<synchronous>, transform_indices = @transform_2, window_bounds = array<i64: 8, 8, 8>}, {pipeline_mode = #tpu.pipeline_mode<synchronous>, transform_indices = @transform_3, window_bounds = array<i64: 16, 8>}, {pipeline_mode = #tpu.pipeline_mode<synchronous>, transform_indices = @transform_4, window_bounds = array<i64: 1, 8>}, {pipeline_mode = #tpu.pipeline_mode<synchronous>, transform_indices = @transform_5, window_bounds = array<i64: 16, 8>}, {pipeline_mode = #tpu.pipeline_mode<synchronous>, transform_indices = @transform_6, window_bounds = array<i64: 1, 8>}, {pipeline_mode = #tpu.pipeline_mode<synchronous>, transform_indices = @transform_7, window_bounds = array<i64: 1, 8>}, {pipeline_mode = #tpu.pipeline_mode<synchronous>, transform_indices = @transform_8, window_bounds = array<i64: 1, 8>}, {pipeline_mode = #tpu.pipeline_mode<synchronous>, transform_indices = @transform_9, window_bounds = array<i64: 64, 128>}, {pipeline_mode = #tpu.pipeline_mode<synchronous>, transform_indices = @transform_10, window_bounds = array<i64: 1, 128>}, {transform_indices = @transform_11, window_bounds = array<i64: 8, 128>}]} {
    %c0 = arith.constant 0 : index
    %c0_0 = arith.constant 0 : index
    %c0_1 = arith.constant 0 : index
    %0 = vector.load %arg1[%c0, %c0_0, %c0_1] : memref<8x8x16xf32, #tpu.memory_space<vmem>>, vector<8x8x16xf32>
    %1 = vector.shape_cast %0 : vector<8x8x16xf32> to vector<64x16xf32>
    %c0_2 = arith.constant 0 : index
    %c0_3 = arith.constant 0 : index
    %2 = vector.load %arg4[%c0_2, %c0_3] : memref<16x8xf32, #tpu.memory_space<vmem>>, vector<16x8xf32>
    %cst = arith.constant dense<0.000000e+00> : vector<64x8xf32>
    %3 = tpu.matmul %1, %2, %cst {dimension_numbers = #tpu.dot_dimension_numbers<[1], [0], [0], [1], [0, 0, 1, 1], [], []>} : vector<64x16xf32>, vector<16x8xf32>, vector<64x8xf32> -> vector<64x8xf32>
    %c0_4 = arith.constant 0 : index
    %c0_5 = arith.constant 0 : index
    %4 = vector.load %arg5[%c0_4, %c0_5] : memref<1x8xf32, #tpu.memory_space<vmem>>, vector<1x8xf32>
    %5 = vector.broadcast %4 : vector<1x8xf32> to vector<64x8xf32>
    %6 = arith.addf %3, %5 : vector<64x8xf32>
    %7 = vector.shape_cast %6 : vector<64x8xf32> to vector<8x8x8xf32>
    %c0_6 = arith.constant 0 : index
    %c0_7 = arith.constant 0 : index
    %8 = vector.load %arg6[%c0_6, %c0_7] : memref<16x8xf32, #tpu.memory_space<vmem>>, vector<16x8xf32>
    %cst_8 = arith.constant dense<0.000000e+00> : vector<64x8xf32>
    %9 = tpu.matmul %1, %8, %cst_8 {dimension_numbers = #tpu.dot_dimension_numbers<[1], [0], [0], [1], [0, 0, 1, 1], [], []>} : vector<64x16xf32>, vector<16x8xf32>, vector<64x8xf32> -> vector<64x8xf32>
    %c0_9 = arith.constant 0 : index
    %c0_10 = arith.constant 0 : index
    %10 = vector.load %arg7[%c0_9, %c0_10] : memref<1x8xf32, #tpu.memory_space<vmem>>, vector<1x8xf32>
    %11 = vector.broadcast %10 : vector<1x8xf32> to vector<64x8xf32>
    %12 = arith.addf %9, %11 : vector<64x8xf32>
    %13 = vector.shape_cast %12 : vector<64x8xf32> to vector<8x8x8xf32>
    %c0_11 = arith.constant 0 : index
    %c0_12 = arith.constant 0 : index
    %c0_13 = arith.constant 0 : index
    %14 = vector.load %arg3[%c0_11, %c0_12, %c0_13] : memref<8x8x8xf32, #tpu.memory_space<vmem>>, vector<8x8x8xf32>
    %15 = vector.shape_cast %13 : vector<8x8x8xf32> to vector<8x8x1x8xf32>
    %16 = vector.shape_cast %7 : vector<8x8x8xf32> to vector<8x1x8x8xf32>
    %17 = vector.broadcast %15 : vector<8x8x1x8xf32> to vector<8x8x8x8xf32>
    %18 = vector.broadcast %16 : vector<8x1x8x8xf32> to vector<8x8x8x8xf32>
    %19 = arith.addf %17, %18 : vector<8x8x8x8xf32>
    %20 = vector.shape_cast %14 : vector<8x8x8xf32> to vector<1x8x8x8xf32>
    %21 = vector.broadcast %20 : vector<1x8x8x8xf32> to vector<8x8x8x8xf32>
    %22 = arith.addf %19, %21 : vector<8x8x8x8xf32>
    %cst_14 = arith.constant 0.000000e+00 : f32
    %23 = vector.broadcast %cst_14 : f32 to vector<8x8x8x8xf32>
    %24 = arith.cmpf oge, %22, %23 : vector<8x8x8x8xf32>
    %cst_15 = arith.constant 2.000000e-01 : f32
    %25 = vector.broadcast %cst_15 : f32 to vector<8x8x8x8xf32>
    %26 = arith.mulf %25, %22 : vector<8x8x8x8xf32>
    %27 = arith.select %24, %22, %26 : vector<8x8x8x8xi1>, vector<8x8x8x8xf32>
    %c0_16 = arith.constant 0 : index
    %c0_17 = arith.constant 0 : index
    %28 = vector.load %arg8[%c0_16, %c0_17] : memref<1x8xf32, #tpu.memory_space<vmem>>, vector<1x8xf32>
    %29 = vector.shape_cast %28 : vector<1x8xf32> to vector<1x1x1x8xf32>
    %30 = vector.broadcast %29 : vector<1x1x1x8xf32> to vector<8x8x8x8xf32>
    %31 = arith.mulf %27, %30 : vector<8x8x8x8xf32>
    %cst_18 = arith.constant dense<0.000000e+00> : vector<8x8x8xf32>
    %32 = vector.multi_reduction <add>, %31, %cst_18 [3] : vector<8x8x8x8xf32> to vector<8x8x8xf32>
    %c0_19 = arith.constant 0 : index
    %c0_20 = arith.constant 0 : index
    %33 = vector.load %arg2[%c0_19, %c0_20] : memref<8x8xf32, #tpu.memory_space<vmem>>, vector<8x8xf32>
    %34 = vector.shape_cast %33 : vector<8x8xf32> to vector<1x8x8xf32>
    %35 = vector.broadcast %34 : vector<1x8x8xf32> to vector<8x8x8xf32>
    %36 = arith.addf %32, %35 : vector<8x8x8xf32>
    %cst_21 = arith.constant dense<0xFF800000> : vector<8x8xf32>
    %37 = vector.multi_reduction <maximumf>, %36, %cst_21 [2] : vector<8x8x8xf32> to vector<8x8xf32>
    %38 = vector.shape_cast %37 : vector<8x8xf32> to vector<8x8x1xf32>
    %39 = vector.broadcast %38 : vector<8x8x1xf32> to vector<8x8x8xf32>
    %40 = arith.subf %36, %39 : vector<8x8x8xf32>
    %41 = math.exp %40 : vector<8x8x8xf32>
    %cst_22 = arith.constant dense<0.000000e+00> : vector<8x8xf32>
    %42 = vector.multi_reduction <add>, %41, %cst_22 [2] : vector<8x8x8xf32> to vector<8x8xf32>
    %43 = vector.shape_cast %42 : vector<8x8xf32> to vector<8x8x1xf32>
    %44 = tpu.reciprocal %43 {approx = true} : vector<8x8x1xf32> -> vector<8x8x1xf32>
    %45 = vector.broadcast %44 : vector<8x8x1xf32> to vector<8x8x8xf32>
    %46 = arith.mulf %41, %45 : vector<8x8x8xf32>
    "tpu.trace_start"() <{level = 10 : i32, message = "bts,bsc->btc"}> : () -> ()
    %cst_23 = arith.constant dense<0.000000e+00> : vector<8x8x8xf32>
    %47 = tpu.matmul %46, %7, %cst_23 {dimension_numbers = #tpu.dot_dimension_numbers<[2], [1], [1], [2], [0, 0, 0, 1, 1, 2], [0], [0]>} : vector<8x8x8xf32>, vector<8x8x8xf32>, vector<8x8x8xf32> -> vector<8x8x8xf32>
    "tpu.trace_stop"() : () -> ()
    %c0_24 = arith.constant 0 : index
    %c0_25 = arith.constant 0 : index
    %48 = vector.load %arg9[%c0_24, %c0_25] : memref<1x8xf32, #tpu.memory_space<vmem>>, vector<1x8xf32>
    %49 = vector.shape_cast %48 : vector<1x8xf32> to vector<1x1x8xf32>
    %50 = vector.broadcast %49 : vector<1x1x8xf32> to vector<8x8x8xf32>
    %51 = arith.addf %47, %50 : vector<8x8x8xf32>
    %cst_26 = arith.constant 0.000000e+00 : f32
    %52 = vector.broadcast %cst_26 : f32 to vector<8x8x8xf32>
    %53 = arith.maximumf %51, %52 : vector<8x8x8xf32>
    %54 = vector.shape_cast %53 : vector<8x8x8xf32> to vector<8x64xf32>
    %c0_27 = arith.constant 0 : index
    %c0_28 = arith.constant 0 : index
    %55 = vector.load %arg10[%c0_27, %c0_28] : memref<64x128xf32, #tpu.memory_space<vmem>>, vector<64x128xf32>
    %cst_29 = arith.constant dense<0.000000e+00> : vector<8x128xf32>
    %56 = tpu.matmul %54, %55, %cst_29 {dimension_numbers = #tpu.dot_dimension_numbers<[1], [0], [0], [1], [0, 0, 1, 1], [], []>} : vector<8x64xf32>, vector<64x128xf32>, vector<8x128xf32> -> vector<8x128xf32>
    %c0_30 = arith.constant 0 : index
    %c0_31 = arith.constant 0 : index
    %57 = vector.load %arg11[%c0_30, %c0_31] : memref<1x128xf32, #tpu.memory_space<vmem>>, vector<1x128xf32>
    %58 = vector.broadcast %57 : vector<1x128xf32> to vector<8x128xf32>
    %59 = arith.addf %56, %58 : vector<8x128xf32>
    %cst_32 = arith.constant 0.000000e+00 : f32
    %60 = vector.broadcast %cst_32 : f32 to vector<8x128xf32>
    %61 = arith.maximumf %59, %60 : vector<8x128xf32>
    %c0_33 = arith.constant 0 : index
    %c0_34 = arith.constant 0 : index
    %62 = vector.load %arg12[%c0_33, %c0_34] : memref<8x128xf32, #tpu.memory_space<vmem>>, vector<8x128xf32>
    tpu.vector_store %arg12[%c0_33, %c0_34], %61 {strides = array<i32>} : memref<8x128xf32, #tpu.memory_space<vmem>>, vector<8x128xf32>,
    return
  }
  func.func @transform_0(%arg0: i32) -> (i32, i32, i32) {
    %c0_i32 = arith.constant 0 : i32
    %c0_i32_0 = arith.constant 0 : i32
    %c0_i32_1 = arith.constant 0 : i32
    return %arg0, %c0_i32, %c0_i32_0 : i32, i32, i32
  }
  func.func @transform_1(%arg0: i32) -> (i32, i32) {
    %c0_i32 = arith.constant 0 : i32
    %c0_i32_0 = arith.constant 0 : i32
    %c0_i32_1 = arith.constant 0 : i32
    return %c0_i32, %c0_i32_0 : i32, i32
  }
  func.func @transform_2(%arg0: i32) -> (i32, i32, i32) {
    %c0_i32 = arith.constant 0 : i32
    %c0_i32_0 = arith.constant 0 : i32
    %c0_i32_1 = arith.constant 0 : i32
    %c0_i32_2 = arith.constant 0 : i32
    return %c0_i32, %c0_i32_0, %c0_i32_1 : i32, i32, i32
  }
  func.func @transform_3(%arg0: i32) -> (i32, i32) {
    %c0_i32 = arith.constant 0 : i32
    %c0_i32_0 = arith.constant 0 : i32
    %c0_i32_1 = arith.constant 0 : i32
    return %c0_i32, %c0_i32_0 : i32, i32
  }
  func.func @transform_4(%arg0: i32) -> (i32, i32) {
    %c0_i32 = arith.constant 0 : i32
    %c0_i32_0 = arith.constant 0 : i32
    %c0_i32_1 = arith.constant 0 : i32
    return %c0_i32, %c0_i32_0 : i32, i32
  }
  func.func @transform_5(%arg0: i32) -> (i32, i32) {
    %c0_i32 = arith.constant 0 : i32
    %c0_i32_0 = arith.constant 0 : i32
    %c0_i32_1 = arith.constant 0 : i32
    return %c0_i32, %c0_i32_0 : i32, i32
  }
  func.func @transform_6(%arg0: i32) -> (i32, i32) {
    %c0_i32 = arith.constant 0 : i32
    %c0_i32_0 = arith.constant 0 : i32
    %c0_i32_1 = arith.constant 0 : i32
    return %c0_i32, %c0_i32_0 : i32, i32
  }
  func.func @transform_7(%arg0: i32) -> (i32, i32) {
    %c0_i32 = arith.constant 0 : i32
    %c0_i32_0 = arith.constant 0 : i32
    %c0_i32_1 = arith.constant 0 : i32
    return %c0_i32, %c0_i32_0 : i32, i32
  }
  func.func @transform_8(%arg0: i32) -> (i32, i32) {
    %c0_i32 = arith.constant 0 : i32
    %c0_i32_0 = arith.constant 0 : i32
    %c0_i32_1 = arith.constant 0 : i32
    return %c0_i32, %c0_i32_0 : i32, i32
  }
  func.func @transform_9(%arg0: i32) -> (i32, i32) {
    %c0_i32 = arith.constant 0 : i32
    %c0_i32_0 = arith.constant 0 : i32
    %c0_i32_1 = arith.constant 0 : i32
    return %c0_i32, %c0_i32_0 : i32, i32
  }
  func.func @transform_10(%arg0: i32) -> (i32, i32) {
    %c0_i32 = arith.constant 0 : i32
    %c0_i32_0 = arith.constant 0 : i32
    %c0_i32_1 = arith.constant 0 : i32
    return %c0_i32, %c0_i32_0 : i32, i32
  }
  func.func @transform_11(%arg0: i32) -> (i32, i32) {
    %c0_i32 = arith.constant 0 : i32
    %c0_i32_0 = arith.constant 0 : i32
    return %arg0, %c0_i32 : i32, i32
  }
}

</mosaic_0001>

<llo_original>
// kernel: tpu_custom_call.1
$region0: #{tpu_custom_call.1}
  #allocation0 [shape = 'u32[]', space=smem, size = 0x4, offset = 0x4, fixed_abs, tag = 'smem constant byte address 0x4 - core index']
  #allocation1 [shape = 'u32[144,128]{1,0:T(1,128)}', space=vmem, size = 0x12000, scoped, tag = 'internal scratch']
  %s0 = inlined_call_operand.hbm [shape: f32[16,8,16], index: 0, kind: input, shape index: {}]
  %s1 = inlined_call_operand.hbm [shape: f32[8,8], index: 1, kind: input, shape index: {}]
  %s2 = inlined_call_operand.hbm [shape: f32[8,8,8], index: 2, kind: input, shape index: {}]
  %s3 = inlined_call_operand.vmem [shape: f32[16,8], index: 3, kind: input, shape index: {}]
  %s4 = inlined_call_operand.hbm [shape: f32[1,8], index: 4, kind: input, shape index: {}]
  %s5 = inlined_call_operand.vmem [shape: f32[16,8], index: 5, kind: input, shape index: {}]
  %s6 = inlined_call_operand.hbm [shape: f32[1,8], index: 6, kind: input, shape index: {}]
  %s7 = inlined_call_operand.hbm [shape: f32[1,8], index: 7, kind: input, shape index: {}]
  %s8 = inlined_call_operand.hbm [shape: f32[1,8], index: 8, kind: input, shape index: {}]
  %s9 = inlined_call_operand.vmem [shape: f32[64,128], index: 9, kind: input, shape index: {}]
  %s10 = inlined_call_operand.vmem [shape: f32[1,128], index: 10, kind: input, shape index: {}]
  %s11 = inlined_call_operand.hbm [shape: f32[16,128], index: 11, kind: output, shape index: {}]
  %s12 = sld [smem:[#allocation0]]
  $region105: #{tpu_custom_call.1} parent=0
    _
  %s14 = ssub.s32 1, %s12
  %s15 = scalar_select 0, %s14, %s12
  $region1: #{tpu_custom_call.1} parent=0
    #allocation2 [shape = 'u8[65536]{0}', space=vmem, size = 0x10000, scoped, tag = 'input window, operand 0']
    #allocation3 [shape = 's32[2]{0}', space=sflag, size = 0x8, scoped, tag = 'scoped memory for tpu_custom_call.1']
    #allocation4 [shape = 's32[2]{0}', space=sflag, size = 0x8, scoped, tag = 'scoped memory for tpu_custom_call.1']
    #allocation5 [shape = 'u8[4096]{0}', space=vmem, size = 0x1000, scoped, tag = 'input window, operand 1, single buffered']
    #allocation6 [shape = 's32[1]{0}', space=sflag, size = 0x4, scoped, tag = 'scoped memory for tpu_custom_call.1']
    #allocation7 [shape = 'u8[32768]{0}', space=vmem, size = 0x8000, scoped, tag = 'input window, operand 2, single buffered']
    #allocation8 [shape = 'u8[512]{0}', space=vmem, size = 0x400, scoped, tag = 'input window, operand 4, single buffered']
    #allocation9 [shape = 's32[1]{0}', space=sflag, size = 0x4, scoped, tag = 'scoped memory for tpu_custom_call.1']
    #allocation10 [shape = 'u8[512]{0}', space=vmem, size = 0x400, scoped, tag = 'input window, operand 6, single buffered']
    #allocation11 [shape = 'u8[512]{0}', space=vmem, size = 0x400, scoped, tag = 'input window, operand 7, single buffered']
    #allocation12 [shape = 's32[1]{0}', space=sflag, size = 0x4, scoped, tag = 'scoped memory for tpu_custom_call.1']
    #allocation13 [shape = 'u8[512]{0}', space=vmem, size = 0x400, scoped, tag = 'input window, operand 8, single buffered']
    #allocation14 [shape = 'u8[8192]{0}', space=vmem, size = 0x2000, scoped, tag = 'output window, operand 0']
    %16 = vsyncpa [#allocation3], 0
    %s17 = scalar_lea.sflag [#allocation3], 1
    %18 = vsyncpa %s17, 0
    %19 = vsyncpa [#allocation6], 0
    %20 = vsyncpa [#allocation9], 0
    %21 = vsyncpa [#allocation12], 0
    %22 = vsyncpa [#allocation4], 0
    %s23 = scalar_lea.sflag [#allocation4], 1
    %24 = vsyncpa %s23, 0
    loop: start=0, step=1, limit=4
    $region2: #{tpu_custom_call.1} parent=1 // loop_pre_header
      _
    $region3: #{tpu_custom_call.1} parent=1 // loop_header
      %s26 = sphi 0, %s30
      %p27 = scmp.ge.s32.totalorder %s26, 4
      %s36 = sphi 0, %s38
      %s39 = sphi 0, %s36
      %s40 = sphi 0, %s39
      %s56 = sphi 0, %s40
      %s60 = sphi 0, %s60
      %s62 = sphi 0, %s60
      %s63 = sphi 0, %s62
      %s77 = sphi 0, %s63
      %s81 = sphi 0, %s81
      %s83 = sphi 0, %s81
      %s84 = sphi 0, %s83
      %s98 = sphi 0, %s84
      %s102 = sphi 0, %s102
      %s104 = sphi 0, %s102
      %s105 = sphi 0, %s104
      %s119 = sphi 0, %s105
      %s123 = sphi 0, %s123
      %s125 = sphi 0, %s123
      %s126 = sphi 0, %s125
      %s140 = sphi 0, %s126
      %s144 = sphi 0, %s144
      %s146 = sphi 0, %s144
      %s147 = sphi 0, %s146
      %s161 = sphi 0, %s147
      %s165 = sphi 0, %s165
      %s167 = sphi 0, %s165
      %s168 = sphi 0, %s167
      %s182 = sphi 0, %s168
      %s186 = sphi 0, %s186
      %s188 = sphi 0, %s186
      %s189 = sphi 0, %s188
      %s203 = sphi 0, %s189
      %s207 = sphi 0, %s207
      %s209 = sphi 0, %s207
      %s210 = sphi 0, %s209
      %s224 = sphi 0, %s210
      %s228 = sphi 0, %s228
      %s230 = sphi 0, %s228
      %s231 = sphi 0, %s230
      %s245 = sphi 0, %s231
      %s249 = sphi 0, %s249
      %s251 = sphi 0, %s249
      %s252 = sphi 0, %s251
      %s266 = sphi 0, %s252
      %s272 = sphi 0, %s274
      %s275 = sphi 0, %s272
      %s276 = sphi 0, %s275
      %s292 = sphi 0, %s276
    $region4: #{tpu_custom_call.1} parent=1 // loop_header_branch
      %29 = sbr.rel (%p27) target = $region8
    $region5: #{tpu_custom_call.1} parent=1 // loop_body
      %s31 = ssub.s32 %s26, 1
      %s32 = ssub.s32 %s26, 2
      %s33 = sadd.s32 %s26, 1
      %s34 = ssub.s32 %s26, %s33
      %p35 = scmp.eq.s32.totalorder %s34, 0
      %s37 = sadd.s32 %s36, 1
      %s38 = scalar_select %p35, %s36, %s37
      %p41 = pneg %p35
      %p42 = scmp.eq.s32.totalorder %s26, 1
      %p43 = por %p41, %p42
      %p44 = scmp.ne.s32.totalorder %s36, %s39
      %p45 = scmp.eq.s32.totalorder %s26, 0
      %p46 = por %p44, %p45
      %p47 = scmp.ne.s32.totalorder %s36, %s39
      %p48 = scmp.eq.s32.totalorder %s31, 1
      %p49 = por %p47, %p48
      %p50 = scmp.ne.s32.totalorder %s39, %s40
      %p51 = scmp.eq.s32.totalorder %s31, 0
      %p52 = por %p50, %p51
      %p53 = scmp.ne.s32.totalorder %s39, %s40
      %p54 = scmp.eq.s32.totalorder %s32, 1
      %p55 = por %p53, %p54
      %p57 = scmp.ne.s32.totalorder %s40, %s56
      %p58 = scmp.eq.s32.totalorder %s32, 0
      %p59 = por %p57, %p58
      %s61 = sadd.s32 %s60, 1
      %p64 = scmp.eq.s32.totalorder %s26, 1
      %p65 = scmp.ne.s32.totalorder %s60, %s62
      %p66 = scmp.eq.s32.totalorder %s26, 0
      %p67 = por %p65, %p66
      %p68 = scmp.ne.s32.totalorder %s60, %s62
      %p69 = scmp.eq.s32.totalorder %s31, 1
      %p70 = por %p68, %p69
      %p71 = scmp.ne.s32.totalorder %s62, %s63
      %p72 = scmp.eq.s32.totalorder %s31, 0
      %p73 = por %p71, %p72
      %p74 = scmp.ne.s32.totalorder %s62, %s63
      %p75 = scmp.eq.s32.totalorder %s32, 1
      %p76 = por %p74, %p75
      %p78 = scmp.ne.s32.totalorder %s63, %s77
      %p79 = scmp.eq.s32.totalorder %s32, 0
      %p80 = por %p78, %p79
      %s82 = sadd.s32 %s81, 1
      %p85 = scmp.eq.s32.totalorder %s26, 1
      %p86 = scmp.ne.s32.totalorder %s81, %s83
      %p87 = scmp.eq.s32.totalorder %s26, 0
      %p88 = por %p86, %p87
      %p89 = scmp.ne.s32.totalorder %s81, %s83
      %p90 = scmp.eq.s32.totalorder %s31, 1
      %p91 = por %p89, %p90
      %p92 = scmp.ne.s32.totalorder %s83, %s84
      %p93 = scmp.eq.s32.totalorder %s31, 0
      %p94 = por %p92, %p93
      %p95 = scmp.ne.s32.totalorder %s83, %s84
      %p96 = scmp.eq.s32.totalorder %s32, 1
      %p97 = por %p95, %p96
      %p99 = scmp.ne.s32.totalorder %s84, %s98
      %p100 = scmp.eq.s32.totalorder %s32, 0
      %p101 = por %p99, %p100
      %s103 = sadd.s32 %s102, 1
      %p106 = scmp.eq.s32.totalorder %s26, 1
      %p107 = scmp.ne.s32.totalorder %s102, %s104
      %p108 = scmp.eq.s32.totalorder %s26, 0
      %p109 = por %p107, %p108
      %p110 = scmp.ne.s32.totalorder %s102, %s104
      %p111 = scmp.eq.s32.totalorder %s31, 1
      %p112 = por %p110, %p111
      %p113 = scmp.ne.s32.totalorder %s104, %s105
      %p114 = scmp.eq.s32.totalorder %s31, 0
      %p115 = por %p113, %p114
      %p116 = scmp.ne.s32.totalorder %s104, %s105
      %p117 = scmp.eq.s32.totalorder %s32, 1
      %p118 = por %p116, %p117
      %p120 = scmp.ne.s32.totalorder %s105, %s119
      %p121 = scmp.eq.s32.totalorder %s32, 0
      %p122 = por %p120, %p121
      %s124 = sadd.s32 %s123, 1
      %p127 = scmp.eq.s32.totalorder %s26, 1
      %p128 = scmp.ne.s32.totalorder %s123, %s125
      %p129 = scmp.eq.s32.totalorder %s26, 0
      %p130 = por %p128, %p129
      %p131 = scmp.ne.s32.totalorder %s123, %s125
      %p132 = scmp.eq.s32.totalorder %s31, 1
      %p133 = por %p131, %p132
      %p134 = scmp.ne.s32.totalorder %s125, %s126
      %p135 = scmp.eq.s32.totalorder %s31, 0
      %p136 = por %p134, %p135
      %p137 = scmp.ne.s32.totalorder %s125, %s126
      %p138 = scmp.eq.s32.totalorder %s32, 1
      %p139 = por %p137, %p138
      %p141 = scmp.ne.s32.totalorder %s126, %s140
      %p142 = scmp.eq.s32.totalorder %s32, 0
      %p143 = por %p141, %p142
      %s145 = sadd.s32 %s144, 1
      %p148 = scmp.eq.s32.totalorder %s26, 1
      %p149 = scmp.ne.s32.totalorder %s144, %s146
      %p150 = scmp.eq.s32.totalorder %s26, 0
      %p151 = por %p149, %p150
      %p152 = scmp.ne.s32.totalorder %s144, %s146
      %p153 = scmp.eq.s32.totalorder %s31, 1
      %p154 = por %p152, %p153
      %p155 = scmp.ne.s32.totalorder %s146, %s147
      %p156 = scmp.eq.s32.totalorder %s31, 0
      %p157 = por %p155, %p156
      %p158 = scmp.ne.s32.totalorder %s146, %s147
      %p159 = scmp.eq.s32.totalorder %s32, 1
      %p160 = por %p158, %p159
      %p162 = scmp.ne.s32.totalorder %s147, %s161
      %p163 = scmp.eq.s32.totalorder %s32, 0
      %p164 = por %p162, %p163
      %s166 = sadd.s32 %s165, 1
      %p169 = scmp.eq.s32.totalorder %s26, 1
      %p170 = scmp.ne.s32.totalorder %s165, %s167
      %p171 = scmp.eq.s32.totalorder %s26, 0
      %p172 = por %p170, %p171
      %p173 = scmp.ne.s32.totalorder %s165, %s167
      %p174 = scmp.eq.s32.totalorder %s31, 1
      %p175 = por %p173, %p174
      %p176 = scmp.ne.s32.totalorder %s167, %s168
      %p177 = scmp.eq.s32.totalorder %s31, 0
      %p178 = por %p176, %p177
      %p179 = scmp.ne.s32.totalorder %s167, %s168
      %p180 = scmp.eq.s32.totalorder %s32, 1
      %p181 = por %p179, %p180
      %p183 = scmp.ne.s32.totalorder %s168, %s182
      %p184 = scmp.eq.s32.totalorder %s32, 0
      %p185 = por %p183, %p184
      %s187 = sadd.s32 %s186, 1
      %p190 = scmp.eq.s32.totalorder %s26, 1
      %p191 = scmp.ne.s32.totalorder %s186, %s188
      %p192 = scmp.eq.s32.totalorder %s26, 0
      %p193 = por %p191, %p192
      %p194 = scmp.ne.s32.totalorder %s186, %s188
      %p195 = scmp.eq.s32.totalorder %s31, 1
      %p196 = por %p194, %p195
      %p197 = scmp.ne.s32.totalorder %s188, %s189
      %p198 = scmp.eq.s32.totalorder %s31, 0
      %p199 = por %p197, %p198
      %p200 = scmp.ne.s32.totalorder %s188, %s189
      %p201 = scmp.eq.s32.totalorder %s32, 1
      %p202 = por %p200, %p201
      %p204 = scmp.ne.s32.totalorder %s189, %s203
      %p205 = scmp.eq.s32.totalorder %s32, 0
      %p206 = por %p204, %p205
      %s208 = sadd.s32 %s207, 1
      %p211 = scmp.eq.s32.totalorder %s26, 1
      %p212 = scmp.ne.s32.totalorder %s207, %s209
      %p213 = scmp.eq.s32.totalorder %s26, 0
      %p214 = por %p212, %p213
      %p215 = scmp.ne.s32.totalorder %s207, %s209
      %p216 = scmp.eq.s32.totalorder %s31, 1
      %p217 = por %p215, %p216
      %p218 = scmp.ne.s32.totalorder %s209, %s210
      %p219 = scmp.eq.s32.totalorder %s31, 0
      %p220 = por %p218, %p219
      %p221 = scmp.ne.s32.totalorder %s209, %s210
      %p222 = scmp.eq.s32.totalorder %s32, 1
      %p223 = por %p221, %p222
      %p225 = scmp.ne.s32.totalorder %s210, %s224
      %p226 = scmp.eq.s32.totalorder %s32, 0
      %p227 = por %p225, %p226
      %s229 = sadd.s32 %s228, 1
      %p232 = scmp.eq.s32.totalorder %s26, 1
      %p233 = scmp.ne.s32.totalorder %s228, %s230
      %p234 = scmp.eq.s32.totalorder %s26, 0
      %p235 = por %p233, %p234
      %p236 = scmp.ne.s32.totalorder %s228, %s230
      %p237 = scmp.eq.s32.totalorder %s31, 1
      %p238 = por %p236, %p237
      %p239 = scmp.ne.s32.totalorder %s230, %s231
      %p240 = scmp.eq.s32.totalorder %s31, 0
      %p241 = por %p239, %p240
      %p242 = scmp.ne.s32.totalorder %s230, %s231
      %p243 = scmp.eq.s32.totalorder %s32, 1
      %p244 = por %p242, %p243
      %p246 = scmp.ne.s32.totalorder %s231, %s245
      %p247 = scmp.eq.s32.totalorder %s32, 0
      %p248 = por %p246, %p247
      %s250 = sadd.s32 %s249, 1
      %p253 = scmp.eq.s32.totalorder %s26, 1
      %p254 = scmp.ne.s32.totalorder %s249, %s251
      %p255 = scmp.eq.s32.totalorder %s26, 0
      %p256 = por %p254, %p255
      %p257 = scmp.ne.s32.totalorder %s249, %s251
      %p258 = scmp.eq.s32.totalorder %s31, 1
      %p259 = por %p257, %p258
      %p260 = scmp.ne.s32.totalorder %s251, %s252
      %p261 = scmp.eq.s32.totalorder %s31, 0
      %p262 = por %p260, %p261
      %p263 = scmp.ne.s32.totalorder %s251, %s252
      %p264 = scmp.eq.s32.totalorder %s32, 1
      %p265 = por %p263, %p264
      %p267 = scmp.ne.s32.totalorder %s252, %s266
      %p268 = scmp.eq.s32.totalorder %s32, 0
      %p269 = por %p267, %p268
      %s270 = ssub.s32 %s26, %s33
      %p271 = scmp.eq.s32.totalorder %s270, 0
      %s273 = sadd.s32 %s272, 1
      %s274 = scalar_select %p271, %s272, %s273
      %p277 = pneg %p271
      %p278 = scmp.eq.s32.totalorder %s26, 1
      %p279 = por %p277, %p278
      %p280 = scmp.ne.s32.totalorder %s272, %s275
      %p281 = scmp.eq.s32.totalorder %s26, 0
      %p282 = por %p280, %p281
      %p283 = scmp.ne.s32.totalorder %s272, %s275
      %p284 = scmp.eq.s32.totalorder %s31, 1
      %p285 = por %p283, %p284
      %p286 = scmp.ne.s32.totalorder %s275, %s276
      %p287 = scmp.eq.s32.totalorder %s31, 0
      %p288 = por %p286, %p287
      %p289 = scmp.ne.s32.totalorder %s275, %s276
      %p290 = scmp.eq.s32.totalorder %s32, 1
      %p291 = por %p289, %p290
      %p293 = scmp.ne.s32.totalorder %s276, %s292
      %p294 = scmp.eq.s32.totalorder %s32, 0
      %p295 = por %p293, %p294
      %p296 = scmp.le.s32.totalorder 1, %s26
      %p297 = scmp.lt.s32.totalorder %s26, 3
      %p298 = pnand %p296, %p297
      %p299 = pneg %p298
      // Predicated region
      $region9: #{tpu_custom_call.1} parent=5 // pred_check
        _
      $region10: #{tpu_custom_call.1} parent=5 // pred_check_branch
        %301 = sbr.rel (%p298) target = $region12
      $region11: #{tpu_custom_call.1} parent=5 // pred_region
        %s302 = ssub.s32 %s26, 1
        // Predicated region
        $region13: #{tpu_custom_call.1} parent=11 // pred_check
          %p303 = pneg %p73
        $region14: #{tpu_custom_call.1} parent=11 // pred_check_branch
          %305 = sbr.rel (%p303) target = $region16
        $region15: #{tpu_custom_call.1} parent=11 // pred_region
          %s307 = ssub.s32 128, 128
          %308 = vsyncadd [#allocation6], %s307
          %s310 = sshll.u32 [#allocation5], 4
          %s311 = int_to_ptr.vmem [resolvable:$true] %s310
          %313 = dma.hbm_to_vmem [thread:$0]  %s1, 128, %s311, [#allocation6]
        $region16: #{tpu_custom_call.1} parent=11 // pred_fallthru
          _
        // Predicated region
        $region17: #{tpu_custom_call.1} parent=11 // pred_check
          %p314 = pneg %p94
        $region18: #{tpu_custom_call.1} parent=11 // pred_check_branch
          %316 = sbr.rel (%p314) target = $region20
        $region19: #{tpu_custom_call.1} parent=11 // pred_region
          %s318 = ssub.s32 1024, 1024
          %319 = vsyncadd [#allocation6], %s318
          %s320 = sshll.u32 [#allocation7], 4
          %s321 = int_to_ptr.vmem [resolvable:$true] %s320
          %326 = dma.hbm_to_vmem [thread:$0]  %s2, 1024, %s321, [#allocation6], 128, 128, 8
        $region20: #{tpu_custom_call.1} parent=11 // pred_fallthru
          _
        // Predicated region
        $region21: #{tpu_custom_call.1} parent=11 // pred_check
          %p327 = pneg %p115
        $region22: #{tpu_custom_call.1} parent=11 // pred_check_branch
          %329 = sbr.rel (%p327) target = $region24
        $region23: #{tpu_custom_call.1} parent=11 // pred_region
          _
        $region24: #{tpu_custom_call.1} parent=11 // pred_fallthru
          _
        // Predicated region
        $region25: #{tpu_custom_call.1} parent=11 // pred_check
          %p330 = pneg %p136
        $region26: #{tpu_custom_call.1} parent=11 // pred_check_branch
          %332 = sbr.rel (%p330) target = $region28
        $region27: #{tpu_custom_call.1} parent=11 // pred_region
          %s334 = ssub.s32 16, 16
          %335 = vsyncadd [#allocation9], %s334
          %s337 = sshll.u32 [#allocation8], 4
          %s338 = int_to_ptr.vmem [resolvable:$true] %s337
          %340 = dma.hbm_to_vmem [thread:$0]  %s4, 16, %s338, [#allocation9]
        $region28: #{tpu_custom_call.1} parent=11 // pred_fallthru
          _
        // Predicated region
        $region29: #{tpu_custom_call.1} parent=11 // pred_check
          %p341 = pneg %p157
        $region30: #{tpu_custom_call.1} parent=11 // pred_check_branch
          %343 = sbr.rel (%p341) target = $region32
        $region31: #{tpu_custom_call.1} parent=11 // pred_region
          _
        $region32: #{tpu_custom_call.1} parent=11 // pred_fallthru
          _
        // Predicated region
        $region33: #{tpu_custom_call.1} parent=11 // pred_check
          %p344 = pneg %p178
        $region34: #{tpu_custom_call.1} parent=11 // pred_check_branch
          %346 = sbr.rel (%p344) target = $region36
        $region35: #{tpu_custom_call.1} parent=11 // pred_region
          %s348 = ssub.s32 16, 16
          %349 = vsyncadd [#allocation9], %s348
          %s351 = sshll.u32 [#allocation10], 4
          %s352 = int_to_ptr.vmem [resolvable:$true] %s351
          %354 = dma.hbm_to_vmem [thread:$0]  %s6, 16, %s352, [#allocation9]
        $region36: #{tpu_custom_call.1} parent=11 // pred_fallthru
          _
        // Predicated region
        $region37: #{tpu_custom_call.1} parent=11 // pred_check
          %p355 = pneg %p199
        $region38: #{tpu_custom_call.1} parent=11 // pred_check_branch
          %357 = sbr.rel (%p355) target = $region40
        $region39: #{tpu_custom_call.1} parent=11 // pred_region
          %s359 = ssub.s32 16, 16
          %360 = vsyncadd [#allocation12], %s359
          %s362 = sshll.u32 [#allocation11], 4
          %s363 = int_to_ptr.vmem [resolvable:$true] %s362
          %365 = dma.hbm_to_vmem [thread:$0]  %s7, 16, %s363, [#allocation12]
        $region40: #{tpu_custom_call.1} parent=11 // pred_fallthru
          _
        // Predicated region
        $region41: #{tpu_custom_call.1} parent=11 // pred_check
          %p366 = pneg %p220
        $region42: #{tpu_custom_call.1} parent=11 // pred_check_branch
          %368 = sbr.rel (%p366) target = $region44
        $region43: #{tpu_custom_call.1} parent=11 // pred_region
          %s370 = ssub.s32 16, 16
          %371 = vsyncadd [#allocation12], %s370
          %s373 = sshll.u32 [#allocation13], 4
          %s374 = int_to_ptr.vmem [resolvable:$true] %s373
          %376 = dma.hbm_to_vmem [thread:$0]  %s8, 16, %s374, [#allocation12]
        $region44: #{tpu_custom_call.1} parent=11 // pred_fallthru
          _
        // Predicated region
        $region45: #{tpu_custom_call.1} parent=11 // pred_check
          %p377 = pneg %p241
        $region46: #{tpu_custom_call.1} parent=11 // pred_check_branch
          %379 = sbr.rel (%p377) target = $region48
        $region47: #{tpu_custom_call.1} parent=11 // pred_region
          _
        $region48: #{tpu_custom_call.1} parent=11 // pred_fallthru
          _
        // Predicated region
        $region49: #{tpu_custom_call.1} parent=11 // pred_check
          %p380 = pneg %p262
        $region50: #{tpu_custom_call.1} parent=11 // pred_check_branch
          %382 = sbr.rel (%p380) target = $region52
        $region51: #{tpu_custom_call.1} parent=11 // pred_region
          _
        $region52: #{tpu_custom_call.1} parent=11 // pred_fallthru
          _
      $region12: #{tpu_custom_call.1} parent=5 // pred_fallthru
        _
      %p383 = scmp.lt.s32.totalorder %s26, 2
      // Predicated region
      $region53: #{tpu_custom_call.1} parent=5 // pred_check
        %p384 = pneg %p383
      $region54: #{tpu_custom_call.1} parent=5 // pred_check_branch
        %386 = sbr.rel (%p384) target = $region56
      $region55: #{tpu_custom_call.1} parent=5 // pred_region
        // Predicated region
        $region57: #{tpu_custom_call.1} parent=55 // pred_check
          %p387 = pneg %p46
        $region58: #{tpu_custom_call.1} parent=55 // pred_check_branch
          %389 = sbr.rel (%p387) target = $region60
        $region59: #{tpu_custom_call.1} parent=55 // pred_region
          %s390 = sand.u32 %s36, 1
          %s391 = scalar_lea.sflag [#allocation3], %s390
          %s392 = sand.u32 %s36, 1
          %s393 = smul.addr %s392, 64
          %s394 = scalar_lea.vmem [#allocation2], %s393
          %s395 = smul.u32 8, %s26
          %s397 = ssub.s32 1024, 1024
          %398 = vsyncadd %s391, %s397
          %s399 = smul.addr %s395, 128
          %s400 = scalar_lea.hbm %s0, %s399
          %s401 = sshll.u32 %s394, 4
          %s402 = int_to_ptr.vmem [resolvable:$true] %s401
          %407 = dma.hbm_to_vmem [thread:$0]  %s400, 1024, %s402, %s391, 128, 128, 8
        $region60: #{tpu_custom_call.1} parent=55 // pred_fallthru
          _
      $region56: #{tpu_custom_call.1} parent=5 // pred_fallthru
        _
      %p408 = scmp.le.s32.totalorder 1, %s26
      %p409 = scmp.lt.s32.totalorder %s26, 3
      %p410 = pnand %p408, %p409
      %p411 = pneg %p410
      // Predicated region
      $region61: #{tpu_custom_call.1} parent=5 // pred_check
        _
      $region62: #{tpu_custom_call.1} parent=5 // pred_check_branch
        %413 = sbr.rel (%p410) target = $region64
      $region63: #{tpu_custom_call.1} parent=5 // pred_region
        %s414 = ssub.s32 %s26, 1
        %s415 = sand.u32 %s39, 1
        %s416 = scalar_lea.sflag [#allocation3], %s415
        %s417 = sand.u32 %s39, 1
        %s418 = smul.addr %s417, 64
        %s419 = scalar_lea.vmem [#allocation2], %s418
        // Predicated region
        $region65: #{tpu_custom_call.1} parent=63 // pred_check
          %p420 = pneg %p52
        $region66: #{tpu_custom_call.1} parent=63 // pred_check_branch
          %422 = sbr.rel (%p420) target = $region68
        $region67: #{tpu_custom_call.1} parent=63 // pred_region
          %423 = dma.done %s416, 1024
        $region68: #{tpu_custom_call.1} parent=63 // pred_fallthru
          _
        // Predicated region
        $region69: #{tpu_custom_call.1} parent=63 // pred_check
          %p424 = pneg %p73
        $region70: #{tpu_custom_call.1} parent=63 // pred_check_branch
          %426 = sbr.rel (%p424) target = $region72
        $region71: #{tpu_custom_call.1} parent=63 // pred_region
          %427 = dma.done [#allocation6], 128
        $region72: #{tpu_custom_call.1} parent=63 // pred_fallthru
          _
        // Predicated region
        $region73: #{tpu_custom_call.1} parent=63 // pred_check
          %p428 = pneg %p94
        $region74: #{tpu_custom_call.1} parent=63 // pred_check_branch
          %430 = sbr.rel (%p428) target = $region76
        $region75: #{tpu_custom_call.1} parent=63 // pred_region
          %431 = dma.done [#allocation6], 1024
        $region76: #{tpu_custom_call.1} parent=63 // pred_fallthru
          _
        // Predicated region
        $region77: #{tpu_custom_call.1} parent=63 // pred_check
          %p432 = pneg %p136
        $region78: #{tpu_custom_call.1} parent=63 // pred_check_branch
          %434 = sbr.rel (%p432) target = $region80
        $region79: #{tpu_custom_call.1} parent=63 // pred_region
          %435 = dma.done [#allocation9], 16
        $region80: #{tpu_custom_call.1} parent=63 // pred_fallthru
          _
        // Predicated region
        $region81: #{tpu_custom_call.1} parent=63 // pred_check
          %p436 = pneg %p178
        $region82: #{tpu_custom_call.1} parent=63 // pred_check_branch
          %438 = sbr.rel (%p436) target = $region84
        $region83: #{tpu_custom_call.1} parent=63 // pred_region
          %439 = dma.done [#allocation9], 16
        $region84: #{tpu_custom_call.1} parent=63 // pred_fallthru
          _
        // Predicated region
        $region85: #{tpu_custom_call.1} parent=63 // pred_check
          %p440 = pneg %p199
        $region86: #{tpu_custom_call.1} parent=63 // pred_check_branch
          %442 = sbr.rel (%p440) target = $region88
        $region87: #{tpu_custom_call.1} parent=63 // pred_region
          %443 = dma.done [#allocation12], 16
        $region88: #{tpu_custom_call.1} parent=63 // pred_fallthru
          _
        // Predicated region
        $region89: #{tpu_custom_call.1} parent=63 // pred_check
          %p444 = pneg %p220
        $region90: #{tpu_custom_call.1} parent=63 // pred_check_branch
          %446 = sbr.rel (%p444) target = $region92
        $region91: #{tpu_custom_call.1} parent=63 // pred_region
          %447 = dma.done [#allocation12], 16
        $region92: #{tpu_custom_call.1} parent=63 // pred_fallthru
          _
        %s448 = sand.u32 %s39, 1
        %s449 = scalar_lea.sflag [#allocation3], %s448
        %s450 = sand.u32 %s39, 1
        %s451 = smul.addr %s450, 64
        %s452 = scalar_lea.vmem [#allocation2], %s451
        %p453 = pneg %p52
        %p454 = pneg %p49
        %p455 = pneg %p73
        %p456 = pneg %p70
        %p457 = pneg %p94
        %p458 = pneg %p91
        %p459 = pneg %p115
        %p460 = pneg %p112
        %p461 = pneg %p136
        %p462 = pneg %p133
        %p463 = pneg %p157
        %p464 = pneg %p154
        %p465 = pneg %p178
        %p466 = pneg %p175
        %p467 = pneg %p199
        %p468 = pneg %p196
        %p469 = pneg %p220
        %p470 = pneg %p217
        %p471 = pneg %p241
        %p472 = pneg %p238
        %p473 = pneg %p262
        %p474 = pneg %p259
        %p475 = pneg %p288
        %p476 = pneg %p285
        %s477 = sand.u32 %s275, 1
        %s478 = scalar_lea.sflag [#allocation4], %s477
        %s479 = sand.u32 %s275, 1
        %s480 = smul.addr %s479, 8
        %s481 = scalar_lea.vmem [#allocation14], %s480
        %s482 = smul.u32 8, %s31
        %v483 = vld [vmem:[%s419] sm:$0xff]
        %v484 = vld [vmem:[%s419 + $0x8] sm:$0xff]
        %v485 = vld [vmem:[%s419 + $0x10] sm:$0xff]
        %v486 = vld [vmem:[%s419 + $0x18] sm:$0xff]
        %v487 = vld [vmem:[%s419 + $0x20] sm:$0xff]
        %v488 = vld [vmem:[%s419 + $0x28] sm:$0xff]
        %v489 = vld [vmem:[%s419 + $0x30] sm:$0xff]
        %v490 = vld [vmem:[%s419 + $0x38] sm:$0xff]
        %v491 = vld [vmem:[%s3] sm:$0xff]
        %v492 = vld [vmem:[%s3 + $0x8] sm:$0xff]
        %v493 = vld [vmem:[#allocation8] sm:$0x1]
        %v495 = vlaneseq
        %v496 = vshrl.u32 %v495, 7
        %v497 = vsub.s32 0, %v496
        %v498 = vrot.slane %v493, %v497
        %vm500 = vcmask 130048
        %v502 = vsel %vm500, %v483, 0
        %v505 = vsel %vm500, %v484, 0
        %v508 = vsel %vm500, %v485, 0
        %v511 = vsel %vm500, %v486, 0
        %v514 = vsel %vm500, %v487, 0
        %v517 = vsel %vm500, %v488, 0
        %v520 = vsel %vm500, %v489, 0
        %v523 = vsel %vm500, %v490, 0
        %525 = vmatprep.subr.mxu0 0.0
        %526 = vmatpush1.msra.mxu0 0.0
        %527 = vmatprep.subr.mxu0 0.0
        %528 = vmatpush1.msra.mxu0 0.0
        %529 = vmatprep.subr.mxu0 0.0
        %530 = vmatpush1.msra.mxu0 0.0
        %531 = vmatprep.subr.mxu0 0.0
        %532 = vmatpush1.msra.mxu0 0.0
        %533 = vmatprep.subr.mxu0 0.0
        %534 = vmatpush1.msra.mxu0 0.0
        %535 = vmatprep.subr.mxu0 0.0
        %536 = vmatpush1.msra.mxu0 0.0
        %537 = vmatprep.subr.mxu0 0.0
        %538 = vmatpush1.msra.mxu0 0.0
        %539 = vmatprep.subr.mxu0 0.0
        %540 = vmatpush1.msra.mxu0 0.0
        %541 = vmatprep.subr.mxu0 0.0
        %542 = vmatpush1.msra.mxu0 0.0
        %543 = vmatprep.subr.mxu0 0.0
        %544 = vmatpush1.msra.mxu0 0.0
        %545 = vmatprep.subr.mxu0 0.0
        %546 = vmatpush1.msra.mxu0 0.0
        %547 = vmatprep.subr.mxu0 0.0
        %548 = vmatpush1.msra.mxu0 0.0
        %549 = vmatprep.subr.mxu0 0.0
        %550 = vmatpush1.msra.mxu0 0.0
        %551 = vmatprep.subr.mxu0 0.0
        %552 = vmatpush1.msra.mxu0 0.0
        %553 = vmatprep.subr.mxu0 0.0
        %554 = vmatpush1.msra.mxu0 %v492
        %555 = vmatprep.subr.mxu0 0.0
        %556 = vmatpush1.msra.mxu0 %v491
        %557 = vmatprep.subr.mxu0 0.0
        %558 = vmatpush2.msra.mxu0 0.0
        %559 = vmatprep.subr.mxu0 0.0
        %560 = vmatpush2.msra.mxu0 0.0
        %561 = vmatprep.subr.mxu0 0.0
        %562 = vmatpush2.msra.mxu0 0.0
        %563 = vmatprep.subr.mxu0 0.0
        %564 = vmatpush2.msra.mxu0 0.0
        %565 = vmatprep.subr.mxu0 0.0
        %566 = vmatpush2.msra.mxu0 0.0
        %567 = vmatprep.subr.mxu0 0.0
        %568 = vmatpush2.msra.mxu0 0.0
        %569 = vmatprep.subr.mxu0 0.0
        %570 = vmatpush2.msra.mxu0 0.0
        %571 = vmatprep.subr.mxu0 0.0
        %572 = vmatpush2.msra.mxu0 0.0
        %573 = vmatprep.subr.mxu0 0.0
        %574 = vmatpush2.msra.mxu0 0.0
        %575 = vmatprep.subr.mxu0 0.0
        %576 = vmatpush2.msra.mxu0 0.0
        %577 = vmatprep.subr.mxu0 0.0
        %578 = vmatpush2.msra.mxu0 0.0
        %579 = vmatprep.subr.mxu0 0.0
        %580 = vmatpush2.msra.mxu0 0.0
        %581 = vmatprep.subr.mxu0 0.0
        %582 = vmatpush2.msra.mxu0 0.0
        %583 = vmatprep.subr.mxu0 0.0
        %584 = vmatpush2.msra.mxu0 0.0
        %585 = vmatprep.subr.mxu0 0.0
        %586 = vmatpush2.msra.mxu0 0.0
        %587 = vmatprep.subr.mxu0 0.0
        %588 = vmatpush2.msra.mxu0 0.0
        %589 = vmatprep.mubr.f32.mxu0 0.0
        %590 = vmatmul.mubr.f32.gmra.mxu0 %v502
        %v591 = vpop.f32.mrf.mxu0
        %v592 = vadd.f32 %v498, %v591
        %v593 = vpop.f32.mrf.mxu0
        %594 = vmatprep.mubr.f32.mxu0 0.0
        %595 = vmatmul.mubr.f32.gmra.mxu0 %v505
        %v596 = vpop.f32.mrf.mxu0
        %v597 = vadd.f32 %v498, %v596
        %v598 = vpop.f32.mrf.mxu0
        %599 = vmatprep.mubr.f32.mxu0 0.0
        %600 = vmatmul.mubr.f32.gmra.mxu0 %v508
        %v601 = vpop.f32.mrf.mxu0
        %v602 = vadd.f32 %v498, %v601
        %v603 = vpop.f32.mrf.mxu0
        %604 = vmatprep.mubr.f32.mxu0 0.0
        %605 = vmatmul.mubr.f32.gmra.mxu0 %v511
        %v606 = vpop.f32.mrf.mxu0
        %v607 = vadd.f32 %v498, %v606
        %v608 = vpop.f32.mrf.mxu0
        %609 = vmatprep.mubr.f32.mxu0 0.0
        %610 = vmatmul.mubr.f32.gmra.mxu0 %v514
        %v611 = vpop.f32.mrf.mxu0
        %v612 = vadd.f32 %v498, %v611
        %v613 = vpop.f32.mrf.mxu0
        %614 = vmatprep.mubr.f32.mxu0 0.0
        %615 = vmatmul.mubr.f32.gmra.mxu0 %v517
        %v616 = vpop.f32.mrf.mxu0
        %v617 = vadd.f32 %v498, %v616
        %v618 = vpop.f32.mrf.mxu0
        %619 = vmatprep.mubr.f32.mxu0 0.0
        %620 = vmatmul.mubr.f32.gmra.mxu0 %v520
        %v621 = vpop.f32.mrf.mxu0
        %v622 = vadd.f32 %v498, %v621
        %v623 = vpop.f32.mrf.mxu0
        %624 = vmatprep.mubr.f32.mxu0 0.0
        %625 = vmatmul.mubr.f32.gmra.mxu0 %v523
        %v626 = vpop.f32.mrf.mxu0
        %v627 = vadd.f32 %v498, %v626
        %v628 = vpop.f32.mrf.mxu0
        %629 = vdwg.mxu0
        %v630 = vld [vmem:[%s5] sm:$0xff]
        %v631 = vld [vmem:[%s5 + $0x8] sm:$0xff]
        %v632 = vld [vmem:[#allocation10] sm:$0x1]
        %v634 = vlaneseq
        %v635 = vshrl.u32 %v634, 7
        %v636 = vsub.s32 0, %v635
        %v637 = vrot.slane %v632, %v636
        %639 = vmatprep.subr.mxu0 0.0
        %640 = vmatpush1.msra.mxu0 0.0
        %641 = vmatprep.subr.mxu0 0.0
        %642 = vmatpush1.msra.mxu0 0.0
        %643 = vmatprep.subr.mxu0 0.0
        %644 = vmatpush1.msra.mxu0 0.0
        %645 = vmatprep.subr.mxu0 0.0
        %646 = vmatpush1.msra.mxu0 0.0
        %647 = vmatprep.subr.mxu0 0.0
        %648 = vmatpush1.msra.mxu0 0.0
        %649 = vmatprep.subr.mxu0 0.0
        %650 = vmatpush1.msra.mxu0 0.0
        %651 = vmatprep.subr.mxu0 0.0
        %652 = vmatpush1.msra.mxu0 0.0
        %653 = vmatprep.subr.mxu0 0.0
        %654 = vmatpush1.msra.mxu0 0.0
        %655 = vmatprep.subr.mxu0 0.0
        %656 = vmatpush1.msra.mxu0 0.0
        %657 = vmatprep.subr.mxu0 0.0
        %658 = vmatpush1.msra.mxu0 0.0
        %659 = vmatprep.subr.mxu0 0.0
        %660 = vmatpush1.msra.mxu0 0.0
        %661 = vmatprep.subr.mxu0 0.0
        %662 = vmatpush1.msra.mxu0 0.0
        %663 = vmatprep.subr.mxu0 0.0
        %664 = vmatpush1.msra.mxu0 0.0
        %665 = vmatprep.subr.mxu0 0.0
        %666 = vmatpush1.msra.mxu0 0.0
        %667 = vmatprep.subr.mxu0 0.0
        %668 = vmatpush1.msra.mxu0 %v631
        %669 = vmatprep.subr.mxu0 0.0
        %670 = vmatpush1.msra.mxu0 %v630
        %671 = vmatprep.subr.mxu0 0.0
        %672 = vmatpush2.msra.mxu0 0.0
        %673 = vmatprep.subr.mxu0 0.0
        %674 = vmatpush2.msra.mxu0 0.0
        %675 = vmatprep.subr.mxu0 0.0
        %676 = vmatpush2.msra.mxu0 0.0
        %677 = vmatprep.subr.mxu0 0.0
        %678 = vmatpush2.msra.mxu0 0.0
        %679 = vmatprep.subr.mxu0 0.0
        %680 = vmatpush2.msra.mxu0 0.0
        %681 = vmatprep.subr.mxu0 0.0
        %682 = vmatpush2.msra.mxu0 0.0
        %683 = vmatprep.subr.mxu0 0.0
        %684 = vmatpush2.msra.mxu0 0.0
        %685 = vmatprep.subr.mxu0 0.0
        %686 = vmatpush2.msra.mxu0 0.0
        %687 = vmatprep.subr.mxu0 0.0
        %688 = vmatpush2.msra.mxu0 0.0
        %689 = vmatprep.subr.mxu0 0.0
        %690 = vmatpush2.msra.mxu0 0.0
        %691 = vmatprep.subr.mxu0 0.0
        %692 = vmatpush2.msra.mxu0 0.0
        %693 = vmatprep.subr.mxu0 0.0
        %694 = vmatpush2.msra.mxu0 0.0
        %695 = vmatprep.subr.mxu0 0.0
        %696 = vmatpush2.msra.mxu0 0.0
        %697 = vmatprep.subr.mxu0 0.0
        %698 = vmatpush2.msra.mxu0 0.0
        %699 = vmatprep.subr.mxu0 0.0
        %700 = vmatpush2.msra.mxu0 0.0
        %701 = vmatprep.subr.mxu0 0.0
        %702 = vmatpush2.msra.mxu0 0.0
        %703 = vmatprep.mubr.f32.mxu0 0.0
        %704 = vmatmul.mubr.f32.gmra.mxu0 %v502
        %v705 = vpop.f32.mrf.mxu0
        %v706 = vadd.f32 %v637, %v705
        %v707 = vpop.f32.mrf.mxu0
        %708 = vmatprep.mubr.f32.mxu0 0.0
        %709 = vmatmul.mubr.f32.gmra.mxu0 %v505
        %v710 = vpop.f32.mrf.mxu0
        %v711 = vadd.f32 %v637, %v710
        %v712 = vpop.f32.mrf.mxu0
        %713 = vmatprep.mubr.f32.mxu0 0.0
        %714 = vmatmul.mubr.f32.gmra.mxu0 %v508
        %v715 = vpop.f32.mrf.mxu0
        %v716 = vadd.f32 %v637, %v715
        %v717 = vpop.f32.mrf.mxu0
        %718 = vmatprep.mubr.f32.mxu0 0.0
        %719 = vmatmul.mubr.f32.gmra.mxu0 %v511
        %v720 = vpop.f32.mrf.mxu0
        %v721 = vadd.f32 %v637, %v720
        %v722 = vpop.f32.mrf.mxu0
        %723 = vmatprep.mubr.f32.mxu0 0.0
        %724 = vmatmul.mubr.f32.gmra.mxu0 %v514
        %v725 = vpop.f32.mrf.mxu0
        %v726 = vadd.f32 %v637, %v725
        %v727 = vpop.f32.mrf.mxu0
        %728 = vmatprep.mubr.f32.mxu0 0.0
        %729 = vmatmul.mubr.f32.gmra.mxu0 %v517
        %v730 = vpop.f32.mrf.mxu0
        %v731 = vadd.f32 %v637, %v730
        %v732 = vpop.f32.mrf.mxu0
        %733 = vmatprep.mubr.f32.mxu0 0.0
        %734 = vmatmul.mubr.f32.gmra.mxu0 %v520
        %v735 = vpop.f32.mrf.mxu0
        %v736 = vadd.f32 %v637, %v735
        %v737 = vpop.f32.mrf.mxu0
        %738 = vmatprep.mubr.f32.mxu0 0.0
        %739 = vmatmul.mubr.f32.gmra.mxu0 %v523
        %v740 = vpop.f32.mrf.mxu0
        %v741 = vadd.f32 %v637, %v740
        %v742 = vpop.f32.mrf.mxu0
        %743 = vdwg.mxu0
        %v744 = vld [vmem:[#allocation7] sm:$0xff]
        %v745 = vld [vmem:[#allocation7 + $0x8] sm:$0xff]
        %v746 = vld [vmem:[#allocation7 + $0x10] sm:$0xff]
        %v747 = vld [vmem:[#allocation7 + $0x18] sm:$0xff]
        %v748 = vld [vmem:[#allocation7 + $0x20] sm:$0xff]
        %v749 = vld [vmem:[#allocation7 + $0x28] sm:$0xff]
        %v750 = vld [vmem:[#allocation7 + $0x30] sm:$0xff]
        %v751 = vld [vmem:[#allocation7 + $0x38] sm:$0xff]
        %v760 = vcombine.high %v706, %v706
        %v762 = vunpack.c.l.s4 1966171168
        %v763 = vunpack.c.0.s8 %v762
        %v764 = vlaneseq
        %v765 = vshrl.u32 %v764, 7
        %v766 = vsub.s32 %v763, %v765
        %v767 = vrot.slane %v706, %v766
        %v769 = vunpack.c.l.s4 1966171168
        %v770 = vunpack.c.0.s8 %v769
        %v771 = vlaneseq
        %v772 = vshrl.u32 %v771, 7
        %v773 = vsub.s32 %v770, %v772
        %v774 = vrot.slane %v760, %v773
        %v775 = vcombine.high %v767, %v767
        %v776 = vcombine.high %v774, %v774
        %v778 = vunpack.c.l.s4 1966171168
        %v779 = vunpack.c.0.s8 %v778
        %v780 = vlaneseq
        %v781 = vshrl.u32 %v780, 7
        %v782 = vsub.s32 %v779, %v781
        %v783 = vrot.slane %v767, %v782
        %v785 = vunpack.c.l.s4 1966171168
        %v786 = vunpack.c.0.s8 %v785
        %v787 = vlaneseq
        %v788 = vshrl.u32 %v787, 7
        %v789 = vsub.s32 %v786, %v788
        %v790 = vrot.slane %v774, %v789
        %v792 = vunpack.c.l.s4 1966171168
        %v793 = vunpack.c.0.s8 %v792
        %v794 = vlaneseq
        %v795 = vshrl.u32 %v794, 7
        %v796 = vsub.s32 %v793, %v795
        %v797 = vrot.slane %v775, %v796
        %v799 = vunpack.c.l.s4 1966171168
        %v800 = vunpack.c.0.s8 %v799
        %v801 = vlaneseq
        %v802 = vshrl.u32 %v801, 7
        %v803 = vsub.s32 %v800, %v802
        %v804 = vrot.slane %v776, %v803
        %v805 = vcombine.high %v783, %v783
        %v806 = vcombine.high %v790, %v790
        %v807 = vcombine.high %v797, %v797
        %v808 = vcombine.high %v804, %v804
        %v809 = vcombine.high %v711, %v711
        %v811 = vunpack.c.l.s4 1966171168
        %v812 = vunpack.c.0.s8 %v811
        %v813 = vlaneseq
        %v814 = vshrl.u32 %v813, 7
        %v815 = vsub.s32 %v812, %v814
        %v816 = vrot.slane %v711, %v815
        %v818 = vunpack.c.l.s4 1966171168
        %v819 = vunpack.c.0.s8 %v818
        %v820 = vlaneseq
        %v821 = vshrl.u32 %v820, 7
        %v822 = vsub.s32 %v819, %v821
        %v823 = vrot.slane %v809, %v822
        %v824 = vcombine.high %v816, %v816
        %v825 = vcombine.high %v823, %v823
        %v827 = vunpack.c.l.s4 1966171168
        %v828 = vunpack.c.0.s8 %v827
        %v829 = vlaneseq
        %v830 = vshrl.u32 %v829, 7
        %v831 = vsub.s32 %v828, %v830
        %v832 = vrot.slane %v816, %v831
        %v834 = vunpack.c.l.s4 1966171168
        %v835 = vunpack.c.0.s8 %v834
        %v836 = vlaneseq
        %v837 = vshrl.u32 %v836, 7
        %v838 = vsub.s32 %v835, %v837
        %v839 = vrot.slane %v823, %v838
        %v841 = vunpack.c.l.s4 1966171168
        %v842 = vunpack.c.0.s8 %v841
        %v843 = vlaneseq
        %v844 = vshrl.u32 %v843, 7
        %v845 = vsub.s32 %v842, %v844
        %v846 = vrot.slane %v824, %v845
        %v848 = vunpack.c.l.s4 1966171168
        %v849 = vunpack.c.0.s8 %v848
        %v850 = vlaneseq
        %v851 = vshrl.u32 %v850, 7
        %v852 = vsub.s32 %v849, %v851
        %v853 = vrot.slane %v825, %v852
        %v854 = vcombine.high %v832, %v832
        %v855 = vcombine.high %v839, %v839
        %v856 = vcombine.high %v846, %v846
        %v857 = vcombine.high %v853, %v853
        %v858 = vcombine.high %v716, %v716
        %v860 = vunpack.c.l.s4 1966171168
        %v861 = vunpack.c.0.s8 %v860
        %v862 = vlaneseq
        %v863 = vshrl.u32 %v862, 7
        %v864 = vsub.s32 %v861, %v863
        %v865 = vrot.slane %v716, %v864
        %v867 = vunpack.c.l.s4 1966171168
        %v868 = vunpack.c.0.s8 %v867
        %v869 = vlaneseq
        %v870 = vshrl.u32 %v869, 7
        %v871 = vsub.s32 %v868, %v870
        %v872 = vrot.slane %v858, %v871
        %v873 = vcombine.high %v865, %v865
        %v874 = vcombine.high %v872, %v872
        %v876 = vunpack.c.l.s4 1966171168
        %v877 = vunpack.c.0.s8 %v876
        %v878 = vlaneseq
        %v879 = vshrl.u32 %v878, 7
        %v880 = vsub.s32 %v877, %v879
        %v881 = vrot.slane %v865, %v880
        %v883 = vunpack.c.l.s4 1966171168
        %v884 = vunpack.c.0.s8 %v883
        %v885 = vlaneseq
        %v886 = vshrl.u32 %v885, 7
        %v887 = vsub.s32 %v884, %v886
        %v888 = vrot.slane %v872, %v887
        %v890 = vunpack.c.l.s4 1966171168
        %v891 = vunpack.c.0.s8 %v890
        %v892 = vlaneseq
        %v893 = vshrl.u32 %v892, 7
        %v894 = vsub.s32 %v891, %v893
        %v895 = vrot.slane %v873, %v894
        %v897 = vunpack.c.l.s4 1966171168
        %v898 = vunpack.c.0.s8 %v897
        %v899 = vlaneseq
        %v900 = vshrl.u32 %v899, 7
        %v901 = vsub.s32 %v898, %v900
        %v902 = vrot.slane %v874, %v901
        %v903 = vcombine.high %v881, %v881
        %v904 = vcombine.high %v888, %v888
        %v905 = vcombine.high %v895, %v895
        %v906 = vcombine.high %v902, %v902
        %v907 = vcombine.high %v721, %v721
        %v909 = vunpack.c.l.s4 1966171168
        %v910 = vunpack.c.0.s8 %v909
        %v911 = vlaneseq
        %v912 = vshrl.u32 %v911, 7
        %v913 = vsub.s32 %v910, %v912
        %v914 = vrot.slane %v721, %v913
        %v916 = vunpack.c.l.s4 1966171168
        %v917 = vunpack.c.0.s8 %v916
        %v918 = vlaneseq
        %v919 = vshrl.u32 %v918, 7
        %v920 = vsub.s32 %v917, %v919
        %v921 = vrot.slane %v907, %v920
        %v922 = vcombine.high %v914, %v914
        %v923 = vcombine.high %v921, %v921
        %v925 = vunpack.c.l.s4 1966171168
        %v926 = vunpack.c.0.s8 %v925
        %v927 = vlaneseq
        %v928 = vshrl.u32 %v927, 7
        %v929 = vsub.s32 %v926, %v928
        %v930 = vrot.slane %v914, %v929
        %v932 = vunpack.c.l.s4 1966171168
        %v933 = vunpack.c.0.s8 %v932
        %v934 = vlaneseq
        %v935 = vshrl.u32 %v934, 7
        %v936 = vsub.s32 %v933, %v935
        %v937 = vrot.slane %v921, %v936
        %v939 = vunpack.c.l.s4 1966171168
        %v940 = vunpack.c.0.s8 %v939
        %v941 = vlaneseq
        %v942 = vshrl.u32 %v941, 7
        %v943 = vsub.s32 %v940, %v942
        %v944 = vrot.slane %v922, %v943
        %v946 = vunpack.c.l.s4 1966171168
        %v947 = vunpack.c.0.s8 %v946
        %v948 = vlaneseq
        %v949 = vshrl.u32 %v948, 7
        %v950 = vsub.s32 %v947, %v949
        %v951 = vrot.slane %v923, %v950
        %v952 = vcombine.high %v930, %v930
        %v953 = vcombine.high %v937, %v937
        %v954 = vcombine.high %v944, %v944
        %v955 = vcombine.high %v951, %v951
        %v956 = vcombine.high %v726, %v726
        %v958 = vunpack.c.l.s4 1966171168
        %v959 = vunpack.c.0.s8 %v958
        %v960 = vlaneseq
        %v961 = vshrl.u32 %v960, 7
        %v962 = vsub.s32 %v959, %v961
        %v963 = vrot.slane %v726, %v962
        %v965 = vunpack.c.l.s4 1966171168
        %v966 = vunpack.c.0.s8 %v965
        %v967 = vlaneseq
        %v968 = vshrl.u32 %v967, 7
        %v969 = vsub.s32 %v966, %v968
        %v970 = vrot.slane %v956, %v969
        %v971 = vcombine.high %v963, %v963
        %v972 = vcombine.high %v970, %v970
        %v974 = vunpack.c.l.s4 1966171168
        %v975 = vunpack.c.0.s8 %v974
        %v976 = vlaneseq
        %v977 = vshrl.u32 %v976, 7
        %v978 = vsub.s32 %v975, %v977
        %v979 = vrot.slane %v963, %v978
        %v981 = vunpack.c.l.s4 1966171168
        %v982 = vunpack.c.0.s8 %v981
        %v983 = vlaneseq
        %v984 = vshrl.u32 %v983, 7
        %v985 = vsub.s32 %v982, %v984
        %v986 = vrot.slane %v970, %v985
        %v988 = vunpack.c.l.s4 1966171168
        %v989 = vunpack.c.0.s8 %v988
        %v990 = vlaneseq
        %v991 = vshrl.u32 %v990, 7
        %v992 = vsub.s32 %v989, %v991
        %v993 = vrot.slane %v971, %v992
        %v995 = vunpack.c.l.s4 1966171168
        %v996 = vunpack.c.0.s8 %v995
        %v997 = vlaneseq
        %v998 = vshrl.u32 %v997, 7
        %v999 = vsub.s32 %v996, %v998
        %v1000 = vrot.slane %v972, %v999
        %v1001 = vcombine.high %v979, %v979
        %v1002 = vcombine.high %v986, %v986
        %v1003 = vcombine.high %v993, %v993
        %v1004 = vcombine.high %v1000, %v1000
        %v1005 = vcombine.high %v731, %v731
        %v1007 = vunpack.c.l.s4 1966171168
        %v1008 = vunpack.c.0.s8 %v1007
        %v1009 = vlaneseq
        %v1010 = vshrl.u32 %v1009, 7
        %v1011 = vsub.s32 %v1008, %v1010
        %v1012 = vrot.slane %v731, %v1011
        %v1014 = vunpack.c.l.s4 1966171168
        %v1015 = vunpack.c.0.s8 %v1014
        %v1016 = vlaneseq
        %v1017 = vshrl.u32 %v1016, 7
        %v1018 = vsub.s32 %v1015, %v1017
        %v1019 = vrot.slane %v1005, %v1018
        %v1020 = vcombine.high %v1012, %v1012
        %v1021 = vcombine.high %v1019, %v1019
        %v1023 = vunpack.c.l.s4 1966171168
        %v1024 = vunpack.c.0.s8 %v1023
        %v1025 = vlaneseq
        %v1026 = vshrl.u32 %v1025, 7
        %v1027 = vsub.s32 %v1024, %v1026
        %v1028 = vrot.slane %v1012, %v1027
        %v1030 = vunpack.c.l.s4 1966171168
        %v1031 = vunpack.c.0.s8 %v1030
        %v1032 = vlaneseq
        %v1033 = vshrl.u32 %v1032, 7
        %v1034 = vsub.s32 %v1031, %v1033
        %v1035 = vrot.slane %v1019, %v1034
        %v1037 = vunpack.c.l.s4 1966171168
        %v1038 = vunpack.c.0.s8 %v1037
        %v1039 = vlaneseq
        %v1040 = vshrl.u32 %v1039, 7
        %v1041 = vsub.s32 %v1038, %v1040
        %v1042 = vrot.slane %v1020, %v1041
        %v1044 = vunpack.c.l.s4 1966171168
        %v1045 = vunpack.c.0.s8 %v1044
        %v1046 = vlaneseq
        %v1047 = vshrl.u32 %v1046, 7
        %v1048 = vsub.s32 %v1045, %v1047
        %v1049 = vrot.slane %v1021, %v1048
        %v1050 = vcombine.high %v1028, %v1028
        %v1051 = vcombine.high %v1035, %v1035
        %v1052 = vcombine.high %v1042, %v1042
        %v1053 = vcombine.high %v1049, %v1049
        %v1054 = vcombine.high %v736, %v736
        %v1056 = vunpack.c.l.s4 1966171168
        %v1057 = vunpack.c.0.s8 %v1056
        %v1058 = vlaneseq
        %v1059 = vshrl.u32 %v1058, 7
        %v1060 = vsub.s32 %v1057, %v1059
        %v1061 = vrot.slane %v736, %v1060
        %v1063 = vunpack.c.l.s4 1966171168
        %v1064 = vunpack.c.0.s8 %v1063
        %v1065 = vlaneseq
        %v1066 = vshrl.u32 %v1065, 7
        %v1067 = vsub.s32 %v1064, %v1066
        %v1068 = vrot.slane %v1054, %v1067
        %v1069 = vcombine.high %v1061, %v1061
        %v1070 = vcombine.high %v1068, %v1068
        %v1072 = vunpack.c.l.s4 1966171168
        %v1073 = vunpack.c.0.s8 %v1072
        %v1074 = vlaneseq
        %v1075 = vshrl.u32 %v1074, 7
        %v1076 = vsub.s32 %v1073, %v1075
        %v1077 = vrot.slane %v1061, %v1076
        %v1079 = vunpack.c.l.s4 1966171168
        %v1080 = vunpack.c.0.s8 %v1079
        %v1081 = vlaneseq
        %v1082 = vshrl.u32 %v1081, 7
        %v1083 = vsub.s32 %v1080, %v1082
        %v1084 = vrot.slane %v1068, %v1083
        %v1086 = vunpack.c.l.s4 1966171168
        %v1087 = vunpack.c.0.s8 %v1086
        %v1088 = vlaneseq
        %v1089 = vshrl.u32 %v1088, 7
        %v1090 = vsub.s32 %v1087, %v1089
        %v1091 = vrot.slane %v1069, %v1090
        %v1093 = vunpack.c.l.s4 1966171168
        %v1094 = vunpack.c.0.s8 %v1093
        %v1095 = vlaneseq
        %v1096 = vshrl.u32 %v1095, 7
        %v1097 = vsub.s32 %v1094, %v1096
        %v1098 = vrot.slane %v1070, %v1097
        %v1099 = vcombine.high %v1077, %v1077
        %v1100 = vcombine.high %v1084, %v1084
        %v1101 = vcombine.high %v1091, %v1091
        %v1102 = vcombine.high %v1098, %v1098
        %v1103 = vcombine.high %v741, %v741
        %v1105 = vunpack.c.l.s4 1966171168
        %v1106 = vunpack.c.0.s8 %v1105
        %v1107 = vlaneseq
        %v1108 = vshrl.u32 %v1107, 7
        %v1109 = vsub.s32 %v1106, %v1108
        %v1110 = vrot.slane %v741, %v1109
        %v1112 = vunpack.c.l.s4 1966171168
        %v1113 = vunpack.c.0.s8 %v1112
        %v1114 = vlaneseq
        %v1115 = vshrl.u32 %v1114, 7
        %v1116 = vsub.s32 %v1113, %v1115
        %v1117 = vrot.slane %v1103, %v1116
        %v1118 = vcombine.high %v1110, %v1110
        %v1119 = vcombine.high %v1117, %v1117
        %v1121 = vunpack.c.l.s4 1966171168
        %v1122 = vunpack.c.0.s8 %v1121
        %v1123 = vlaneseq
        %v1124 = vshrl.u32 %v1123, 7
        %v1125 = vsub.s32 %v1122, %v1124
        %v1126 = vrot.slane %v1110, %v1125
        %v1128 = vunpack.c.l.s4 1966171168
        %v1129 = vunpack.c.0.s8 %v1128
        %v1130 = vlaneseq
        %v1131 = vshrl.u32 %v1130, 7
        %v1132 = vsub.s32 %v1129, %v1131
        %v1133 = vrot.slane %v1117, %v1132
        %v1135 = vunpack.c.l.s4 1966171168
        %v1136 = vunpack.c.0.s8 %v1135
        %v1137 = vlaneseq
        %v1138 = vshrl.u32 %v1137, 7
        %v1139 = vsub.s32 %v1136, %v1138
        %v1140 = vrot.slane %v1118, %v1139
        %v1142 = vunpack.c.l.s4 1966171168
        %v1143 = vunpack.c.0.s8 %v1142
        %v1144 = vlaneseq
        %v1145 = vshrl.u32 %v1144, 7
        %v1146 = vsub.s32 %v1143, %v1145
        %v1147 = vrot.slane %v1119, %v1146
        %v1148 = vcombine.high %v1126, %v1126
        %v1149 = vcombine.high %v1133, %v1133
        %v1150 = vcombine.high %v1140, %v1140
        %v1151 = vcombine.high %v1147, %v1147
        %v1152 = vlaneseq
        %v1153 = vshrl.u32 %v1152, 7
        %v1154 = vsub.s32 0, %v1153
        %v1155 = vrot.slane %v783, %v1154
        %v1156 = vlaneseq
        %v1157 = vshrl.u32 %v1156, 7
        %v1158 = vsub.s32 0, %v1157
        %v1159 = vrot.slane %v797, %v1158
        %v1160 = vlaneseq
        %v1161 = vshrl.u32 %v1160, 7
        %v1162 = vsub.s32 0, %v1161
        %v1163 = vrot.slane %v805, %v1162
        %v1164 = vlaneseq
        %v1165 = vshrl.u32 %v1164, 7
        %v1166 = vsub.s32 0, %v1165
        %v1167 = vrot.slane %v807, %v1166
        %v1168 = vlaneseq
        %v1169 = vshrl.u32 %v1168, 7
        %v1170 = vsub.s32 0, %v1169
        %v1171 = vrot.slane %v790, %v1170
        %v1172 = vlaneseq
        %v1173 = vshrl.u32 %v1172, 7
        %v1174 = vsub.s32 0, %v1173
        %v1175 = vrot.slane %v804, %v1174
        %v1176 = vlaneseq
        %v1177 = vshrl.u32 %v1176, 7
        %v1178 = vsub.s32 0, %v1177
        %v1179 = vrot.slane %v806, %v1178
        %v1180 = vlaneseq
        %v1181 = vshrl.u32 %v1180, 7
        %v1182 = vsub.s32 0, %v1181
        %v1183 = vrot.slane %v808, %v1182
        %v1184 = vlaneseq
        %v1185 = vshrl.u32 %v1184, 7
        %v1186 = vsub.s32 0, %v1185
        %v1187 = vrot.slane %v832, %v1186
        %v1188 = vlaneseq
        %v1189 = vshrl.u32 %v1188, 7
        %v1190 = vsub.s32 0, %v1189
        %v1191 = vrot.slane %v846, %v1190
        %v1192 = vlaneseq
        %v1193 = vshrl.u32 %v1192, 7
        %v1194 = vsub.s32 0, %v1193
        %v1195 = vrot.slane %v854, %v1194
        %v1196 = vlaneseq
        %v1197 = vshrl.u32 %v1196, 7
        %v1198 = vsub.s32 0, %v1197
        %v1199 = vrot.slane %v856, %v1198
        %v1200 = vlaneseq
        %v1201 = vshrl.u32 %v1200, 7
        %v1202 = vsub.s32 0, %v1201
        %v1203 = vrot.slane %v839, %v1202
        %v1204 = vlaneseq
        %v1205 = vshrl.u32 %v1204, 7
        %v1206 = vsub.s32 0, %v1205
        %v1207 = vrot.slane %v853, %v1206
        %v1208 = vlaneseq
        %v1209 = vshrl.u32 %v1208, 7
        %v1210 = vsub.s32 0, %v1209
        %v1211 = vrot.slane %v855, %v1210
        %v1212 = vlaneseq
        %v1213 = vshrl.u32 %v1212, 7
        %v1214 = vsub.s32 0, %v1213
        %v1215 = vrot.slane %v857, %v1214
        %v1216 = vlaneseq
        %v1217 = vshrl.u32 %v1216, 7
        %v1218 = vsub.s32 0, %v1217
        %v1219 = vrot.slane %v881, %v1218
        %v1220 = vlaneseq
        %v1221 = vshrl.u32 %v1220, 7
        %v1222 = vsub.s32 0, %v1221
        %v1223 = vrot.slane %v895, %v1222
        %v1224 = vlaneseq
        %v1225 = vshrl.u32 %v1224, 7
        %v1226 = vsub.s32 0, %v1225
        %v1227 = vrot.slane %v903, %v1226
        %v1228 = vlaneseq
        %v1229 = vshrl.u32 %v1228, 7
        %v1230 = vsub.s32 0, %v1229
        %v1231 = vrot.slane %v905, %v1230
        %v1232 = vlaneseq
        %v1233 = vshrl.u32 %v1232, 7
        %v1234 = vsub.s32 0, %v1233
        %v1235 = vrot.slane %v888, %v1234
        %v1236 = vlaneseq
        %v1237 = vshrl.u32 %v1236, 7
        %v1238 = vsub.s32 0, %v1237
        %v1239 = vrot.slane %v902, %v1238
        %v1240 = vlaneseq
        %v1241 = vshrl.u32 %v1240, 7
        %v1242 = vsub.s32 0, %v1241
        %v1243 = vrot.slane %v904, %v1242
        %v1244 = vlaneseq
        %v1245 = vshrl.u32 %v1244, 7
        %v1246 = vsub.s32 0, %v1245
        %v1247 = vrot.slane %v906, %v1246
        %v1248 = vlaneseq
        %v1249 = vshrl.u32 %v1248, 7
        %v1250 = vsub.s32 0, %v1249
        %v1251 = vrot.slane %v930, %v1250
        %v1252 = vlaneseq
        %v1253 = vshrl.u32 %v1252, 7
        %v1254 = vsub.s32 0, %v1253
        %v1255 = vrot.slane %v944, %v1254
        %v1256 = vlaneseq
        %v1257 = vshrl.u32 %v1256, 7
        %v1258 = vsub.s32 0, %v1257
        %v1259 = vrot.slane %v952, %v1258
        %v1260 = vlaneseq
        %v1261 = vshrl.u32 %v1260, 7
        %v1262 = vsub.s32 0, %v1261
        %v1263 = vrot.slane %v954, %v1262
        %v1264 = vlaneseq
        %v1265 = vshrl.u32 %v1264, 7
        %v1266 = vsub.s32 0, %v1265
        %v1267 = vrot.slane %v937, %v1266
        %v1268 = vlaneseq
        %v1269 = vshrl.u32 %v1268, 7
        %v1270 = vsub.s32 0, %v1269
        %v1271 = vrot.slane %v951, %v1270
        %v1272 = vlaneseq
        %v1273 = vshrl.u32 %v1272, 7
        %v1274 = vsub.s32 0, %v1273
        %v1275 = vrot.slane %v953, %v1274
        %v1276 = vlaneseq
        %v1277 = vshrl.u32 %v1276, 7
        %v1278 = vsub.s32 0, %v1277
        %v1279 = vrot.slane %v955, %v1278
        %v1280 = vlaneseq
        %v1281 = vshrl.u32 %v1280, 7
        %v1282 = vsub.s32 0, %v1281
        %v1283 = vrot.slane %v979, %v1282
        %v1284 = vlaneseq
        %v1285 = vshrl.u32 %v1284, 7
        %v1286 = vsub.s32 0, %v1285
        %v1287 = vrot.slane %v993, %v1286
        %v1288 = vlaneseq
        %v1289 = vshrl.u32 %v1288, 7
        %v1290 = vsub.s32 0, %v1289
        %v1291 = vrot.slane %v1001, %v1290
        %v1292 = vlaneseq
        %v1293 = vshrl.u32 %v1292, 7
        %v1294 = vsub.s32 0, %v1293
        %v1295 = vrot.slane %v1003, %v1294
        %v1296 = vlaneseq
        %v1297 = vshrl.u32 %v1296, 7
        %v1298 = vsub.s32 0, %v1297
        %v1299 = vrot.slane %v986, %v1298
        %v1300 = vlaneseq
        %v1301 = vshrl.u32 %v1300, 7
        %v1302 = vsub.s32 0, %v1301
        %v1303 = vrot.slane %v1000, %v1302
        %v1304 = vlaneseq
        %v1305 = vshrl.u32 %v1304, 7
        %v1306 = vsub.s32 0, %v1305
        %v1307 = vrot.slane %v1002, %v1306
        %v1308 = vlaneseq
        %v1309 = vshrl.u32 %v1308, 7
        %v1310 = vsub.s32 0, %v1309
        %v1311 = vrot.slane %v1004, %v1310
        %v1312 = vlaneseq
        %v1313 = vshrl.u32 %v1312, 7
        %v1314 = vsub.s32 0, %v1313
        %v1315 = vrot.slane %v1028, %v1314
        %v1316 = vlaneseq
        %v1317 = vshrl.u32 %v1316, 7
        %v1318 = vsub.s32 0, %v1317
        %v1319 = vrot.slane %v1042, %v1318
        %v1320 = vlaneseq
        %v1321 = vshrl.u32 %v1320, 7
        %v1322 = vsub.s32 0, %v1321
        %v1323 = vrot.slane %v1050, %v1322
        %v1324 = vlaneseq
        %v1325 = vshrl.u32 %v1324, 7
        %v1326 = vsub.s32 0, %v1325
        %v1327 = vrot.slane %v1052, %v1326
        %v1328 = vlaneseq
        %v1329 = vshrl.u32 %v1328, 7
        %v1330 = vsub.s32 0, %v1329
        %v1331 = vrot.slane %v1035, %v1330
        %v1332 = vlaneseq
        %v1333 = vshrl.u32 %v1332, 7
        %v1334 = vsub.s32 0, %v1333
        %v1335 = vrot.slane %v1049, %v1334
        %v1336 = vlaneseq
        %v1337 = vshrl.u32 %v1336, 7
        %v1338 = vsub.s32 0, %v1337
        %v1339 = vrot.slane %v1051, %v1338
        %v1340 = vlaneseq
        %v1341 = vshrl.u32 %v1340, 7
        %v1342 = vsub.s32 0, %v1341
        %v1343 = vrot.slane %v1053, %v1342
        %v1344 = vlaneseq
        %v1345 = vshrl.u32 %v1344, 7
        %v1346 = vsub.s32 0, %v1345
        %v1347 = vrot.slane %v1077, %v1346
        %v1348 = vlaneseq
        %v1349 = vshrl.u32 %v1348, 7
        %v1350 = vsub.s32 0, %v1349
        %v1351 = vrot.slane %v1091, %v1350
        %v1352 = vlaneseq
        %v1353 = vshrl.u32 %v1352, 7
        %v1354 = vsub.s32 0, %v1353
        %v1355 = vrot.slane %v1099, %v1354
        %v1356 = vlaneseq
        %v1357 = vshrl.u32 %v1356, 7
        %v1358 = vsub.s32 0, %v1357
        %v1359 = vrot.slane %v1101, %v1358
        %v1360 = vlaneseq
        %v1361 = vshrl.u32 %v1360, 7
        %v1362 = vsub.s32 0, %v1361
        %v1363 = vrot.slane %v1084, %v1362
        %v1364 = vlaneseq
        %v1365 = vshrl.u32 %v1364, 7
        %v1366 = vsub.s32 0, %v1365
        %v1367 = vrot.slane %v1098, %v1366
        %v1368 = vlaneseq
        %v1369 = vshrl.u32 %v1368, 7
        %v1370 = vsub.s32 0, %v1369
        %v1371 = vrot.slane %v1100, %v1370
        %v1372 = vlaneseq
        %v1373 = vshrl.u32 %v1372, 7
        %v1374 = vsub.s32 0, %v1373
        %v1375 = vrot.slane %v1102, %v1374
        %v1376 = vlaneseq
        %v1377 = vshrl.u32 %v1376, 7
        %v1378 = vsub.s32 0, %v1377
        %v1379 = vrot.slane %v1126, %v1378
        %v1380 = vlaneseq
        %v1381 = vshrl.u32 %v1380, 7
        %v1382 = vsub.s32 0, %v1381
        %v1383 = vrot.slane %v1140, %v1382
        %v1384 = vlaneseq
        %v1385 = vshrl.u32 %v1384, 7
        %v1386 = vsub.s32 0, %v1385
        %v1387 = vrot.slane %v1148, %v1386
        %v1388 = vlaneseq
        %v1389 = vshrl.u32 %v1388, 7
        %v1390 = vsub.s32 0, %v1389
        %v1391 = vrot.slane %v1150, %v1390
        %v1392 = vlaneseq
        %v1393 = vshrl.u32 %v1392, 7
        %v1394 = vsub.s32 0, %v1393
        %v1395 = vrot.slane %v1133, %v1394
        %v1396 = vlaneseq
        %v1397 = vshrl.u32 %v1396, 7
        %v1398 = vsub.s32 0, %v1397
        %v1399 = vrot.slane %v1147, %v1398
        %v1400 = vlaneseq
        %v1401 = vshrl.u32 %v1400, 7
        %v1402 = vsub.s32 0, %v1401
        %v1403 = vrot.slane %v1149, %v1402
        %v1404 = vlaneseq
        %v1405 = vshrl.u32 %v1404, 7
        %v1406 = vsub.s32 0, %v1405
        %v1407 = vrot.slane %v1151, %v1406
        %v1472 = vadd.f32 %v1155, %v592
        %v1473 = vadd.f32 %v1159, %v592
        %v1474 = vadd.f32 %v1163, %v592
        %v1475 = vadd.f32 %v1167, %v592
        %v1476 = vadd.f32 %v1171, %v592
        %v1477 = vadd.f32 %v1175, %v592
        %v1478 = vadd.f32 %v1179, %v592
        %v1479 = vadd.f32 %v1183, %v592
        %v1480 = vadd.f32 %v1187, %v597
        %v1481 = vadd.f32 %v1191, %v597
        %v1482 = vadd.f32 %v1195, %v597
        %v1483 = vadd.f32 %v1199, %v597
        %v1484 = vadd.f32 %v1203, %v597
        %v1485 = vadd.f32 %v1207, %v597
        %v1486 = vadd.f32 %v1211, %v597
        %v1487 = vadd.f32 %v1215, %v597
        %v1488 = vadd.f32 %v1219, %v602
        %v1489 = vadd.f32 %v1223, %v602
        %v1490 = vadd.f32 %v1227, %v602
        %v1491 = vadd.f32 %v1231, %v602
        %v1492 = vadd.f32 %v1235, %v602
        %v1493 = vadd.f32 %v1239, %v602
        %v1494 = vadd.f32 %v1243, %v602
        %v1495 = vadd.f32 %v1247, %v602
        %v1496 = vadd.f32 %v1251, %v607
        %v1497 = vadd.f32 %v1255, %v607
        %v1498 = vadd.f32 %v1259, %v607
        %v1499 = vadd.f32 %v1263, %v607
        %v1500 = vadd.f32 %v1267, %v607
        %v1501 = vadd.f32 %v1271, %v607
        %v1502 = vadd.f32 %v1275, %v607
        %v1503 = vadd.f32 %v1279, %v607
        %v1504 = vadd.f32 %v1283, %v612
        %v1505 = vadd.f32 %v1287, %v612
        %v1506 = vadd.f32 %v1291, %v612
        %v1507 = vadd.f32 %v1295, %v612
        %v1508 = vadd.f32 %v1299, %v612
        %v1509 = vadd.f32 %v1303, %v612
        %v1510 = vadd.f32 %v1307, %v612
        %v1511 = vadd.f32 %v1311, %v612
        %v1512 = vadd.f32 %v1315, %v617
        %v1513 = vadd.f32 %v1319, %v617
        %v1514 = vadd.f32 %v1323, %v617
        %v1515 = vadd.f32 %v1327, %v617
        %v1516 = vadd.f32 %v1331, %v617
        %v1517 = vadd.f32 %v1335, %v617
        %v1518 = vadd.f32 %v1339, %v617
        %v1519 = vadd.f32 %v1343, %v617
        %v1520 = vadd.f32 %v1347, %v622
        %v1521 = vadd.f32 %v1351, %v622
        %v1522 = vadd.f32 %v1355, %v622
        %v1523 = vadd.f32 %v1359, %v622
        %v1524 = vadd.f32 %v1363, %v622
        %v1525 = vadd.f32 %v1367, %v622
        %v1526 = vadd.f32 %v1371, %v622
        %v1527 = vadd.f32 %v1375, %v622
        %v1528 = vadd.f32 %v1379, %v627
        %v1529 = vadd.f32 %v1383, %v627
        %v1530 = vadd.f32 %v1387, %v627
        %v1531 = vadd.f32 %v1391, %v627
        %v1532 = vadd.f32 %v1395, %v627
        %v1533 = vadd.f32 %v1399, %v627
        %v1534 = vadd.f32 %v1403, %v627
        %v1535 = vadd.f32 %v1407, %v627
        %v1536 = vadd.f32 %v1472, %v744
        %v1537 = vadd.f32 %v1473, %v745
        %v1538 = vadd.f32 %v1474, %v746
        %v1539 = vadd.f32 %v1475, %v747
        %v1540 = vadd.f32 %v1476, %v748
        %v1541 = vadd.f32 %v1477, %v749
        %v1542 = vadd.f32 %v1478, %v750
        %v1543 = vadd.f32 %v1479, %v751
        %v1544 = vadd.f32 %v1480, %v744
        %v1545 = vadd.f32 %v1481, %v745
        %v1546 = vadd.f32 %v1482, %v746
        %v1547 = vadd.f32 %v1483, %v747
        %v1548 = vadd.f32 %v1484, %v748
        %v1549 = vadd.f32 %v1485, %v749
        %v1550 = vadd.f32 %v1486, %v750
        %v1551 = vadd.f32 %v1487, %v751
        %v1552 = vadd.f32 %v1488, %v744
        %v1553 = vadd.f32 %v1489, %v745
        %v1554 = vadd.f32 %v1490, %v746
        %v1555 = vadd.f32 %v1491, %v747
        %v1556 = vadd.f32 %v1492, %v748
        %v1557 = vadd.f32 %v1493, %v749
        %v1558 = vadd.f32 %v1494, %v750
        %v1559 = vadd.f32 %v1495, %v751
        %v1560 = vadd.f32 %v1496, %v744
        %v1561 = vadd.f32 %v1497, %v745
        %v1562 = vadd.f32 %v1498, %v746
        %v1563 = vadd.f32 %v1499, %v747
        %v1564 = vadd.f32 %v1500, %v748
        %v1565 = vadd.f32 %v1501, %v749
        %v1566 = vadd.f32 %v1502, %v750
        %v1567 = vadd.f32 %v1503, %v751
        %v1568 = vadd.f32 %v1504, %v744
        %v1569 = vadd.f32 %v1505, %v745
        %v1570 = vadd.f32 %v1506, %v746
        %v1571 = vadd.f32 %v1507, %v747
        %v1572 = vadd.f32 %v1508, %v748
        %v1573 = vadd.f32 %v1509, %v749
        %v1574 = vadd.f32 %v1510, %v750
        %v1575 = vadd.f32 %v1511, %v751
        %v1576 = vadd.f32 %v1512, %v744
        %v1577 = vadd.f32 %v1513, %v745
        %v1578 = vadd.f32 %v1514, %v746
        %v1579 = vadd.f32 %v1515, %v747
        %v1580 = vadd.f32 %v1516, %v748
        %v1581 = vadd.f32 %v1517, %v749
        %v1582 = vadd.f32 %v1518, %v750
        %v1583 = vadd.f32 %v1519, %v751
        %v1584 = vadd.f32 %v1520, %v744
        %v1585 = vadd.f32 %v1521, %v745
        %v1586 = vadd.f32 %v1522, %v746
        %v1587 = vadd.f32 %v1523, %v747
        %v1588 = vadd.f32 %v1524, %v748
        %v1589 = vadd.f32 %v1525, %v749
        %v1590 = vadd.f32 %v1526, %v750
        %v1591 = vadd.f32 %v1527, %v751
        %v1592 = vadd.f32 %v1528, %v744
        %v1593 = vadd.f32 %v1529, %v745
        %v1594 = vadd.f32 %v1530, %v746
        %v1595 = vadd.f32 %v1531, %v747
        %v1596 = vadd.f32 %v1532, %v748
        %v1597 = vadd.f32 %v1533, %v749
        %v1598 = vadd.f32 %v1534, %v750
        %v1599 = vadd.f32 %v1535, %v751
        %vm1600 = vcmp.ge.f32.partialorder %v1536, 0.0
        %vm1601 = vcmp.ge.f32.partialorder %v1537, 0.0
        %vm1602 = vcmp.ge.f32.partialorder %v1538, 0.0
        %vm1603 = vcmp.ge.f32.partialorder %v1539, 0.0
        %vm1604 = vcmp.ge.f32.partialorder %v1540, 0.0
        %vm1605 = vcmp.ge.f32.partialorder %v1541, 0.0
        %vm1606 = vcmp.ge.f32.partialorder %v1542, 0.0
        %vm1607 = vcmp.ge.f32.partialorder %v1543, 0.0
        %vm1608 = vcmp.ge.f32.partialorder %v1544, 0.0
        %vm1609 = vcmp.ge.f32.partialorder %v1545, 0.0
        %vm1610 = vcmp.ge.f32.partialorder %v1546, 0.0
        %vm1611 = vcmp.ge.f32.partialorder %v1547, 0.0
        %vm1612 = vcmp.ge.f32.partialorder %v1548, 0.0
        %vm1613 = vcmp.ge.f32.partialorder %v1549, 0.0
        %vm1614 = vcmp.ge.f32.partialorder %v1550, 0.0
        %vm1615 = vcmp.ge.f32.partialorder %v1551, 0.0
        %vm1616 = vcmp.ge.f32.partialorder %v1552, 0.0
        %vm1617 = vcmp.ge.f32.partialorder %v1553, 0.0
        %vm1618 = vcmp.ge.f32.partialorder %v1554, 0.0
        %vm1619 = vcmp.ge.f32.partialorder %v1555, 0.0
        %vm1620 = vcmp.ge.f32.partialorder %v1556, 0.0
        %vm1621 = vcmp.ge.f32.partialorder %v1557, 0.0
        %vm1622 = vcmp.ge.f32.partialorder %v1558, 0.0
        %vm1623 = vcmp.ge.f32.partialorder %v1559, 0.0
        %vm1624 = vcmp.ge.f32.partialorder %v1560, 0.0
        %vm1625 = vcmp.ge.f32.partialorder %v1561, 0.0
        %vm1626 = vcmp.ge.f32.partialorder %v1562, 0.0
        %vm1627 = vcmp.ge.f32.partialorder %v1563, 0.0
        %vm1628 = vcmp.ge.f32.partialorder %v1564, 0.0
        %vm1629 = vcmp.ge.f32.partialorder %v1565, 0.0
        %vm1630 = vcmp.ge.f32.partialorder %v1566, 0.0
        %vm1631 = vcmp.ge.f32.partialorder %v1567, 0.0
        %vm1632 = vcmp.ge.f32.partialorder %v1568, 0.0
        %vm1633 = vcmp.ge.f32.partialorder %v1569, 0.0
        %vm1634 = vcmp.ge.f32.partialorder %v1570, 0.0
        %vm1635 = vcmp.ge.f32.partialorder %v1571, 0.0
        %vm1636 = vcmp.ge.f32.partialorder %v1572, 0.0
        %vm1637 = vcmp.ge.f32.partialorder %v1573, 0.0
        %vm1638 = vcmp.ge.f32.partialorder %v1574, 0.0
        %vm1639 = vcmp.ge.f32.partialorder %v1575, 0.0
        %vm1640 = vcmp.ge.f32.partialorder %v1576, 0.0
        %vm1641 = vcmp.ge.f32.partialorder %v1577, 0.0
        %vm1642 = vcmp.ge.f32.partialorder %v1578, 0.0
        %vm1643 = vcmp.ge.f32.partialorder %v1579, 0.0
        %vm1644 = vcmp.ge.f32.partialorder %v1580, 0.0
        %vm1645 = vcmp.ge.f32.partialorder %v1581, 0.0
        %vm1646 = vcmp.ge.f32.partialorder %v1582, 0.0
        %vm1647 = vcmp.ge.f32.partialorder %v1583, 0.0
        %vm1648 = vcmp.ge.f32.partialorder %v1584, 0.0
        %vm1649 = vcmp.ge.f32.partialorder %v1585, 0.0
        %vm1650 = vcmp.ge.f32.partialorder %v1586, 0.0
        %vm1651 = vcmp.ge.f32.partialorder %v1587, 0.0
        %vm1652 = vcmp.ge.f32.partialorder %v1588, 0.0
        %vm1653 = vcmp.ge.f32.partialorder %v1589, 0.0
        %vm1654 = vcmp.ge.f32.partialorder %v1590, 0.0
        %vm1655 = vcmp.ge.f32.partialorder %v1591, 0.0
        %vm1656 = vcmp.ge.f32.partialorder %v1592, 0.0
        %vm1657 = vcmp.ge.f32.partialorder %v1593, 0.0
        %vm1658 = vcmp.ge.f32.partialorder %v1594, 0.0
        %vm1659 = vcmp.ge.f32.partialorder %v1595, 0.0
        %vm1660 = vcmp.ge.f32.partialorder %v1596, 0.0
        %vm1661 = vcmp.ge.f32.partialorder %v1597, 0.0
        %vm1662 = vcmp.ge.f32.partialorder %v1598, 0.0
        %vm1663 = vcmp.ge.f32.partialorder %v1599, 0.0
        %v1664 = vmul.f32 %v1536, 0.2
        %v1665 = vmul.f32 %v1537, 0.2
        %v1666 = vmul.f32 %v1538, 0.2
        %v1667 = vmul.f32 %v1539, 0.2
        %v1668 = vmul.f32 %v1540, 0.2
        %v1669 = vmul.f32 %v1541, 0.2
        %v1670 = vmul.f32 %v1542, 0.2
        %v1671 = vmul.f32 %v1543, 0.2
        %v1672 = vmul.f32 %v1544, 0.2
        %v1673 = vmul.f32 %v1545, 0.2
        %v1674 = vmul.f32 %v1546, 0.2
        %v1675 = vmul.f32 %v1547, 0.2
        %v1676 = vmul.f32 %v1548, 0.2
        %v1677 = vmul.f32 %v1549, 0.2
        %v1678 = vmul.f32 %v1550, 0.2
        %v1679 = vmul.f32 %v1551, 0.2
        %v1680 = vmul.f32 %v1552, 0.2
        %v1681 = vmul.f32 %v1553, 0.2
        %v1682 = vmul.f32 %v1554, 0.2
        %v1683 = vmul.f32 %v1555, 0.2
        %v1684 = vmul.f32 %v1556, 0.2
        %v1685 = vmul.f32 %v1557, 0.2
        %v1686 = vmul.f32 %v1558, 0.2
        %v1687 = vmul.f32 %v1559, 0.2
        %v1688 = vmul.f32 %v1560, 0.2
        %v1689 = vmul.f32 %v1561, 0.2
        %v1690 = vmul.f32 %v1562, 0.2
        %v1691 = vmul.f32 %v1563, 0.2
        %v1692 = vmul.f32 %v1564, 0.2
        %v1693 = vmul.f32 %v1565, 0.2
        %v1694 = vmul.f32 %v1566, 0.2
        %v1695 = vmul.f32 %v1567, 0.2
        %v1696 = vmul.f32 %v1568, 0.2
        %v1697 = vmul.f32 %v1569, 0.2
        %v1698 = vmul.f32 %v1570, 0.2
        %v1699 = vmul.f32 %v1571, 0.2
        %v1700 = vmul.f32 %v1572, 0.2
        %v1701 = vmul.f32 %v1573, 0.2
        %v1702 = vmul.f32 %v1574, 0.2
        %v1703 = vmul.f32 %v1575, 0.2
        %v1704 = vmul.f32 %v1576, 0.2
        %v1705 = vmul.f32 %v1577, 0.2
        %v1706 = vmul.f32 %v1578, 0.2
        %v1707 = vmul.f32 %v1579, 0.2
        %v1708 = vmul.f32 %v1580, 0.2
        %v1709 = vmul.f32 %v1581, 0.2
        %v1710 = vmul.f32 %v1582, 0.2
        %v1711 = vmul.f32 %v1583, 0.2
        %v1712 = vmul.f32 %v1584, 0.2
        %v1713 = vmul.f32 %v1585, 0.2
        %v1714 = vmul.f32 %v1586, 0.2
        %v1715 = vmul.f32 %v1587, 0.2
        %v1716 = vmul.f32 %v1588, 0.2
        %v1717 = vmul.f32 %v1589, 0.2
        %v1718 = vmul.f32 %v1590, 0.2
        %v1719 = vmul.f32 %v1591, 0.2
        %v1720 = vmul.f32 %v1592, 0.2
        %v1721 = vmul.f32 %v1593, 0.2
        %v1722 = vmul.f32 %v1594, 0.2
        %v1723 = vmul.f32 %v1595, 0.2
        %v1724 = vmul.f32 %v1596, 0.2
        %v1725 = vmul.f32 %v1597, 0.2
        %v1726 = vmul.f32 %v1598, 0.2
        %v1727 = vmul.f32 %v1599, 0.2
        %v1728 = vsel %vm1600, %v1536, %v1664
        %v1729 = vsel %vm1601, %v1537, %v1665
        %v1730 = vsel %vm1602, %v1538, %v1666
        %v1731 = vsel %vm1603, %v1539, %v1667
        %v1732 = vsel %vm1604, %v1540, %v1668
        %v1733 = vsel %vm1605, %v1541, %v1669
        %v1734 = vsel %vm1606, %v1542, %v1670
        %v1735 = vsel %vm1607, %v1543, %v1671
        %v1736 = vsel %vm1608, %v1544, %v1672
        %v1737 = vsel %vm1609, %v1545, %v1673
        %v1738 = vsel %vm1610, %v1546, %v1674
        %v1739 = vsel %vm1611, %v1547, %v1675
        %v1740 = vsel %vm1612, %v1548, %v1676
        %v1741 = vsel %vm1613, %v1549, %v1677
        %v1742 = vsel %vm1614, %v1550, %v1678
        %v1743 = vsel %vm1615, %v1551, %v1679
        %v1744 = vsel %vm1616, %v1552, %v1680
        %v1745 = vsel %vm1617, %v1553, %v1681
        %v1746 = vsel %vm1618, %v1554, %v1682
        %v1747 = vsel %vm1619, %v1555, %v1683
        %v1748 = vsel %vm1620, %v1556, %v1684
        %v1749 = vsel %vm1621, %v1557, %v1685
        %v1750 = vsel %vm1622, %v1558, %v1686
        %v1751 = vsel %vm1623, %v1559, %v1687
        %v1752 = vsel %vm1624, %v1560, %v1688
        %v1753 = vsel %vm1625, %v1561, %v1689
        %v1754 = vsel %vm1626, %v1562, %v1690
        %v1755 = vsel %vm1627, %v1563, %v1691
        %v1756 = vsel %vm1628, %v1564, %v1692
        %v1757 = vsel %vm1629, %v1565, %v1693
        %v1758 = vsel %vm1630, %v1566, %v1694
        %v1759 = vsel %vm1631, %v1567, %v1695
        %v1760 = vsel %vm1632, %v1568, %v1696
        %v1761 = vsel %vm1633, %v1569, %v1697
        %v1762 = vsel %vm1634, %v1570, %v1698
        %v1763 = vsel %vm1635, %v1571, %v1699
        %v1764 = vsel %vm1636, %v1572, %v1700
        %v1765 = vsel %vm1637, %v1573, %v1701
        %v1766 = vsel %vm1638, %v1574, %v1702
        %v1767 = vsel %vm1639, %v1575, %v1703
        %v1768 = vsel %vm1640, %v1576, %v1704
        %v1769 = vsel %vm1641, %v1577, %v1705
        %v1770 = vsel %vm1642, %v1578, %v1706
        %v1771 = vsel %vm1643, %v1579, %v1707
        %v1772 = vsel %vm1644, %v1580, %v1708
        %v1773 = vsel %vm1645, %v1581, %v1709
        %v1774 = vsel %vm1646, %v1582, %v1710
        %v1775 = vsel %vm1647, %v1583, %v1711
        %v1776 = vsel %vm1648, %v1584, %v1712
        %v1777 = vsel %vm1649, %v1585, %v1713
        %v1778 = vsel %vm1650, %v1586, %v1714
        %v1779 = vsel %vm1651, %v1587, %v1715
        %v1780 = vsel %vm1652, %v1588, %v1716
        %v1781 = vsel %vm1653, %v1589, %v1717
        %v1782 = vsel %vm1654, %v1590, %v1718
        %v1783 = vsel %vm1655, %v1591, %v1719
        %v1784 = vsel %vm1656, %v1592, %v1720
        %v1785 = vsel %vm1657, %v1593, %v1721
        %v1786 = vsel %vm1658, %v1594, %v1722
        %v1787 = vsel %vm1659, %v1595, %v1723
        %v1788 = vsel %vm1660, %v1596, %v1724
        %v1789 = vsel %vm1661, %v1597, %v1725
        %v1790 = vsel %vm1662, %v1598, %v1726
        %v1791 = vsel %vm1663, %v1599, %v1727
        %v1792 = vld [vmem:[#allocation11] sm:$0x1]
        %v1794 = vlaneseq
        %v1795 = vshrl.u32 %v1794, 7
        %v1796 = vsub.s32 0, %v1795
        %v1797 = vrot.slane %v1792, %v1796
        %v1799 = vmul.f32 %v1728, %v1797
        %v1800 = vmul.f32 %v1729, %v1797
        %v1801 = vmul.f32 %v1730, %v1797
        %v1802 = vmul.f32 %v1731, %v1797
        %v1803 = vmul.f32 %v1732, %v1797
        %v1804 = vmul.f32 %v1733, %v1797
        %v1805 = vmul.f32 %v1734, %v1797
        %v1806 = vmul.f32 %v1735, %v1797
        %v1807 = vmul.f32 %v1736, %v1797
        %v1808 = vmul.f32 %v1737, %v1797
        %v1809 = vmul.f32 %v1738, %v1797
        %v1810 = vmul.f32 %v1739, %v1797
        %v1811 = vmul.f32 %v1740, %v1797
        %v1812 = vmul.f32 %v1741, %v1797
        %v1813 = vmul.f32 %v1742, %v1797
        %v1814 = vmul.f32 %v1743, %v1797
        %v1815 = vmul.f32 %v1744, %v1797
        %v1816 = vmul.f32 %v1745, %v1797
        %v1817 = vmul.f32 %v1746, %v1797
        %v1818 = vmul.f32 %v1747, %v1797
        %v1819 = vmul.f32 %v1748, %v1797
        %v1820 = vmul.f32 %v1749, %v1797
        %v1821 = vmul.f32 %v1750, %v1797
        %v1822 = vmul.f32 %v1751, %v1797
        %v1823 = vmul.f32 %v1752, %v1797
        %v1824 = vmul.f32 %v1753, %v1797
        %v1825 = vmul.f32 %v1754, %v1797
        %v1826 = vmul.f32 %v1755, %v1797
        %v1827 = vmul.f32 %v1756, %v1797
        %v1828 = vmul.f32 %v1757, %v1797
        %v1829 = vmul.f32 %v1758, %v1797
        %v1830 = vmul.f32 %v1759, %v1797
        %v1831 = vmul.f32 %v1760, %v1797
        %v1832 = vmul.f32 %v1761, %v1797
        %v1833 = vmul.f32 %v1762, %v1797
        %v1834 = vmul.f32 %v1763, %v1797
        %v1835 = vmul.f32 %v1764, %v1797
        %v1836 = vmul.f32 %v1765, %v1797
        %v1837 = vmul.f32 %v1766, %v1797
        %v1838 = vmul.f32 %v1767, %v1797
        %v1839 = vmul.f32 %v1768, %v1797
        %v1840 = vmul.f32 %v1769, %v1797
        %v1841 = vmul.f32 %v1770, %v1797
        %v1842 = vmul.f32 %v1771, %v1797
        %v1843 = vmul.f32 %v1772, %v1797
        %v1844 = vmul.f32 %v1773, %v1797
        %v1845 = vmul.f32 %v1774, %v1797
        %v1846 = vmul.f32 %v1775, %v1797
        %v1847 = vmul.f32 %v1776, %v1797
        %v1848 = vmul.f32 %v1777, %v1797
        %v1849 = vmul.f32 %v1778, %v1797
        %v1850 = vmul.f32 %v1779, %v1797
        %v1851 = vmul.f32 %v1780, %v1797
        %v1852 = vmul.f32 %v1781, %v1797
        %v1853 = vmul.f32 %v1782, %v1797
        %v1854 = vmul.f32 %v1783, %v1797
        %v1855 = vmul.f32 %v1784, %v1797
        %v1856 = vmul.f32 %v1785, %v1797
        %v1857 = vmul.f32 %v1786, %v1797
        %v1858 = vmul.f32 %v1787, %v1797
        %v1859 = vmul.f32 %v1788, %v1797
        %v1860 = vmul.f32 %v1789, %v1797
        %v1861 = vmul.f32 %v1790, %v1797
        %v1862 = vmul.f32 %v1791, %v1797
        %vm1863 = vcmask 64512
        %v1864 = vsel %vm1863, %v1799, 0.0
        %1865 = vadd.xlane.f32.xlu0 %v1864
        %v1866 = vpop.xlane.xlu0 %1865
        %v1867 = vsel %vm1863, %v1800, 0.0
        %1868 = vadd.xlane.f32.xlu0 %v1867
        %v1869 = vpop.xlane.xlu0 %1868
        %v1870 = vsel %vm1863, %v1801, 0.0
        %1871 = vadd.xlane.f32.xlu0 %v1870
        %v1872 = vpop.xlane.xlu0 %1871
        %v1873 = vsel %vm1863, %v1802, 0.0
        %1874 = vadd.xlane.f32.xlu0 %v1873
        %v1875 = vpop.xlane.xlu0 %1874
        %v1876 = vsel %vm1863, %v1803, 0.0
        %1877 = vadd.xlane.f32.xlu0 %v1876
        %v1878 = vpop.xlane.xlu0 %1877
        %v1879 = vsel %vm1863, %v1804, 0.0
        %1880 = vadd.xlane.f32.xlu0 %v1879
        %v1881 = vpop.xlane.xlu0 %1880
        %v1882 = vsel %vm1863, %v1805, 0.0
        %1883 = vadd.xlane.f32.xlu0 %v1882
        %v1884 = vpop.xlane.xlu0 %1883
        %v1885 = vsel %vm1863, %v1806, 0.0
        %1886 = vadd.xlane.f32.xlu0 %v1885
        %v1887 = vpop.xlane.xlu0 %1886
        %v1888 = vsel %vm1863, %v1807, 0.0
        %1889 = vadd.xlane.f32.xlu0 %v1888
        %v1890 = vpop.xlane.xlu0 %1889
        %v1891 = vsel %vm1863, %v1808, 0.0
        %1892 = vadd.xlane.f32.xlu0 %v1891
        %v1893 = vpop.xlane.xlu0 %1892
        %v1894 = vsel %vm1863, %v1809, 0.0
        %1895 = vadd.xlane.f32.xlu0 %v1894
        %v1896 = vpop.xlane.xlu0 %1895
        %v1897 = vsel %vm1863, %v1810, 0.0
        %1898 = vadd.xlane.f32.xlu0 %v1897
        %v1899 = vpop.xlane.xlu0 %1898
        %v1900 = vsel %vm1863, %v1811, 0.0
        %1901 = vadd.xlane.f32.xlu0 %v1900
        %v1902 = vpop.xlane.xlu0 %1901
        %v1903 = vsel %vm1863, %v1812, 0.0
        %1904 = vadd.xlane.f32.xlu0 %v1903
        %v1905 = vpop.xlane.xlu0 %1904
        %v1906 = vsel %vm1863, %v1813, 0.0
        %1907 = vadd.xlane.f32.xlu0 %v1906
        %v1908 = vpop.xlane.xlu0 %1907
        %v1909 = vsel %vm1863, %v1814, 0.0
        %1910 = vadd.xlane.f32.xlu0 %v1909
        %v1911 = vpop.xlane.xlu0 %1910
        %v1912 = vsel %vm1863, %v1815, 0.0
        %1913 = vadd.xlane.f32.xlu0 %v1912
        %v1914 = vpop.xlane.xlu0 %1913
        %v1915 = vsel %vm1863, %v1816, 0.0
        %1916 = vadd.xlane.f32.xlu0 %v1915
        %v1917 = vpop.xlane.xlu0 %1916
        %v1918 = vsel %vm1863, %v1817, 0.0
        %1919 = vadd.xlane.f32.xlu0 %v1918
        %v1920 = vpop.xlane.xlu0 %1919
        %v1921 = vsel %vm1863, %v1818, 0.0
        %1922 = vadd.xlane.f32.xlu0 %v1921
        %v1923 = vpop.xlane.xlu0 %1922
        %v1924 = vsel %vm1863, %v1819, 0.0
        %1925 = vadd.xlane.f32.xlu0 %v1924
        %v1926 = vpop.xlane.xlu0 %1925
        %v1927 = vsel %vm1863, %v1820, 0.0
        %1928 = vadd.xlane.f32.xlu0 %v1927
        %v1929 = vpop.xlane.xlu0 %1928
        %v1930 = vsel %vm1863, %v1821, 0.0
        %1931 = vadd.xlane.f32.xlu0 %v1930
        %v1932 = vpop.xlane.xlu0 %1931
        %v1933 = vsel %vm1863, %v1822, 0.0
        %1934 = vadd.xlane.f32.xlu0 %v1933
        %v1935 = vpop.xlane.xlu0 %1934
        %v1936 = vsel %vm1863, %v1823, 0.0
        %1937 = vadd.xlane.f32.xlu0 %v1936
        %v1938 = vpop.xlane.xlu0 %1937
        %v1939 = vsel %vm1863, %v1824, 0.0
        %1940 = vadd.xlane.f32.xlu0 %v1939
        %v1941 = vpop.xlane.xlu0 %1940
        %v1942 = vsel %vm1863, %v1825, 0.0
        %1943 = vadd.xlane.f32.xlu0 %v1942
        %v1944 = vpop.xlane.xlu0 %1943
        %v1945 = vsel %vm1863, %v1826, 0.0
        %1946 = vadd.xlane.f32.xlu0 %v1945
        %v1947 = vpop.xlane.xlu0 %1946
        %v1948 = vsel %vm1863, %v1827, 0.0
        %1949 = vadd.xlane.f32.xlu0 %v1948
        %v1950 = vpop.xlane.xlu0 %1949
        %v1951 = vsel %vm1863, %v1828, 0.0
        %1952 = vadd.xlane.f32.xlu0 %v1951
        %v1953 = vpop.xlane.xlu0 %1952
        %v1954 = vsel %vm1863, %v1829, 0.0
        %1955 = vadd.xlane.f32.xlu0 %v1954
        %v1956 = vpop.xlane.xlu0 %1955
        %v1957 = vsel %vm1863, %v1830, 0.0
        %1958 = vadd.xlane.f32.xlu0 %v1957
        %v1959 = vpop.xlane.xlu0 %1958
        %v1960 = vsel %vm1863, %v1831, 0.0
        %1961 = vadd.xlane.f32.xlu0 %v1960
        %v1962 = vpop.xlane.xlu0 %1961
        %v1963 = vsel %vm1863, %v1832, 0.0
        %1964 = vadd.xlane.f32.xlu0 %v1963
        %v1965 = vpop.xlane.xlu0 %1964
        %v1966 = vsel %vm1863, %v1833, 0.0
        %1967 = vadd.xlane.f32.xlu0 %v1966
        %v1968 = vpop.xlane.xlu0 %1967
        %v1969 = vsel %vm1863, %v1834, 0.0
        %1970 = vadd.xlane.f32.xlu0 %v1969
        %v1971 = vpop.xlane.xlu0 %1970
        %v1972 = vsel %vm1863, %v1835, 0.0
        %1973 = vadd.xlane.f32.xlu0 %v1972
        %v1974 = vpop.xlane.xlu0 %1973
        %v1975 = vsel %vm1863, %v1836, 0.0
        %1976 = vadd.xlane.f32.xlu0 %v1975
        %v1977 = vpop.xlane.xlu0 %1976
        %v1978 = vsel %vm1863, %v1837, 0.0
        %1979 = vadd.xlane.f32.xlu0 %v1978
        %v1980 = vpop.xlane.xlu0 %1979
        %v1981 = vsel %vm1863, %v1838, 0.0
        %1982 = vadd.xlane.f32.xlu0 %v1981
        %v1983 = vpop.xlane.xlu0 %1982
        %v1984 = vsel %vm1863, %v1839, 0.0
        %1985 = vadd.xlane.f32.xlu0 %v1984
        %v1986 = vpop.xlane.xlu0 %1985
        %v1987 = vsel %vm1863, %v1840, 0.0
        %1988 = vadd.xlane.f32.xlu0 %v1987
        %v1989 = vpop.xlane.xlu0 %1988
        %v1990 = vsel %vm1863, %v1841, 0.0
        %1991 = vadd.xlane.f32.xlu0 %v1990
        %v1992 = vpop.xlane.xlu0 %1991
        %v1993 = vsel %vm1863, %v1842, 0.0
        %1994 = vadd.xlane.f32.xlu0 %v1993
        %v1995 = vpop.xlane.xlu0 %1994
        %v1996 = vsel %vm1863, %v1843, 0.0
        %1997 = vadd.xlane.f32.xlu0 %v1996
        %v1998 = vpop.xlane.xlu0 %1997
        %v1999 = vsel %vm1863, %v1844, 0.0
        %2000 = vadd.xlane.f32.xlu0 %v1999
        %v2001 = vpop.xlane.xlu0 %2000
        %v2002 = vsel %vm1863, %v1845, 0.0
        %2003 = vadd.xlane.f32.xlu0 %v2002
        %v2004 = vpop.xlane.xlu0 %2003
        %v2005 = vsel %vm1863, %v1846, 0.0
        %2006 = vadd.xlane.f32.xlu0 %v2005
        %v2007 = vpop.xlane.xlu0 %2006
        %v2008 = vsel %vm1863, %v1847, 0.0
        %2009 = vadd.xlane.f32.xlu0 %v2008
        %v2010 = vpop.xlane.xlu0 %2009
        %v2011 = vsel %vm1863, %v1848, 0.0
        %2012 = vadd.xlane.f32.xlu0 %v2011
        %v2013 = vpop.xlane.xlu0 %2012
        %v2014 = vsel %vm1863, %v1849, 0.0
        %2015 = vadd.xlane.f32.xlu0 %v2014
        %v2016 = vpop.xlane.xlu0 %2015
        %v2017 = vsel %vm1863, %v1850, 0.0
        %2018 = vadd.xlane.f32.xlu0 %v2017
        %v2019 = vpop.xlane.xlu0 %2018
        %v2020 = vsel %vm1863, %v1851, 0.0
        %2021 = vadd.xlane.f32.xlu0 %v2020
        %v2022 = vpop.xlane.xlu0 %2021
        %v2023 = vsel %vm1863, %v1852, 0.0
        %2024 = vadd.xlane.f32.xlu0 %v2023
        %v2025 = vpop.xlane.xlu0 %2024
        %v2026 = vsel %vm1863, %v1853, 0.0
        %2027 = vadd.xlane.f32.xlu0 %v2026
        %v2028 = vpop.xlane.xlu0 %2027
        %v2029 = vsel %vm1863, %v1854, 0.0
        %2030 = vadd.xlane.f32.xlu0 %v2029
        %v2031 = vpop.xlane.xlu0 %2030
        %v2032 = vsel %vm1863, %v1855, 0.0
        %2033 = vadd.xlane.f32.xlu0 %v2032
        %v2034 = vpop.xlane.xlu0 %2033
        %v2035 = vsel %vm1863, %v1856, 0.0
        %2036 = vadd.xlane.f32.xlu0 %v2035
        %v2037 = vpop.xlane.xlu0 %2036
        %v2038 = vsel %vm1863, %v1857, 0.0
        %2039 = vadd.xlane.f32.xlu0 %v2038
        %v2040 = vpop.xlane.xlu0 %2039
        %v2041 = vsel %vm1863, %v1858, 0.0
        %2042 = vadd.xlane.f32.xlu0 %v2041
        %v2043 = vpop.xlane.xlu0 %2042
        %v2044 = vsel %vm1863, %v1859, 0.0
        %2045 = vadd.xlane.f32.xlu0 %v2044
        %v2046 = vpop.xlane.xlu0 %2045
        %v2047 = vsel %vm1863, %v1860, 0.0
        %2048 = vadd.xlane.f32.xlu0 %v2047
        %v2049 = vpop.xlane.xlu0 %2048
        %v2050 = vsel %vm1863, %v1861, 0.0
        %2051 = vadd.xlane.f32.xlu0 %v2050
        %v2052 = vpop.xlane.xlu0 %2051
        %v2053 = vsel %vm1863, %v1862, 0.0
        %2054 = vadd.xlane.f32.xlu0 %v2053
        %v2055 = vpop.xlane.xlu0 %2054
        %v2056 = vld [vmem:[#allocation5] sm:$0xff]
        %v2058 = vlaneseq
        %v2059 = vshrl.u32 %v2058, 7
        %v2060 = vsub.s32 0, %v2059
        %v2061 = vrot.slane %v2056, %v2060
        %2063 = vbcast.lane.b32.xlu0 %v2061, 256
        %v2064 = vpop.permute.xlu0 %2063
        %v2065 = vlaneseq
        %v2066 = vshrl.u32 %v2065, 7
        %v2067 = vsub.s32 1, %v2066
        %v2068 = vrot.slane %v2056, %v2067
        %2070 = vbcast.lane.b32.xlu0 %v2068, 256
        %v2071 = vpop.permute.xlu0 %2070
        %v2072 = vlaneseq
        %v2073 = vshrl.u32 %v2072, 7
        %v2074 = vsub.s32 2, %v2073
        %v2075 = vrot.slane %v2056, %v2074
        %2077 = vbcast.lane.b32.xlu0 %v2075, 256
        %v2078 = vpop.permute.xlu0 %2077
        %v2079 = vlaneseq
        %v2080 = vshrl.u32 %v2079, 7
        %v2081 = vsub.s32 3, %v2080
        %v2082 = vrot.slane %v2056, %v2081
        %2084 = vbcast.lane.b32.xlu0 %v2082, 256
        %v2085 = vpop.permute.xlu0 %2084
        %v2086 = vlaneseq
        %v2087 = vshrl.u32 %v2086, 7
        %v2088 = vsub.s32 4, %v2087
        %v2089 = vrot.slane %v2056, %v2088
        %2091 = vbcast.lane.b32.xlu0 %v2089, 256
        %v2092 = vpop.permute.xlu0 %2091
        %v2093 = vlaneseq
        %v2094 = vshrl.u32 %v2093, 7
        %v2095 = vsub.s32 5, %v2094
        %v2096 = vrot.slane %v2056, %v2095
        %2098 = vbcast.lane.b32.xlu0 %v2096, 256
        %v2099 = vpop.permute.xlu0 %2098
        %v2100 = vlaneseq
        %v2101 = vshrl.u32 %v2100, 7
        %v2102 = vsub.s32 6, %v2101
        %v2103 = vrot.slane %v2056, %v2102
        %2105 = vbcast.lane.b32.xlu0 %v2103, 256
        %v2106 = vpop.permute.xlu0 %2105
        %v2107 = vlaneseq
        %v2108 = vshrl.u32 %v2107, 7
        %v2109 = vsub.s32 7, %v2108
        %v2110 = vrot.slane %v2056, %v2109
        %2112 = vbcast.lane.b32.xlu0 %v2110, 256
        %v2113 = vpop.permute.xlu0 %2112
        %v2122 = vadd.f32 %v1866, %v2064
        %v2123 = vadd.f32 %v1869, %v2071
        %v2124 = vadd.f32 %v1872, %v2078
        %v2125 = vadd.f32 %v1875, %v2085
        %v2126 = vadd.f32 %v1878, %v2092
        %v2127 = vadd.f32 %v1881, %v2099
        %v2128 = vadd.f32 %v1884, %v2106
        %v2129 = vadd.f32 %v1887, %v2113
        %v2130 = vadd.f32 %v1890, %v2064
        %v2131 = vadd.f32 %v1893, %v2071
        %v2132 = vadd.f32 %v1896, %v2078
        %v2133 = vadd.f32 %v1899, %v2085
        %v2134 = vadd.f32 %v1902, %v2092
        %v2135 = vadd.f32 %v1905, %v2099
        %v2136 = vadd.f32 %v1908, %v2106
        %v2137 = vadd.f32 %v1911, %v2113
        %v2138 = vadd.f32 %v1914, %v2064
        %v2139 = vadd.f32 %v1917, %v2071
        %v2140 = vadd.f32 %v1920, %v2078
        %v2141 = vadd.f32 %v1923, %v2085
        %v2142 = vadd.f32 %v1926, %v2092
        %v2143 = vadd.f32 %v1929, %v2099
        %v2144 = vadd.f32 %v1932, %v2106
        %v2145 = vadd.f32 %v1935, %v2113
        %v2146 = vadd.f32 %v1938, %v2064
        %v2147 = vadd.f32 %v1941, %v2071
        %v2148 = vadd.f32 %v1944, %v2078
        %v2149 = vadd.f32 %v1947, %v2085
        %v2150 = vadd.f32 %v1950, %v2092
        %v2151 = vadd.f32 %v1953, %v2099
        %v2152 = vadd.f32 %v1956, %v2106
        %v2153 = vadd.f32 %v1959, %v2113
        %v2154 = vadd.f32 %v1962, %v2064
        %v2155 = vadd.f32 %v1965, %v2071
        %v2156 = vadd.f32 %v1968, %v2078
        %v2157 = vadd.f32 %v1971, %v2085
        %v2158 = vadd.f32 %v1974, %v2092
        %v2159 = vadd.f32 %v1977, %v2099
        %v2160 = vadd.f32 %v1980, %v2106
        %v2161 = vadd.f32 %v1983, %v2113
        %v2162 = vadd.f32 %v1986, %v2064
        %v2163 = vadd.f32 %v1989, %v2071
        %v2164 = vadd.f32 %v1992, %v2078
        %v2165 = vadd.f32 %v1995, %v2085
        %v2166 = vadd.f32 %v1998, %v2092
        %v2167 = vadd.f32 %v2001, %v2099
        %v2168 = vadd.f32 %v2004, %v2106
        %v2169 = vadd.f32 %v2007, %v2113
        %v2170 = vadd.f32 %v2010, %v2064
        %v2171 = vadd.f32 %v2013, %v2071
        %v2172 = vadd.f32 %v2016, %v2078
        %v2173 = vadd.f32 %v2019, %v2085
        %v2174 = vadd.f32 %v2022, %v2092
        %v2175 = vadd.f32 %v2025, %v2099
        %v2176 = vadd.f32 %v2028, %v2106
        %v2177 = vadd.f32 %v2031, %v2113
        %v2178 = vadd.f32 %v2034, %v2064
        %v2179 = vadd.f32 %v2037, %v2071
        %v2180 = vadd.f32 %v2040, %v2078
        %v2181 = vadd.f32 %v2043, %v2085
        %v2182 = vadd.f32 %v2046, %v2092
        %v2183 = vadd.f32 %v2049, %v2099
        %v2184 = vadd.f32 %v2052, %v2106
        %v2185 = vadd.f32 %v2055, %v2113
        %2250 = vset.pattern.permute.xlu0 0
        %2251 = vperm.xlu0 %2250, %v2122
        %v2252 = vpop.permute.xlu0 %2251
        %2253 = vset.pattern.permute.xlu0 0
        %2254 = vperm.xlu0 %2253, %v2123
        %v2255 = vpop.permute.xlu0 %2254
        %2256 = vset.pattern.permute.xlu0 0
        %2257 = vperm.xlu0 %2256, %v2124
        %v2258 = vpop.permute.xlu0 %2257
        %2259 = vset.pattern.permute.xlu0 0
        %2260 = vperm.xlu0 %2259, %v2125
        %v2261 = vpop.permute.xlu0 %2260
        %2262 = vset.pattern.permute.xlu0 0
        %2263 = vperm.xlu0 %2262, %v2126
        %v2264 = vpop.permute.xlu0 %2263
        %2265 = vset.pattern.permute.xlu0 0
        %2266 = vperm.xlu0 %2265, %v2127
        %v2267 = vpop.permute.xlu0 %2266
        %2268 = vset.pattern.permute.xlu0 0
        %2269 = vperm.xlu0 %2268, %v2128
        %v2270 = vpop.permute.xlu0 %2269
        %2271 = vset.pattern.permute.xlu0 0
        %2272 = vperm.xlu0 %2271, %v2129
        %v2273 = vpop.permute.xlu0 %2272
        %2274 = vset.pattern.permute.xlu0 0
        %2275 = vperm.xlu0 %2274, %v2130
        %v2276 = vpop.permute.xlu0 %2275
        %2277 = vset.pattern.permute.xlu0 0
        %2278 = vperm.xlu0 %2277, %v2131
        %v2279 = vpop.permute.xlu0 %2278
        %2280 = vset.pattern.permute.xlu0 0
        %2281 = vperm.xlu0 %2280, %v2132
        %v2282 = vpop.permute.xlu0 %2281
        %2283 = vset.pattern.permute.xlu0 0
        %2284 = vperm.xlu0 %2283, %v2133
        %v2285 = vpop.permute.xlu0 %2284
        %2286 = vset.pattern.permute.xlu0 0
        %2287 = vperm.xlu0 %2286, %v2134
        %v2288 = vpop.permute.xlu0 %2287
        %2289 = vset.pattern.permute.xlu0 0
        %2290 = vperm.xlu0 %2289, %v2135
        %v2291 = vpop.permute.xlu0 %2290
        %2292 = vset.pattern.permute.xlu0 0
        %2293 = vperm.xlu0 %2292, %v2136
        %v2294 = vpop.permute.xlu0 %2293
        %2295 = vset.pattern.permute.xlu0 0
        %2296 = vperm.xlu0 %2295, %v2137
        %v2297 = vpop.permute.xlu0 %2296
        %2298 = vset.pattern.permute.xlu0 0
        %2299 = vperm.xlu0 %2298, %v2138
        %v2300 = vpop.permute.xlu0 %2299
        %2301 = vset.pattern.permute.xlu0 0
        %2302 = vperm.xlu0 %2301, %v2139
        %v2303 = vpop.permute.xlu0 %2302
        %2304 = vset.pattern.permute.xlu0 0
        %2305 = vperm.xlu0 %2304, %v2140
        %v2306 = vpop.permute.xlu0 %2305
        %2307 = vset.pattern.permute.xlu0 0
        %2308 = vperm.xlu0 %2307, %v2141
        %v2309 = vpop.permute.xlu0 %2308
        %2310 = vset.pattern.permute.xlu0 0
        %2311 = vperm.xlu0 %2310, %v2142
        %v2312 = vpop.permute.xlu0 %2311
        %2313 = vset.pattern.permute.xlu0 0
        %2314 = vperm.xlu0 %2313, %v2143
        %v2315 = vpop.permute.xlu0 %2314
        %2316 = vset.pattern.permute.xlu0 0
        %2317 = vperm.xlu0 %2316, %v2144
        %v2318 = vpop.permute.xlu0 %2317
        %2319 = vset.pattern.permute.xlu0 0
        %2320 = vperm.xlu0 %2319, %v2145
        %v2321 = vpop.permute.xlu0 %2320
        %2322 = vset.pattern.permute.xlu0 0
        %2323 = vperm.xlu0 %2322, %v2146
        %v2324 = vpop.permute.xlu0 %2323
        %2325 = vset.pattern.permute.xlu0 0
        %2326 = vperm.xlu0 %2325, %v2147
        %v2327 = vpop.permute.xlu0 %2326
        %2328 = vset.pattern.permute.xlu0 0
        %2329 = vperm.xlu0 %2328, %v2148
        %v2330 = vpop.permute.xlu0 %2329
        %2331 = vset.pattern.permute.xlu0 0
        %2332 = vperm.xlu0 %2331, %v2149
        %v2333 = vpop.permute.xlu0 %2332
        %2334 = vset.pattern.permute.xlu0 0
        %2335 = vperm.xlu0 %2334, %v2150
        %v2336 = vpop.permute.xlu0 %2335
        %2337 = vset.pattern.permute.xlu0 0
        %2338 = vperm.xlu0 %2337, %v2151
        %v2339 = vpop.permute.xlu0 %2338
        %2340 = vset.pattern.permute.xlu0 0
        %2341 = vperm.xlu0 %2340, %v2152
        %v2342 = vpop.permute.xlu0 %2341
        %2343 = vset.pattern.permute.xlu0 0
        %2344 = vperm.xlu0 %2343, %v2153
        %v2345 = vpop.permute.xlu0 %2344
        %2346 = vset.pattern.permute.xlu0 0
        %2347 = vperm.xlu0 %2346, %v2154
        %v2348 = vpop.permute.xlu0 %2347
        %2349 = vset.pattern.permute.xlu0 0
        %2350 = vperm.xlu0 %2349, %v2155
        %v2351 = vpop.permute.xlu0 %2350
        %2352 = vset.pattern.permute.xlu0 0
        %2353 = vperm.xlu0 %2352, %v2156
        %v2354 = vpop.permute.xlu0 %2353
        %2355 = vset.pattern.permute.xlu0 0
        %2356 = vperm.xlu0 %2355, %v2157
        %v2357 = vpop.permute.xlu0 %2356
        %2358 = vset.pattern.permute.xlu0 0
        %2359 = vperm.xlu0 %2358, %v2158
        %v2360 = vpop.permute.xlu0 %2359
        %2361 = vset.pattern.permute.xlu0 0
        %2362 = vperm.xlu0 %2361, %v2159
        %v2363 = vpop.permute.xlu0 %2362
        %2364 = vset.pattern.permute.xlu0 0
        %2365 = vperm.xlu0 %2364, %v2160
        %v2366 = vpop.permute.xlu0 %2365
        %2367 = vset.pattern.permute.xlu0 0
        %2368 = vperm.xlu0 %2367, %v2161
        %v2369 = vpop.permute.xlu0 %2368
        %2370 = vset.pattern.permute.xlu0 0
        %2371 = vperm.xlu0 %2370, %v2162
        %v2372 = vpop.permute.xlu0 %2371
        %2373 = vset.pattern.permute.xlu0 0
        %2374 = vperm.xlu0 %2373, %v2163
        %v2375 = vpop.permute.xlu0 %2374
        %2376 = vset.pattern.permute.xlu0 0
        %2377 = vperm.xlu0 %2376, %v2164
        %v2378 = vpop.permute.xlu0 %2377
        %2379 = vset.pattern.permute.xlu0 0
        %2380 = vperm.xlu0 %2379, %v2165
        %v2381 = vpop.permute.xlu0 %2380
        %2382 = vset.pattern.permute.xlu0 0
        %2383 = vperm.xlu0 %2382, %v2166
        %v2384 = vpop.permute.xlu0 %2383
        %2385 = vset.pattern.permute.xlu0 0
        %2386 = vperm.xlu0 %2385, %v2167
        %v2387 = vpop.permute.xlu0 %2386
        %2388 = vset.pattern.permute.xlu0 0
        %2389 = vperm.xlu0 %2388, %v2168
        %v2390 = vpop.permute.xlu0 %2389
        %2391 = vset.pattern.permute.xlu0 0
        %2392 = vperm.xlu0 %2391, %v2169
        %v2393 = vpop.permute.xlu0 %2392
        %2394 = vset.pattern.permute.xlu0 0
        %2395 = vperm.xlu0 %2394, %v2170
        %v2396 = vpop.permute.xlu0 %2395
        %2397 = vset.pattern.permute.xlu0 0
        %2398 = vperm.xlu0 %2397, %v2171
        %v2399 = vpop.permute.xlu0 %2398
        %2400 = vset.pattern.permute.xlu0 0
        %2401 = vperm.xlu0 %2400, %v2172
        %v2402 = vpop.permute.xlu0 %2401
        %2403 = vset.pattern.permute.xlu0 0
        %2404 = vperm.xlu0 %2403, %v2173
        %v2405 = vpop.permute.xlu0 %2404
        %2406 = vset.pattern.permute.xlu0 0
        %2407 = vperm.xlu0 %2406, %v2174
        %v2408 = vpop.permute.xlu0 %2407
        %2409 = vset.pattern.permute.xlu0 0
        %2410 = vperm.xlu0 %2409, %v2175
        %v2411 = vpop.permute.xlu0 %2410
        %2412 = vset.pattern.permute.xlu0 0
        %2413 = vperm.xlu0 %2412, %v2176
        %v2414 = vpop.permute.xlu0 %2413
        %2415 = vset.pattern.permute.xlu0 0
        %2416 = vperm.xlu0 %2415, %v2177
        %v2417 = vpop.permute.xlu0 %2416
        %2418 = vset.pattern.permute.xlu0 0
        %2419 = vperm.xlu0 %2418, %v2178
        %v2420 = vpop.permute.xlu0 %2419
        %2421 = vset.pattern.permute.xlu0 0
        %2422 = vperm.xlu0 %2421, %v2179
        %v2423 = vpop.permute.xlu0 %2422
        %2424 = vset.pattern.permute.xlu0 0
        %2425 = vperm.xlu0 %2424, %v2180
        %v2426 = vpop.permute.xlu0 %2425
        %2427 = vset.pattern.permute.xlu0 0
        %2428 = vperm.xlu0 %2427, %v2181
        %v2429 = vpop.permute.xlu0 %2428
        %2430 = vset.pattern.permute.xlu0 0
        %2431 = vperm.xlu0 %2430, %v2182
        %v2432 = vpop.permute.xlu0 %2431
        %2433 = vset.pattern.permute.xlu0 0
        %2434 = vperm.xlu0 %2433, %v2183
        %v2435 = vpop.permute.xlu0 %2434
        %2436 = vset.pattern.permute.xlu0 0
        %2437 = vperm.xlu0 %2436, %v2184
        %v2438 = vpop.permute.xlu0 %2437
        %2439 = vset.pattern.permute.xlu0 0
        %2440 = vperm.xlu0 %2439, %v2185
        %v2441 = vpop.permute.xlu0 %2440
        %v2442 = vlaneseq
        %v2443 = vand.u32 %v2442, 127
        %v2444 = vlaneseq
        %v2445 = vshrl.u32 %v2444, 7
        %v2446 = vsub.s32 %v2443, %v2445
        %v2447 = vrot.slane %v2252, %v2446
        %v2448 = vlaneseq
        %v2449 = vshrl.u32 %v2448, 7
        %v2450 = vsub.s32 %v2443, %v2449
        %v2451 = vrot.slane %v2255, %v2450
        %v2452 = vlaneseq
        %v2453 = vshrl.u32 %v2452, 7
        %v2454 = vsub.s32 %v2443, %v2453
        %v2455 = vrot.slane %v2258, %v2454
        %v2456 = vlaneseq
        %v2457 = vshrl.u32 %v2456, 7
        %v2458 = vsub.s32 %v2443, %v2457
        %v2459 = vrot.slane %v2261, %v2458
        %v2460 = vlaneseq
        %v2461 = vshrl.u32 %v2460, 7
        %v2462 = vsub.s32 %v2443, %v2461
        %v2463 = vrot.slane %v2264, %v2462
        %v2464 = vlaneseq
        %v2465 = vshrl.u32 %v2464, 7
        %v2466 = vsub.s32 %v2443, %v2465
        %v2467 = vrot.slane %v2267, %v2466
        %v2468 = vlaneseq
        %v2469 = vshrl.u32 %v2468, 7
        %v2470 = vsub.s32 %v2443, %v2469
        %v2471 = vrot.slane %v2270, %v2470
        %v2472 = vlaneseq
        %v2473 = vshrl.u32 %v2472, 7
        %v2474 = vsub.s32 %v2443, %v2473
        %v2475 = vrot.slane %v2273, %v2474
        %v2476 = vlaneseq
        %v2477 = vshrl.u32 %v2476, 7
        %v2478 = vsub.s32 %v2443, %v2477
        %v2479 = vrot.slane %v2276, %v2478
        %v2480 = vlaneseq
        %v2481 = vshrl.u32 %v2480, 7
        %v2482 = vsub.s32 %v2443, %v2481
        %v2483 = vrot.slane %v2279, %v2482
        %v2484 = vlaneseq
        %v2485 = vshrl.u32 %v2484, 7
        %v2486 = vsub.s32 %v2443, %v2485
        %v2487 = vrot.slane %v2282, %v2486
        %v2488 = vlaneseq
        %v2489 = vshrl.u32 %v2488, 7
        %v2490 = vsub.s32 %v2443, %v2489
        %v2491 = vrot.slane %v2285, %v2490
        %v2492 = vlaneseq
        %v2493 = vshrl.u32 %v2492, 7
        %v2494 = vsub.s32 %v2443, %v2493
        %v2495 = vrot.slane %v2288, %v2494
        %v2496 = vlaneseq
        %v2497 = vshrl.u32 %v2496, 7
        %v2498 = vsub.s32 %v2443, %v2497
        %v2499 = vrot.slane %v2291, %v2498
        %v2500 = vlaneseq
        %v2501 = vshrl.u32 %v2500, 7
        %v2502 = vsub.s32 %v2443, %v2501
        %v2503 = vrot.slane %v2294, %v2502
        %v2504 = vlaneseq
        %v2505 = vshrl.u32 %v2504, 7
        %v2506 = vsub.s32 %v2443, %v2505
        %v2507 = vrot.slane %v2297, %v2506
        %v2508 = vlaneseq
        %v2509 = vshrl.u32 %v2508, 7
        %v2510 = vsub.s32 %v2443, %v2509
        %v2511 = vrot.slane %v2300, %v2510
        %v2512 = vlaneseq
        %v2513 = vshrl.u32 %v2512, 7
        %v2514 = vsub.s32 %v2443, %v2513
        %v2515 = vrot.slane %v2303, %v2514
        %v2516 = vlaneseq
        %v2517 = vshrl.u32 %v2516, 7
        %v2518 = vsub.s32 %v2443, %v2517
        %v2519 = vrot.slane %v2306, %v2518
        %v2520 = vlaneseq
        %v2521 = vshrl.u32 %v2520, 7
        %v2522 = vsub.s32 %v2443, %v2521
        %v2523 = vrot.slane %v2309, %v2522
        %v2524 = vlaneseq
        %v2525 = vshrl.u32 %v2524, 7
        %v2526 = vsub.s32 %v2443, %v2525
        %v2527 = vrot.slane %v2312, %v2526
        %v2528 = vlaneseq
        %v2529 = vshrl.u32 %v2528, 7
        %v2530 = vsub.s32 %v2443, %v2529
        %v2531 = vrot.slane %v2315, %v2530
        %v2532 = vlaneseq
        %v2533 = vshrl.u32 %v2532, 7
        %v2534 = vsub.s32 %v2443, %v2533
        %v2535 = vrot.slane %v2318, %v2534
        %v2536 = vlaneseq
        %v2537 = vshrl.u32 %v2536, 7
        %v2538 = vsub.s32 %v2443, %v2537
        %v2539 = vrot.slane %v2321, %v2538
        %v2540 = vlaneseq
        %v2541 = vshrl.u32 %v2540, 7
        %v2542 = vsub.s32 %v2443, %v2541
        %v2543 = vrot.slane %v2324, %v2542
        %v2544 = vlaneseq
        %v2545 = vshrl.u32 %v2544, 7
        %v2546 = vsub.s32 %v2443, %v2545
        %v2547 = vrot.slane %v2327, %v2546
        %v2548 = vlaneseq
        %v2549 = vshrl.u32 %v2548, 7
        %v2550 = vsub.s32 %v2443, %v2549
        %v2551 = vrot.slane %v2330, %v2550
        %v2552 = vlaneseq
        %v2553 = vshrl.u32 %v2552, 7
        %v2554 = vsub.s32 %v2443, %v2553
        %v2555 = vrot.slane %v2333, %v2554
        %v2556 = vlaneseq
        %v2557 = vshrl.u32 %v2556, 7
        %v2558 = vsub.s32 %v2443, %v2557
        %v2559 = vrot.slane %v2336, %v2558
        %v2560 = vlaneseq
        %v2561 = vshrl.u32 %v2560, 7
        %v2562 = vsub.s32 %v2443, %v2561
        %v2563 = vrot.slane %v2339, %v2562
        %v2564 = vlaneseq
        %v2565 = vshrl.u32 %v2564, 7
        %v2566 = vsub.s32 %v2443, %v2565
        %v2567 = vrot.slane %v2342, %v2566
        %v2568 = vlaneseq
        %v2569 = vshrl.u32 %v2568, 7
        %v2570 = vsub.s32 %v2443, %v2569
        %v2571 = vrot.slane %v2345, %v2570
        %v2572 = vlaneseq
        %v2573 = vshrl.u32 %v2572, 7
        %v2574 = vsub.s32 %v2443, %v2573
        %v2575 = vrot.slane %v2348, %v2574
        %v2576 = vlaneseq
        %v2577 = vshrl.u32 %v2576, 7
        %v2578 = vsub.s32 %v2443, %v2577
        %v2579 = vrot.slane %v2351, %v2578
        %v2580 = vlaneseq
        %v2581 = vshrl.u32 %v2580, 7
        %v2582 = vsub.s32 %v2443, %v2581
        %v2583 = vrot.slane %v2354, %v2582
        %v2584 = vlaneseq
        %v2585 = vshrl.u32 %v2584, 7
        %v2586 = vsub.s32 %v2443, %v2585
        %v2587 = vrot.slane %v2357, %v2586
        %v2588 = vlaneseq
        %v2589 = vshrl.u32 %v2588, 7
        %v2590 = vsub.s32 %v2443, %v2589
        %v2591 = vrot.slane %v2360, %v2590
        %v2592 = vlaneseq
        %v2593 = vshrl.u32 %v2592, 7
        %v2594 = vsub.s32 %v2443, %v2593
        %v2595 = vrot.slane %v2363, %v2594
        %v2596 = vlaneseq
        %v2597 = vshrl.u32 %v2596, 7
        %v2598 = vsub.s32 %v2443, %v2597
        %v2599 = vrot.slane %v2366, %v2598
        %v2600 = vlaneseq
        %v2601 = vshrl.u32 %v2600, 7
        %v2602 = vsub.s32 %v2443, %v2601
        %v2603 = vrot.slane %v2369, %v2602
        %v2604 = vlaneseq
        %v2605 = vshrl.u32 %v2604, 7
        %v2606 = vsub.s32 %v2443, %v2605
        %v2607 = vrot.slane %v2372, %v2606
        %v2608 = vlaneseq
        %v2609 = vshrl.u32 %v2608, 7
        %v2610 = vsub.s32 %v2443, %v2609
        %v2611 = vrot.slane %v2375, %v2610
        %v2612 = vlaneseq
        %v2613 = vshrl.u32 %v2612, 7
        %v2614 = vsub.s32 %v2443, %v2613
        %v2615 = vrot.slane %v2378, %v2614
        %v2616 = vlaneseq
        %v2617 = vshrl.u32 %v2616, 7
        %v2618 = vsub.s32 %v2443, %v2617
        %v2619 = vrot.slane %v2381, %v2618
        %v2620 = vlaneseq
        %v2621 = vshrl.u32 %v2620, 7
        %v2622 = vsub.s32 %v2443, %v2621
        %v2623 = vrot.slane %v2384, %v2622
        %v2624 = vlaneseq
        %v2625 = vshrl.u32 %v2624, 7
        %v2626 = vsub.s32 %v2443, %v2625
        %v2627 = vrot.slane %v2387, %v2626
        %v2628 = vlaneseq
        %v2629 = vshrl.u32 %v2628, 7
        %v2630 = vsub.s32 %v2443, %v2629
        %v2631 = vrot.slane %v2390, %v2630
        %v2632 = vlaneseq
        %v2633 = vshrl.u32 %v2632, 7
        %v2634 = vsub.s32 %v2443, %v2633
        %v2635 = vrot.slane %v2393, %v2634
        %v2636 = vlaneseq
        %v2637 = vshrl.u32 %v2636, 7
        %v2638 = vsub.s32 %v2443, %v2637
        %v2639 = vrot.slane %v2396, %v2638
        %v2640 = vlaneseq
        %v2641 = vshrl.u32 %v2640, 7
        %v2642 = vsub.s32 %v2443, %v2641
        %v2643 = vrot.slane %v2399, %v2642
        %v2644 = vlaneseq
        %v2645 = vshrl.u32 %v2644, 7
        %v2646 = vsub.s32 %v2443, %v2645
        %v2647 = vrot.slane %v2402, %v2646
        %v2648 = vlaneseq
        %v2649 = vshrl.u32 %v2648, 7
        %v2650 = vsub.s32 %v2443, %v2649
        %v2651 = vrot.slane %v2405, %v2650
        %v2652 = vlaneseq
        %v2653 = vshrl.u32 %v2652, 7
        %v2654 = vsub.s32 %v2443, %v2653
        %v2655 = vrot.slane %v2408, %v2654
        %v2656 = vlaneseq
        %v2657 = vshrl.u32 %v2656, 7
        %v2658 = vsub.s32 %v2443, %v2657
        %v2659 = vrot.slane %v2411, %v2658
        %v2660 = vlaneseq
        %v2661 = vshrl.u32 %v2660, 7
        %v2662 = vsub.s32 %v2443, %v2661
        %v2663 = vrot.slane %v2414, %v2662
        %v2664 = vlaneseq
        %v2665 = vshrl.u32 %v2664, 7
        %v2666 = vsub.s32 %v2443, %v2665
        %v2667 = vrot.slane %v2417, %v2666
        %v2668 = vlaneseq
        %v2669 = vshrl.u32 %v2668, 7
        %v2670 = vsub.s32 %v2443, %v2669
        %v2671 = vrot.slane %v2420, %v2670
        %v2672 = vlaneseq
        %v2673 = vshrl.u32 %v2672, 7
        %v2674 = vsub.s32 %v2443, %v2673
        %v2675 = vrot.slane %v2423, %v2674
        %v2676 = vlaneseq
        %v2677 = vshrl.u32 %v2676, 7
        %v2678 = vsub.s32 %v2443, %v2677
        %v2679 = vrot.slane %v2426, %v2678
        %v2680 = vlaneseq
        %v2681 = vshrl.u32 %v2680, 7
        %v2682 = vsub.s32 %v2443, %v2681
        %v2683 = vrot.slane %v2429, %v2682
        %v2684 = vlaneseq
        %v2685 = vshrl.u32 %v2684, 7
        %v2686 = vsub.s32 %v2443, %v2685
        %v2687 = vrot.slane %v2432, %v2686
        %v2688 = vlaneseq
        %v2689 = vshrl.u32 %v2688, 7
        %v2690 = vsub.s32 %v2443, %v2689
        %v2691 = vrot.slane %v2435, %v2690
        %v2692 = vlaneseq
        %v2693 = vshrl.u32 %v2692, 7
        %v2694 = vsub.s32 %v2443, %v2693
        %v2695 = vrot.slane %v2438, %v2694
        %v2696 = vlaneseq
        %v2697 = vshrl.u32 %v2696, 7
        %v2698 = vsub.s32 %v2443, %v2697
        %v2699 = vrot.slane %v2441, %v2698
        %vm2700 = vcmask 1041409
        %v2701 = vsel %vm2700, %v2451, %v2447
        %vm2702 = vcmask 1042434
        %v2703 = vsel %vm2702, %v2455, %v2701
        %vm2704 = vcmask 1043459
        %v2705 = vsel %vm2704, %v2459, %v2703
        %vm2706 = vcmask 1044484
        %v2707 = vsel %vm2706, %v2463, %v2705
        %vm2708 = vcmask 1045509
        %v2709 = vsel %vm2708, %v2467, %v2707
        %vm2710 = vcmask 1046534
        %v2711 = vsel %vm2710, %v2471, %v2709
        %vm2712 = vcmask 1047559
        %v2713 = vsel %vm2712, %v2475, %v2711
        %v2714 = vsel %vm2700, %v2483, %v2479
        %v2715 = vsel %vm2702, %v2487, %v2714
        %v2716 = vsel %vm2704, %v2491, %v2715
        %v2717 = vsel %vm2706, %v2495, %v2716
        %v2718 = vsel %vm2708, %v2499, %v2717
        %v2719 = vsel %vm2710, %v2503, %v2718
        %v2720 = vsel %vm2712, %v2507, %v2719
        %v2721 = vsel %vm2700, %v2515, %v2511
        %v2722 = vsel %vm2702, %v2519, %v2721
        %v2723 = vsel %vm2704, %v2523, %v2722
        %v2724 = vsel %vm2706, %v2527, %v2723
        %v2725 = vsel %vm2708, %v2531, %v2724
        %v2726 = vsel %vm2710, %v2535, %v2725
        %v2727 = vsel %vm2712, %v2539, %v2726
        %v2728 = vsel %vm2700, %v2547, %v2543
        %v2729 = vsel %vm2702, %v2551, %v2728
        %v2730 = vsel %vm2704, %v2555, %v2729
        %v2731 = vsel %vm2706, %v2559, %v2730
        %v2732 = vsel %vm2708, %v2563, %v2731
        %v2733 = vsel %vm2710, %v2567, %v2732
        %v2734 = vsel %vm2712, %v2571, %v2733
        %v2735 = vsel %vm2700, %v2579, %v2575
        %v2736 = vsel %vm2702, %v2583, %v2735
        %v2737 = vsel %vm2704, %v2587, %v2736
        %v2738 = vsel %vm2706, %v2591, %v2737
        %v2739 = vsel %vm2708, %v2595, %v2738
        %v2740 = vsel %vm2710, %v2599, %v2739
        %v2741 = vsel %vm2712, %v2603, %v2740
        %v2742 = vsel %vm2700, %v2611, %v2607
        %v2743 = vsel %vm2702, %v2615, %v2742
        %v2744 = vsel %vm2704, %v2619, %v2743
        %v2745 = vsel %vm2706, %v2623, %v2744
        %v2746 = vsel %vm2708, %v2627, %v2745
        %v2747 = vsel %vm2710, %v2631, %v2746
        %v2748 = vsel %vm2712, %v2635, %v2747
        %v2749 = vsel %vm2700, %v2643, %v2639
        %v2750 = vsel %vm2702, %v2647, %v2749
        %v2751 = vsel %vm2704, %v2651, %v2750
        %v2752 = vsel %vm2706, %v2655, %v2751
        %v2753 = vsel %vm2708, %v2659, %v2752
        %v2754 = vsel %vm2710, %v2663, %v2753
        %v2755 = vsel %vm2712, %v2667, %v2754
        %v2756 = vsel %vm2700, %v2675, %v2671
        %v2757 = vsel %vm2702, %v2679, %v2756
        %v2758 = vsel %vm2704, %v2683, %v2757
        %v2759 = vsel %vm2706, %v2687, %v2758
        %v2760 = vsel %vm2708, %v2691, %v2759
        %v2761 = vsel %vm2710, %v2695, %v2760
        %v2762 = vsel %vm2712, %v2699, %v2761
        %v2771 = vsel %vm1863, %v2713, -inf
        %2772 = vmax.xlane.f32.xlu0 %v2771
        %v2773 = vpop.xlane.xlu0 %2772
        %v2774 = vsel %vm1863, %v2720, -inf
        %2775 = vmax.xlane.f32.xlu0 %v2774
        %v2776 = vpop.xlane.xlu0 %2775
        %v2777 = vsel %vm1863, %v2727, -inf
        %2778 = vmax.xlane.f32.xlu0 %v2777
        %v2779 = vpop.xlane.xlu0 %2778
        %v2780 = vsel %vm1863, %v2734, -inf
        %2781 = vmax.xlane.f32.xlu0 %v2780
        %v2782 = vpop.xlane.xlu0 %2781
        %v2783 = vsel %vm1863, %v2741, -inf
        %2784 = vmax.xlane.f32.xlu0 %v2783
        %v2785 = vpop.xlane.xlu0 %2784
        %v2786 = vsel %vm1863, %v2748, -inf
        %2787 = vmax.xlane.f32.xlu0 %v2786
        %v2788 = vpop.xlane.xlu0 %2787
        %v2789 = vsel %vm1863, %v2755, -inf
        %2790 = vmax.xlane.f32.xlu0 %v2789
        %v2791 = vpop.xlane.xlu0 %2790
        %v2792 = vsel %vm1863, %v2762, -inf
        %2793 = vmax.xlane.f32.xlu0 %v2792
        %v2794 = vpop.xlane.xlu0 %2793
        %v2803 = vlaneseq
        %v2804 = vshrl.u32 %v2803, 7
        %v2805 = vsub.s32 0, %v2804
        %v2806 = vrot.slane %v2773, %v2805
        %v2807 = vlaneseq
        %v2808 = vshrl.u32 %v2807, 7
        %v2809 = vsub.s32 1, %v2808
        %v2810 = vrot.slane %v2773, %v2809
        %v2811 = vlaneseq
        %v2812 = vshrl.u32 %v2811, 7
        %v2813 = vsub.s32 2, %v2812
        %v2814 = vrot.slane %v2773, %v2813
        %v2815 = vlaneseq
        %v2816 = vshrl.u32 %v2815, 7
        %v2817 = vsub.s32 3, %v2816
        %v2818 = vrot.slane %v2773, %v2817
        %v2819 = vlaneseq
        %v2820 = vshrl.u32 %v2819, 7
        %v2821 = vsub.s32 4, %v2820
        %v2822 = vrot.slane %v2773, %v2821
        %v2823 = vlaneseq
        %v2824 = vshrl.u32 %v2823, 7
        %v2825 = vsub.s32 5, %v2824
        %v2826 = vrot.slane %v2773, %v2825
        %v2827 = vlaneseq
        %v2828 = vshrl.u32 %v2827, 7
        %v2829 = vsub.s32 6, %v2828
        %v2830 = vrot.slane %v2773, %v2829
        %v2831 = vlaneseq
        %v2832 = vshrl.u32 %v2831, 7
        %v2833 = vsub.s32 7, %v2832
        %v2834 = vrot.slane %v2773, %v2833
        %v2835 = vlaneseq
        %v2836 = vshrl.u32 %v2835, 7
        %v2837 = vsub.s32 0, %v2836
        %v2838 = vrot.slane %v2776, %v2837
        %v2839 = vlaneseq
        %v2840 = vshrl.u32 %v2839, 7
        %v2841 = vsub.s32 1, %v2840
        %v2842 = vrot.slane %v2776, %v2841
        %v2843 = vlaneseq
        %v2844 = vshrl.u32 %v2843, 7
        %v2845 = vsub.s32 2, %v2844
        %v2846 = vrot.slane %v2776, %v2845
        %v2847 = vlaneseq
        %v2848 = vshrl.u32 %v2847, 7
        %v2849 = vsub.s32 3, %v2848
        %v2850 = vrot.slane %v2776, %v2849
        %v2851 = vlaneseq
        %v2852 = vshrl.u32 %v2851, 7
        %v2853 = vsub.s32 4, %v2852
        %v2854 = vrot.slane %v2776, %v2853
        %v2855 = vlaneseq
        %v2856 = vshrl.u32 %v2855, 7
        %v2857 = vsub.s32 5, %v2856
        %v2858 = vrot.slane %v2776, %v2857
        %v2859 = vlaneseq
        %v2860 = vshrl.u32 %v2859, 7
        %v2861 = vsub.s32 6, %v2860
        %v2862 = vrot.slane %v2776, %v2861
        %v2863 = vlaneseq
        %v2864 = vshrl.u32 %v2863, 7
        %v2865 = vsub.s32 7, %v2864
        %v2866 = vrot.slane %v2776, %v2865
        %v2867 = vlaneseq
        %v2868 = vshrl.u32 %v2867, 7
        %v2869 = vsub.s32 0, %v2868
        %v2870 = vrot.slane %v2779, %v2869
        %v2871 = vlaneseq
        %v2872 = vshrl.u32 %v2871, 7
        %v2873 = vsub.s32 1, %v2872
        %v2874 = vrot.slane %v2779, %v2873
        %v2875 = vlaneseq
        %v2876 = vshrl.u32 %v2875, 7
        %v2877 = vsub.s32 2, %v2876
        %v2878 = vrot.slane %v2779, %v2877
        %v2879 = vlaneseq
        %v2880 = vshrl.u32 %v2879, 7
        %v2881 = vsub.s32 3, %v2880
        %v2882 = vrot.slane %v2779, %v2881
        %v2883 = vlaneseq
        %v2884 = vshrl.u32 %v2883, 7
        %v2885 = vsub.s32 4, %v2884
        %v2886 = vrot.slane %v2779, %v2885
        %v2887 = vlaneseq
        %v2888 = vshrl.u32 %v2887, 7
        %v2889 = vsub.s32 5, %v2888
        %v2890 = vrot.slane %v2779, %v2889
        %v2891 = vlaneseq
        %v2892 = vshrl.u32 %v2891, 7
        %v2893 = vsub.s32 6, %v2892
        %v2894 = vrot.slane %v2779, %v2893
        %v2895 = vlaneseq
        %v2896 = vshrl.u32 %v2895, 7
        %v2897 = vsub.s32 7, %v2896
        %v2898 = vrot.slane %v2779, %v2897
        %v2899 = vlaneseq
        %v2900 = vshrl.u32 %v2899, 7
        %v2901 = vsub.s32 0, %v2900
        %v2902 = vrot.slane %v2782, %v2901
        %v2903 = vlaneseq
        %v2904 = vshrl.u32 %v2903, 7
        %v2905 = vsub.s32 1, %v2904
        %v2906 = vrot.slane %v2782, %v2905
        %v2907 = vlaneseq
        %v2908 = vshrl.u32 %v2907, 7
        %v2909 = vsub.s32 2, %v2908
        %v2910 = vrot.slane %v2782, %v2909
        %v2911 = vlaneseq
        %v2912 = vshrl.u32 %v2911, 7
        %v2913 = vsub.s32 3, %v2912
        %v2914 = vrot.slane %v2782, %v2913
        %v2915 = vlaneseq
        %v2916 = vshrl.u32 %v2915, 7
        %v2917 = vsub.s32 4, %v2916
        %v2918 = vrot.slane %v2782, %v2917
        %v2919 = vlaneseq
        %v2920 = vshrl.u32 %v2919, 7
        %v2921 = vsub.s32 5, %v2920
        %v2922 = vrot.slane %v2782, %v2921
        %v2923 = vlaneseq
        %v2924 = vshrl.u32 %v2923, 7
        %v2925 = vsub.s32 6, %v2924
        %v2926 = vrot.slane %v2782, %v2925
        %v2927 = vlaneseq
        %v2928 = vshrl.u32 %v2927, 7
        %v2929 = vsub.s32 7, %v2928
        %v2930 = vrot.slane %v2782, %v2929
        %v2931 = vlaneseq
        %v2932 = vshrl.u32 %v2931, 7
        %v2933 = vsub.s32 0, %v2932
        %v2934 = vrot.slane %v2785, %v2933
        %v2935 = vlaneseq
        %v2936 = vshrl.u32 %v2935, 7
        %v2937 = vsub.s32 1, %v2936
        %v2938 = vrot.slane %v2785, %v2937
        %v2939 = vlaneseq
        %v2940 = vshrl.u32 %v2939, 7
        %v2941 = vsub.s32 2, %v2940
        %v2942 = vrot.slane %v2785, %v2941
        %v2943 = vlaneseq
        %v2944 = vshrl.u32 %v2943, 7
        %v2945 = vsub.s32 3, %v2944
        %v2946 = vrot.slane %v2785, %v2945
        %v2947 = vlaneseq
        %v2948 = vshrl.u32 %v2947, 7
        %v2949 = vsub.s32 4, %v2948
        %v2950 = vrot.slane %v2785, %v2949
        %v2951 = vlaneseq
        %v2952 = vshrl.u32 %v2951, 7
        %v2953 = vsub.s32 5, %v2952
        %v2954 = vrot.slane %v2785, %v2953
        %v2955 = vlaneseq
        %v2956 = vshrl.u32 %v2955, 7
        %v2957 = vsub.s32 6, %v2956
        %v2958 = vrot.slane %v2785, %v2957
        %v2959 = vlaneseq
        %v2960 = vshrl.u32 %v2959, 7
        %v2961 = vsub.s32 7, %v2960
        %v2962 = vrot.slane %v2785, %v2961
        %v2963 = vlaneseq
        %v2964 = vshrl.u32 %v2963, 7
        %v2965 = vsub.s32 0, %v2964
        %v2966 = vrot.slane %v2788, %v2965
        %v2967 = vlaneseq
        %v2968 = vshrl.u32 %v2967, 7
        %v2969 = vsub.s32 1, %v2968
        %v2970 = vrot.slane %v2788, %v2969
        %v2971 = vlaneseq
        %v2972 = vshrl.u32 %v2971, 7
        %v2973 = vsub.s32 2, %v2972
        %v2974 = vrot.slane %v2788, %v2973
        %v2975 = vlaneseq
        %v2976 = vshrl.u32 %v2975, 7
        %v2977 = vsub.s32 3, %v2976
        %v2978 = vrot.slane %v2788, %v2977
        %v2979 = vlaneseq
        %v2980 = vshrl.u32 %v2979, 7
        %v2981 = vsub.s32 4, %v2980
        %v2982 = vrot.slane %v2788, %v2981
        %v2983 = vlaneseq
        %v2984 = vshrl.u32 %v2983, 7
        %v2985 = vsub.s32 5, %v2984
        %v2986 = vrot.slane %v2788, %v2985
        %v2987 = vlaneseq
        %v2988 = vshrl.u32 %v2987, 7
        %v2989 = vsub.s32 6, %v2988
        %v2990 = vrot.slane %v2788, %v2989
        %v2991 = vlaneseq
        %v2992 = vshrl.u32 %v2991, 7
        %v2993 = vsub.s32 7, %v2992
        %v2994 = vrot.slane %v2788, %v2993
        %v2995 = vlaneseq
        %v2996 = vshrl.u32 %v2995, 7
        %v2997 = vsub.s32 0, %v2996
        %v2998 = vrot.slane %v2791, %v2997
        %v2999 = vlaneseq
        %v3000 = vshrl.u32 %v2999, 7
        %v3001 = vsub.s32 1, %v3000
        %v3002 = vrot.slane %v2791, %v3001
        %v3003 = vlaneseq
        %v3004 = vshrl.u32 %v3003, 7
        %v3005 = vsub.s32 2, %v3004
        %v3006 = vrot.slane %v2791, %v3005
        %v3007 = vlaneseq
        %v3008 = vshrl.u32 %v3007, 7
        %v3009 = vsub.s32 3, %v3008
        %v3010 = vrot.slane %v2791, %v3009
        %v3011 = vlaneseq
        %v3012 = vshrl.u32 %v3011, 7
        %v3013 = vsub.s32 4, %v3012
        %v3014 = vrot.slane %v2791, %v3013
        %v3015 = vlaneseq
        %v3016 = vshrl.u32 %v3015, 7
        %v3017 = vsub.s32 5, %v3016
        %v3018 = vrot.slane %v2791, %v3017
        %v3019 = vlaneseq
        %v3020 = vshrl.u32 %v3019, 7
        %v3021 = vsub.s32 6, %v3020
        %v3022 = vrot.slane %v2791, %v3021
        %v3023 = vlaneseq
        %v3024 = vshrl.u32 %v3023, 7
        %v3025 = vsub.s32 7, %v3024
        %v3026 = vrot.slane %v2791, %v3025
        %v3027 = vlaneseq
        %v3028 = vshrl.u32 %v3027, 7
        %v3029 = vsub.s32 0, %v3028
        %v3030 = vrot.slane %v2794, %v3029
        %v3031 = vlaneseq
        %v3032 = vshrl.u32 %v3031, 7
        %v3033 = vsub.s32 1, %v3032
        %v3034 = vrot.slane %v2794, %v3033
        %v3035 = vlaneseq
        %v3036 = vshrl.u32 %v3035, 7
        %v3037 = vsub.s32 2, %v3036
        %v3038 = vrot.slane %v2794, %v3037
        %v3039 = vlaneseq
        %v3040 = vshrl.u32 %v3039, 7
        %v3041 = vsub.s32 3, %v3040
        %v3042 = vrot.slane %v2794, %v3041
        %v3043 = vlaneseq
        %v3044 = vshrl.u32 %v3043, 7
        %v3045 = vsub.s32 4, %v3044
        %v3046 = vrot.slane %v2794, %v3045
        %v3047 = vlaneseq
        %v3048 = vshrl.u32 %v3047, 7
        %v3049 = vsub.s32 5, %v3048
        %v3050 = vrot.slane %v2794, %v3049
        %v3051 = vlaneseq
        %v3052 = vshrl.u32 %v3051, 7
        %v3053 = vsub.s32 6, %v3052
        %v3054 = vrot.slane %v2794, %v3053
        %v3055 = vlaneseq
        %v3056 = vshrl.u32 %v3055, 7
        %v3057 = vsub.s32 7, %v3056
        %v3058 = vrot.slane %v2794, %v3057
        %v3123 = vsub.f32 %v2122, %v2806
        %v3124 = vsub.f32 %v2123, %v2810
        %v3125 = vsub.f32 %v2124, %v2814
        %v3126 = vsub.f32 %v2125, %v2818
        %v3127 = vsub.f32 %v2126, %v2822
        %v3128 = vsub.f32 %v2127, %v2826
        %v3129 = vsub.f32 %v2128, %v2830
        %v3130 = vsub.f32 %v2129, %v2834
        %v3131 = vsub.f32 %v2130, %v2838
        %v3132 = vsub.f32 %v2131, %v2842
        %v3133 = vsub.f32 %v2132, %v2846
        %v3134 = vsub.f32 %v2133, %v2850
        %v3135 = vsub.f32 %v2134, %v2854
        %v3136 = vsub.f32 %v2135, %v2858
        %v3137 = vsub.f32 %v2136, %v2862
        %v3138 = vsub.f32 %v2137, %v2866
        %v3139 = vsub.f32 %v2138, %v2870
        %v3140 = vsub.f32 %v2139, %v2874
        %v3141 = vsub.f32 %v2140, %v2878
        %v3142 = vsub.f32 %v2141, %v2882
        %v3143 = vsub.f32 %v2142, %v2886
        %v3144 = vsub.f32 %v2143, %v2890
        %v3145 = vsub.f32 %v2144, %v2894
        %v3146 = vsub.f32 %v2145, %v2898
        %v3147 = vsub.f32 %v2146, %v2902
        %v3148 = vsub.f32 %v2147, %v2906
        %v3149 = vsub.f32 %v2148, %v2910
        %v3150 = vsub.f32 %v2149, %v2914
        %v3151 = vsub.f32 %v2150, %v2918
        %v3152 = vsub.f32 %v2151, %v2922
        %v3153 = vsub.f32 %v2152, %v2926
        %v3154 = vsub.f32 %v2153, %v2930
        %v3155 = vsub.f32 %v2154, %v2934
        %v3156 = vsub.f32 %v2155, %v2938
        %v3157 = vsub.f32 %v2156, %v2942
        %v3158 = vsub.f32 %v2157, %v2946
        %v3159 = vsub.f32 %v2158, %v2950
        %v3160 = vsub.f32 %v2159, %v2954
        %v3161 = vsub.f32 %v2160, %v2958
        %v3162 = vsub.f32 %v2161, %v2962
        %v3163 = vsub.f32 %v2162, %v2966
        %v3164 = vsub.f32 %v2163, %v2970
        %v3165 = vsub.f32 %v2164, %v2974
        %v3166 = vsub.f32 %v2165, %v2978
        %v3167 = vsub.f32 %v2166, %v2982
        %v3168 = vsub.f32 %v2167, %v2986
        %v3169 = vsub.f32 %v2168, %v2990
        %v3170 = vsub.f32 %v2169, %v2994
        %v3171 = vsub.f32 %v2170, %v2998
        %v3172 = vsub.f32 %v2171, %v3002
        %v3173 = vsub.f32 %v2172, %v3006
        %v3174 = vsub.f32 %v2173, %v3010
        %v3175 = vsub.f32 %v2174, %v3014
        %v3176 = vsub.f32 %v2175, %v3018
        %v3177 = vsub.f32 %v2176, %v3022
        %v3178 = vsub.f32 %v2177, %v3026
        %v3179 = vsub.f32 %v2178, %v3030
        %v3180 = vsub.f32 %v2179, %v3034
        %v3181 = vsub.f32 %v2180, %v3038
        %v3182 = vsub.f32 %v2181, %v3042
        %v3183 = vsub.f32 %v2182, %v3046
        %v3184 = vsub.f32 %v2183, %v3050
        %v3185 = vsub.f32 %v2184, %v3054
        %v3186 = vsub.f32 %v2185, %v3058
        %v3187 = vmul.f32 %v3123, 1.442695
        %v3188 = vpow.pop %v3187
        %v3189 = vmul.f32 %v3124, 1.442695
        %v3190 = vpow.pop %v3189
        %v3191 = vmul.f32 %v3125, 1.442695
        %v3192 = vpow.pop %v3191
        %v3193 = vmul.f32 %v3126, 1.442695
        %v3194 = vpow.pop %v3193
        %v3195 = vmul.f32 %v3127, 1.442695
        %v3196 = vpow.pop %v3195
        %v3197 = vmul.f32 %v3128, 1.442695
        %v3198 = vpow.pop %v3197
        %v3199 = vmul.f32 %v3129, 1.442695
        %v3200 = vpow.pop %v3199
        %v3201 = vmul.f32 %v3130, 1.442695
        %v3202 = vpow.pop %v3201
        %v3203 = vmul.f32 %v3131, 1.442695
        %v3204 = vpow.pop %v3203
        %v3205 = vmul.f32 %v3132, 1.442695
        %v3206 = vpow.pop %v3205
        %v3207 = vmul.f32 %v3133, 1.442695
        %v3208 = vpow.pop %v3207
        %v3209 = vmul.f32 %v3134, 1.442695
        %v3210 = vpow.pop %v3209
        %v3211 = vmul.f32 %v3135, 1.442695
        %v3212 = vpow.pop %v3211
        %v3213 = vmul.f32 %v3136, 1.442695
        %v3214 = vpow.pop %v3213
        %v3215 = vmul.f32 %v3137, 1.442695
        %v3216 = vpow.pop %v3215
        %v3217 = vmul.f32 %v3138, 1.442695
        %v3218 = vpow.pop %v3217
        %v3219 = vmul.f32 %v3139, 1.442695
        %v3220 = vpow.pop %v3219
        %v3221 = vmul.f32 %v3140, 1.442695
        %v3222 = vpow.pop %v3221
        %v3223 = vmul.f32 %v3141, 1.442695
        %v3224 = vpow.pop %v3223
        %v3225 = vmul.f32 %v3142, 1.442695
        %v3226 = vpow.pop %v3225
        %v3227 = vmul.f32 %v3143, 1.442695
        %v3228 = vpow.pop %v3227
        %v3229 = vmul.f32 %v3144, 1.442695
        %v3230 = vpow.pop %v3229
        %v3231 = vmul.f32 %v3145, 1.442695
        %v3232 = vpow.pop %v3231
        %v3233 = vmul.f32 %v3146, 1.442695
        %v3234 = vpow.pop %v3233
        %v3235 = vmul.f32 %v3147, 1.442695
        %v3236 = vpow.pop %v3235
        %v3237 = vmul.f32 %v3148, 1.442695
        %v3238 = vpow.pop %v3237
        %v3239 = vmul.f32 %v3149, 1.442695
        %v3240 = vpow.pop %v3239
        %v3241 = vmul.f32 %v3150, 1.442695
        %v3242 = vpow.pop %v3241
        %v3243 = vmul.f32 %v3151, 1.442695
        %v3244 = vpow.pop %v3243
        %v3245 = vmul.f32 %v3152, 1.442695
        %v3246 = vpow.pop %v3245
        %v3247 = vmul.f32 %v3153, 1.442695
        %v3248 = vpow.pop %v3247
        %v3249 = vmul.f32 %v3154, 1.442695
        %v3250 = vpow.pop %v3249
        %v3251 = vmul.f32 %v3155, 1.442695
        %v3252 = vpow.pop %v3251
        %v3253 = vmul.f32 %v3156, 1.442695
        %v3254 = vpow.pop %v3253
        %v3255 = vmul.f32 %v3157, 1.442695
        %v3256 = vpow.pop %v3255
        %v3257 = vmul.f32 %v3158, 1.442695
        %v3258 = vpow.pop %v3257
        %v3259 = vmul.f32 %v3159, 1.442695
        %v3260 = vpow.pop %v3259
        %v3261 = vmul.f32 %v3160, 1.442695
        %v3262 = vpow.pop %v3261
        %v3263 = vmul.f32 %v3161, 1.442695
        %v3264 = vpow.pop %v3263
        %v3265 = vmul.f32 %v3162, 1.442695
        %v3266 = vpow.pop %v3265
        %v3267 = vmul.f32 %v3163, 1.442695
        %v3268 = vpow.pop %v3267
        %v3269 = vmul.f32 %v3164, 1.442695
        %v3270 = vpow.pop %v3269
        %v3271 = vmul.f32 %v3165, 1.442695
        %v3272 = vpow.pop %v3271
        %v3273 = vmul.f32 %v3166, 1.442695
        %v3274 = vpow.pop %v3273
        %v3275 = vmul.f32 %v3167, 1.442695
        %v3276 = vpow.pop %v3275
        %v3277 = vmul.f32 %v3168, 1.442695
        %v3278 = vpow.pop %v3277
        %v3279 = vmul.f32 %v3169, 1.442695
        %v3280 = vpow.pop %v3279
        %v3281 = vmul.f32 %v3170, 1.442695
        %v3282 = vpow.pop %v3281
        %v3283 = vmul.f32 %v3171, 1.442695
        %v3284 = vpow.pop %v3283
        %v3285 = vmul.f32 %v3172, 1.442695
        %v3286 = vpow.pop %v3285
        %v3287 = vmul.f32 %v3173, 1.442695
        %v3288 = vpow.pop %v3287
        %v3289 = vmul.f32 %v3174, 1.442695
        %v3290 = vpow.pop %v3289
        %v3291 = vmul.f32 %v3175, 1.442695
        %v3292 = vpow.pop %v3291
        %v3293 = vmul.f32 %v3176, 1.442695
        %v3294 = vpow.pop %v3293
        %v3295 = vmul.f32 %v3177, 1.442695
        %v3296 = vpow.pop %v3295
        %v3297 = vmul.f32 %v3178, 1.442695
        %v3298 = vpow.pop %v3297
        %v3299 = vmul.f32 %v3179, 1.442695
        %v3300 = vpow.pop %v3299
        %v3301 = vmul.f32 %v3180, 1.442695
        %v3302 = vpow.pop %v3301
        %v3303 = vmul.f32 %v3181, 1.442695
        %v3304 = vpow.pop %v3303
        %v3305 = vmul.f32 %v3182, 1.442695
        %v3306 = vpow.pop %v3305
        %v3307 = vmul.f32 %v3183, 1.442695
        %v3308 = vpow.pop %v3307
        %v3309 = vmul.f32 %v3184, 1.442695
        %v3310 = vpow.pop %v3309
        %v3311 = vmul.f32 %v3185, 1.442695
        %v3312 = vpow.pop %v3311
        %v3313 = vmul.f32 %v3186, 1.442695
        %v3314 = vpow.pop %v3313
        %3379 = vset.pattern.permute.xlu0 0
        %3380 = vperm.xlu0 %3379, %v3188
        %v3381 = vpop.permute.xlu0 %3380
        %3382 = vset.pattern.permute.xlu0 0
        %3383 = vperm.xlu0 %3382, %v3190
        %v3384 = vpop.permute.xlu0 %3383
        %3385 = vset.pattern.permute.xlu0 0
        %3386 = vperm.xlu0 %3385, %v3192
        %v3387 = vpop.permute.xlu0 %3386
        %3388 = vset.pattern.permute.xlu0 0
        %3389 = vperm.xlu0 %3388, %v3194
        %v3390 = vpop.permute.xlu0 %3389
        %3391 = vset.pattern.permute.xlu0 0
        %3392 = vperm.xlu0 %3391, %v3196
        %v3393 = vpop.permute.xlu0 %3392
        %3394 = vset.pattern.permute.xlu0 0
        %3395 = vperm.xlu0 %3394, %v3198
        %v3396 = vpop.permute.xlu0 %3395
        %3397 = vset.pattern.permute.xlu0 0
        %3398 = vperm.xlu0 %3397, %v3200
        %v3399 = vpop.permute.xlu0 %3398
        %3400 = vset.pattern.permute.xlu0 0
        %3401 = vperm.xlu0 %3400, %v3202
        %v3402 = vpop.permute.xlu0 %3401
        %3403 = vset.pattern.permute.xlu0 0
        %3404 = vperm.xlu0 %3403, %v3204
        %v3405 = vpop.permute.xlu0 %3404
        %3406 = vset.pattern.permute.xlu0 0
        %3407 = vperm.xlu0 %3406, %v3206
        %v3408 = vpop.permute.xlu0 %3407
        %3409 = vset.pattern.permute.xlu0 0
        %3410 = vperm.xlu0 %3409, %v3208
        %v3411 = vpop.permute.xlu0 %3410
        %3412 = vset.pattern.permute.xlu0 0
        %3413 = vperm.xlu0 %3412, %v3210
        %v3414 = vpop.permute.xlu0 %3413
        %3415 = vset.pattern.permute.xlu0 0
        %3416 = vperm.xlu0 %3415, %v3212
        %v3417 = vpop.permute.xlu0 %3416
        %3418 = vset.pattern.permute.xlu0 0
        %3419 = vperm.xlu0 %3418, %v3214
        %v3420 = vpop.permute.xlu0 %3419
        %3421 = vset.pattern.permute.xlu0 0
        %3422 = vperm.xlu0 %3421, %v3216
        %v3423 = vpop.permute.xlu0 %3422
        %3424 = vset.pattern.permute.xlu0 0
        %3425 = vperm.xlu0 %3424, %v3218
        %v3426 = vpop.permute.xlu0 %3425
        %3427 = vset.pattern.permute.xlu0 0
        %3428 = vperm.xlu0 %3427, %v3220
        %v3429 = vpop.permute.xlu0 %3428
        %3430 = vset.pattern.permute.xlu0 0
        %3431 = vperm.xlu0 %3430, %v3222
        %v3432 = vpop.permute.xlu0 %3431
        %3433 = vset.pattern.permute.xlu0 0
        %3434 = vperm.xlu0 %3433, %v3224
        %v3435 = vpop.permute.xlu0 %3434
        %3436 = vset.pattern.permute.xlu0 0
        %3437 = vperm.xlu0 %3436, %v3226
        %v3438 = vpop.permute.xlu0 %3437
        %3439 = vset.pattern.permute.xlu0 0
        %3440 = vperm.xlu0 %3439, %v3228
        %v3441 = vpop.permute.xlu0 %3440
        %3442 = vset.pattern.permute.xlu0 0
        %3443 = vperm.xlu0 %3442, %v3230
        %v3444 = vpop.permute.xlu0 %3443
        %3445 = vset.pattern.permute.xlu0 0
        %3446 = vperm.xlu0 %3445, %v3232
        %v3447 = vpop.permute.xlu0 %3446
        %3448 = vset.pattern.permute.xlu0 0
        %3449 = vperm.xlu0 %3448, %v3234
        %v3450 = vpop.permute.xlu0 %3449
        %3451 = vset.pattern.permute.xlu0 0
        %3452 = vperm.xlu0 %3451, %v3236
        %v3453 = vpop.permute.xlu0 %3452
        %3454 = vset.pattern.permute.xlu0 0
        %3455 = vperm.xlu0 %3454, %v3238
        %v3456 = vpop.permute.xlu0 %3455
        %3457 = vset.pattern.permute.xlu0 0
        %3458 = vperm.xlu0 %3457, %v3240
        %v3459 = vpop.permute.xlu0 %3458
        %3460 = vset.pattern.permute.xlu0 0
        %3461 = vperm.xlu0 %3460, %v3242
        %v3462 = vpop.permute.xlu0 %3461
        %3463 = vset.pattern.permute.xlu0 0
        %3464 = vperm.xlu0 %3463, %v3244
        %v3465 = vpop.permute.xlu0 %3464
        %3466 = vset.pattern.permute.xlu0 0
        %3467 = vperm.xlu0 %3466, %v3246
        %v3468 = vpop.permute.xlu0 %3467
        %3469 = vset.pattern.permute.xlu0 0
        %3470 = vperm.xlu0 %3469, %v3248
        %v3471 = vpop.permute.xlu0 %3470
        %3472 = vset.pattern.permute.xlu0 0
        %3473 = vperm.xlu0 %3472, %v3250
        %v3474 = vpop.permute.xlu0 %3473
        %3475 = vset.pattern.permute.xlu0 0
        %3476 = vperm.xlu0 %3475, %v3252
        %v3477 = vpop.permute.xlu0 %3476
        %3478 = vset.pattern.permute.xlu0 0
        %3479 = vperm.xlu0 %3478, %v3254
        %v3480 = vpop.permute.xlu0 %3479
        %3481 = vset.pattern.permute.xlu0 0
        %3482 = vperm.xlu0 %3481, %v3256
        %v3483 = vpop.permute.xlu0 %3482
        %3484 = vset.pattern.permute.xlu0 0
        %3485 = vperm.xlu0 %3484, %v3258
        %v3486 = vpop.permute.xlu0 %3485
        %3487 = vset.pattern.permute.xlu0 0
        %3488 = vperm.xlu0 %3487, %v3260
        %v3489 = vpop.permute.xlu0 %3488
        %3490 = vset.pattern.permute.xlu0 0
        %3491 = vperm.xlu0 %3490, %v3262
        %v3492 = vpop.permute.xlu0 %3491
        %3493 = vset.pattern.permute.xlu0 0
        %3494 = vperm.xlu0 %3493, %v3264
        %v3495 = vpop.permute.xlu0 %3494
        %3496 = vset.pattern.permute.xlu0 0
        %3497 = vperm.xlu0 %3496, %v3266
        %v3498 = vpop.permute.xlu0 %3497
        %3499 = vset.pattern.permute.xlu0 0
        %3500 = vperm.xlu0 %3499, %v3268
        %v3501 = vpop.permute.xlu0 %3500
        %3502 = vset.pattern.permute.xlu0 0
        %3503 = vperm.xlu0 %3502, %v3270
        %v3504 = vpop.permute.xlu0 %3503
        %3505 = vset.pattern.permute.xlu0 0
        %3506 = vperm.xlu0 %3505, %v3272
        %v3507 = vpop.permute.xlu0 %3506
        %3508 = vset.pattern.permute.xlu0 0
        %3509 = vperm.xlu0 %3508, %v3274
        %v3510 = vpop.permute.xlu0 %3509
        %3511 = vset.pattern.permute.xlu0 0
        %3512 = vperm.xlu0 %3511, %v3276
        %v3513 = vpop.permute.xlu0 %3512
        %3514 = vset.pattern.permute.xlu0 0
        %3515 = vperm.xlu0 %3514, %v3278
        %v3516 = vpop.permute.xlu0 %3515
        %3517 = vset.pattern.permute.xlu0 0
        %3518 = vperm.xlu0 %3517, %v3280
        %v3519 = vpop.permute.xlu0 %3518
        %3520 = vset.pattern.permute.xlu0 0
        %3521 = vperm.xlu0 %3520, %v3282
        %v3522 = vpop.permute.xlu0 %3521
        %3523 = vset.pattern.permute.xlu0 0
        %3524 = vperm.xlu0 %3523, %v3284
        %v3525 = vpop.permute.xlu0 %3524
        %3526 = vset.pattern.permute.xlu0 0
        %3527 = vperm.xlu0 %3526, %v3286
        %v3528 = vpop.permute.xlu0 %3527
        %3529 = vset.pattern.permute.xlu0 0
        %3530 = vperm.xlu0 %3529, %v3288
        %v3531 = vpop.permute.xlu0 %3530
        %3532 = vset.pattern.permute.xlu0 0
        %3533 = vperm.xlu0 %3532, %v3290
        %v3534 = vpop.permute.xlu0 %3533
        %3535 = vset.pattern.permute.xlu0 0
        %3536 = vperm.xlu0 %3535, %v3292
        %v3537 = vpop.permute.xlu0 %3536
        %3538 = vset.pattern.permute.xlu0 0
        %3539 = vperm.xlu0 %3538, %v3294
        %v3540 = vpop.permute.xlu0 %3539
        %3541 = vset.pattern.permute.xlu0 0
        %3542 = vperm.xlu0 %3541, %v3296
        %v3543 = vpop.permute.xlu0 %3542
        %3544 = vset.pattern.permute.xlu0 0
        %3545 = vperm.xlu0 %3544, %v3298
        %v3546 = vpop.permute.xlu0 %3545
        %3547 = vset.pattern.permute.xlu0 0
        %3548 = vperm.xlu0 %3547, %v3300
        %v3549 = vpop.permute.xlu0 %3548
        %3550 = vset.pattern.permute.xlu0 0
        %3551 = vperm.xlu0 %3550, %v3302
        %v3552 = vpop.permute.xlu0 %3551
        %3553 = vset.pattern.permute.xlu0 0
        %3554 = vperm.xlu0 %3553, %v3304
        %v3555 = vpop.permute.xlu0 %3554
        %3556 = vset.pattern.permute.xlu0 0
        %3557 = vperm.xlu0 %3556, %v3306
        %v3558 = vpop.permute.xlu0 %3557
        %3559 = vset.pattern.permute.xlu0 0
        %3560 = vperm.xlu0 %3559, %v3308
        %v3561 = vpop.permute.xlu0 %3560
        %3562 = vset.pattern.permute.xlu0 0
        %3563 = vperm.xlu0 %3562, %v3310
        %v3564 = vpop.permute.xlu0 %3563
        %3565 = vset.pattern.permute.xlu0 0
        %3566 = vperm.xlu0 %3565, %v3312
        %v3567 = vpop.permute.xlu0 %3566
        %3568 = vset.pattern.permute.xlu0 0
        %3569 = vperm.xlu0 %3568, %v3314
        %v3570 = vpop.permute.xlu0 %3569
        %v3571 = vlaneseq
        %v3572 = vshrl.u32 %v3571, 7
        %v3573 = vsub.s32 %v2443, %v3572
        %v3574 = vrot.slane %v3381, %v3573
        %v3575 = vlaneseq
        %v3576 = vshrl.u32 %v3575, 7
        %v3577 = vsub.s32 %v2443, %v3576
        %v3578 = vrot.slane %v3384, %v3577
        %v3579 = vlaneseq
        %v3580 = vshrl.u32 %v3579, 7
        %v3581 = vsub.s32 %v2443, %v3580
        %v3582 = vrot.slane %v3387, %v3581
        %v3583 = vlaneseq
        %v3584 = vshrl.u32 %v3583, 7
        %v3585 = vsub.s32 %v2443, %v3584
        %v3586 = vrot.slane %v3390, %v3585
        %v3587 = vlaneseq
        %v3588 = vshrl.u32 %v3587, 7
        %v3589 = vsub.s32 %v2443, %v3588
        %v3590 = vrot.slane %v3393, %v3589
        %v3591 = vlaneseq
        %v3592 = vshrl.u32 %v3591, 7
        %v3593 = vsub.s32 %v2443, %v3592
        %v3594 = vrot.slane %v3396, %v3593
        %v3595 = vlaneseq
        %v3596 = vshrl.u32 %v3595, 7
        %v3597 = vsub.s32 %v2443, %v3596
        %v3598 = vrot.slane %v3399, %v3597
        %v3599 = vlaneseq
        %v3600 = vshrl.u32 %v3599, 7
        %v3601 = vsub.s32 %v2443, %v3600
        %v3602 = vrot.slane %v3402, %v3601
        %v3603 = vlaneseq
        %v3604 = vshrl.u32 %v3603, 7
        %v3605 = vsub.s32 %v2443, %v3604
        %v3606 = vrot.slane %v3405, %v3605
        %v3607 = vlaneseq
        %v3608 = vshrl.u32 %v3607, 7
        %v3609 = vsub.s32 %v2443, %v3608
        %v3610 = vrot.slane %v3408, %v3609
        %v3611 = vlaneseq
        %v3612 = vshrl.u32 %v3611, 7
        %v3613 = vsub.s32 %v2443, %v3612
        %v3614 = vrot.slane %v3411, %v3613
        %v3615 = vlaneseq
        %v3616 = vshrl.u32 %v3615, 7
        %v3617 = vsub.s32 %v2443, %v3616
        %v3618 = vrot.slane %v3414, %v3617
        %v3619 = vlaneseq
        %v3620 = vshrl.u32 %v3619, 7
        %v3621 = vsub.s32 %v2443, %v3620
        %v3622 = vrot.slane %v3417, %v3621
        %v3623 = vlaneseq
        %v3624 = vshrl.u32 %v3623, 7
        %v3625 = vsub.s32 %v2443, %v3624
        %v3626 = vrot.slane %v3420, %v3625
        %v3627 = vlaneseq
        %v3628 = vshrl.u32 %v3627, 7
        %v3629 = vsub.s32 %v2443, %v3628
        %v3630 = vrot.slane %v3423, %v3629
        %v3631 = vlaneseq
        %v3632 = vshrl.u32 %v3631, 7
        %v3633 = vsub.s32 %v2443, %v3632
        %v3634 = vrot.slane %v3426, %v3633
        %v3635 = vlaneseq
        %v3636 = vshrl.u32 %v3635, 7
        %v3637 = vsub.s32 %v2443, %v3636
        %v3638 = vrot.slane %v3429, %v3637
        %v3639 = vlaneseq
        %v3640 = vshrl.u32 %v3639, 7
        %v3641 = vsub.s32 %v2443, %v3640
        %v3642 = vrot.slane %v3432, %v3641
        %v3643 = vlaneseq
        %v3644 = vshrl.u32 %v3643, 7
        %v3645 = vsub.s32 %v2443, %v3644
        %v3646 = vrot.slane %v3435, %v3645
        %v3647 = vlaneseq
        %v3648 = vshrl.u32 %v3647, 7
        %v3649 = vsub.s32 %v2443, %v3648
        %v3650 = vrot.slane %v3438, %v3649
        %v3651 = vlaneseq
        %v3652 = vshrl.u32 %v3651, 7
        %v3653 = vsub.s32 %v2443, %v3652
        %v3654 = vrot.slane %v3441, %v3653
        %v3655 = vlaneseq
        %v3656 = vshrl.u32 %v3655, 7
        %v3657 = vsub.s32 %v2443, %v3656
        %v3658 = vrot.slane %v3444, %v3657
        %v3659 = vlaneseq
        %v3660 = vshrl.u32 %v3659, 7
        %v3661 = vsub.s32 %v2443, %v3660
        %v3662 = vrot.slane %v3447, %v3661
        %v3663 = vlaneseq
        %v3664 = vshrl.u32 %v3663, 7
        %v3665 = vsub.s32 %v2443, %v3664
        %v3666 = vrot.slane %v3450, %v3665
        %v3667 = vlaneseq
        %v3668 = vshrl.u32 %v3667, 7
        %v3669 = vsub.s32 %v2443, %v3668
        %v3670 = vrot.slane %v3453, %v3669
        %v3671 = vlaneseq
        %v3672 = vshrl.u32 %v3671, 7
        %v3673 = vsub.s32 %v2443, %v3672
        %v3674 = vrot.slane %v3456, %v3673
        %v3675 = vlaneseq
        %v3676 = vshrl.u32 %v3675, 7
        %v3677 = vsub.s32 %v2443, %v3676
        %v3678 = vrot.slane %v3459, %v3677
        %v3679 = vlaneseq
        %v3680 = vshrl.u32 %v3679, 7
        %v3681 = vsub.s32 %v2443, %v3680
        %v3682 = vrot.slane %v3462, %v3681
        %v3683 = vlaneseq
        %v3684 = vshrl.u32 %v3683, 7
        %v3685 = vsub.s32 %v2443, %v3684
        %v3686 = vrot.slane %v3465, %v3685
        %v3687 = vlaneseq
        %v3688 = vshrl.u32 %v3687, 7
        %v3689 = vsub.s32 %v2443, %v3688
        %v3690 = vrot.slane %v3468, %v3689
        %v3691 = vlaneseq
        %v3692 = vshrl.u32 %v3691, 7
        %v3693 = vsub.s32 %v2443, %v3692
        %v3694 = vrot.slane %v3471, %v3693
        %v3695 = vlaneseq
        %v3696 = vshrl.u32 %v3695, 7
        %v3697 = vsub.s32 %v2443, %v3696
        %v3698 = vrot.slane %v3474, %v3697
        %v3699 = vlaneseq
        %v3700 = vshrl.u32 %v3699, 7
        %v3701 = vsub.s32 %v2443, %v3700
        %v3702 = vrot.slane %v3477, %v3701
        %v3703 = vlaneseq
        %v3704 = vshrl.u32 %v3703, 7
        %v3705 = vsub.s32 %v2443, %v3704
        %v3706 = vrot.slane %v3480, %v3705
        %v3707 = vlaneseq
        %v3708 = vshrl.u32 %v3707, 7
        %v3709 = vsub.s32 %v2443, %v3708
        %v3710 = vrot.slane %v3483, %v3709
        %v3711 = vlaneseq
        %v3712 = vshrl.u32 %v3711, 7
        %v3713 = vsub.s32 %v2443, %v3712
        %v3714 = vrot.slane %v3486, %v3713
        %v3715 = vlaneseq
        %v3716 = vshrl.u32 %v3715, 7
        %v3717 = vsub.s32 %v2443, %v3716
        %v3718 = vrot.slane %v3489, %v3717
        %v3719 = vlaneseq
        %v3720 = vshrl.u32 %v3719, 7
        %v3721 = vsub.s32 %v2443, %v3720
        %v3722 = vrot.slane %v3492, %v3721
        %v3723 = vlaneseq
        %v3724 = vshrl.u32 %v3723, 7
        %v3725 = vsub.s32 %v2443, %v3724
        %v3726 = vrot.slane %v3495, %v3725
        %v3727 = vlaneseq
        %v3728 = vshrl.u32 %v3727, 7
        %v3729 = vsub.s32 %v2443, %v3728
        %v3730 = vrot.slane %v3498, %v3729
        %v3731 = vlaneseq
        %v3732 = vshrl.u32 %v3731, 7
        %v3733 = vsub.s32 %v2443, %v3732
        %v3734 = vrot.slane %v3501, %v3733
        %v3735 = vlaneseq
        %v3736 = vshrl.u32 %v3735, 7
        %v3737 = vsub.s32 %v2443, %v3736
        %v3738 = vrot.slane %v3504, %v3737
        %v3739 = vlaneseq
        %v3740 = vshrl.u32 %v3739, 7
        %v3741 = vsub.s32 %v2443, %v3740
        %v3742 = vrot.slane %v3507, %v3741
        %v3743 = vlaneseq
        %v3744 = vshrl.u32 %v3743, 7
        %v3745 = vsub.s32 %v2443, %v3744
        %v3746 = vrot.slane %v3510, %v3745
        %v3747 = vlaneseq
        %v3748 = vshrl.u32 %v3747, 7
        %v3749 = vsub.s32 %v2443, %v3748
        %v3750 = vrot.slane %v3513, %v3749
        %v3751 = vlaneseq
        %v3752 = vshrl.u32 %v3751, 7
        %v3753 = vsub.s32 %v2443, %v3752
        %v3754 = vrot.slane %v3516, %v3753
        %v3755 = vlaneseq
        %v3756 = vshrl.u32 %v3755, 7
        %v3757 = vsub.s32 %v2443, %v3756
        %v3758 = vrot.slane %v3519, %v3757
        %v3759 = vlaneseq
        %v3760 = vshrl.u32 %v3759, 7
        %v3761 = vsub.s32 %v2443, %v3760
        %v3762 = vrot.slane %v3522, %v3761
        %v3763 = vlaneseq
        %v3764 = vshrl.u32 %v3763, 7
        %v3765 = vsub.s32 %v2443, %v3764
        %v3766 = vrot.slane %v3525, %v3765
        %v3767 = vlaneseq
        %v3768 = vshrl.u32 %v3767, 7
        %v3769 = vsub.s32 %v2443, %v3768
        %v3770 = vrot.slane %v3528, %v3769
        %v3771 = vlaneseq
        %v3772 = vshrl.u32 %v3771, 7
        %v3773 = vsub.s32 %v2443, %v3772
        %v3774 = vrot.slane %v3531, %v3773
        %v3775 = vlaneseq
        %v3776 = vshrl.u32 %v3775, 7
        %v3777 = vsub.s32 %v2443, %v3776
        %v3778 = vrot.slane %v3534, %v3777
        %v3779 = vlaneseq
        %v3780 = vshrl.u32 %v3779, 7
        %v3781 = vsub.s32 %v2443, %v3780
        %v3782 = vrot.slane %v3537, %v3781
        %v3783 = vlaneseq
        %v3784 = vshrl.u32 %v3783, 7
        %v3785 = vsub.s32 %v2443, %v3784
        %v3786 = vrot.slane %v3540, %v3785
        %v3787 = vlaneseq
        %v3788 = vshrl.u32 %v3787, 7
        %v3789 = vsub.s32 %v2443, %v3788
        %v3790 = vrot.slane %v3543, %v3789
        %v3791 = vlaneseq
        %v3792 = vshrl.u32 %v3791, 7
        %v3793 = vsub.s32 %v2443, %v3792
        %v3794 = vrot.slane %v3546, %v3793
        %v3795 = vlaneseq
        %v3796 = vshrl.u32 %v3795, 7
        %v3797 = vsub.s32 %v2443, %v3796
        %v3798 = vrot.slane %v3549, %v3797
        %v3799 = vlaneseq
        %v3800 = vshrl.u32 %v3799, 7
        %v3801 = vsub.s32 %v2443, %v3800
        %v3802 = vrot.slane %v3552, %v3801
        %v3803 = vlaneseq
        %v3804 = vshrl.u32 %v3803, 7
        %v3805 = vsub.s32 %v2443, %v3804
        %v3806 = vrot.slane %v3555, %v3805
        %v3807 = vlaneseq
        %v3808 = vshrl.u32 %v3807, 7
        %v3809 = vsub.s32 %v2443, %v3808
        %v3810 = vrot.slane %v3558, %v3809
        %v3811 = vlaneseq
        %v3812 = vshrl.u32 %v3811, 7
        %v3813 = vsub.s32 %v2443, %v3812
        %v3814 = vrot.slane %v3561, %v3813
        %v3815 = vlaneseq
        %v3816 = vshrl.u32 %v3815, 7
        %v3817 = vsub.s32 %v2443, %v3816
        %v3818 = vrot.slane %v3564, %v3817
        %v3819 = vlaneseq
        %v3820 = vshrl.u32 %v3819, 7
        %v3821 = vsub.s32 %v2443, %v3820
        %v3822 = vrot.slane %v3567, %v3821
        %v3823 = vlaneseq
        %v3824 = vshrl.u32 %v3823, 7
        %v3825 = vsub.s32 %v2443, %v3824
        %v3826 = vrot.slane %v3570, %v3825
        %v3827 = vsel %vm2700, %v3578, %v3574
        %v3828 = vsel %vm2702, %v3582, %v3827
        %v3829 = vsel %vm2704, %v3586, %v3828
        %v3830 = vsel %vm2706, %v3590, %v3829
        %v3831 = vsel %vm2708, %v3594, %v3830
        %v3832 = vsel %vm2710, %v3598, %v3831
        %v3833 = vsel %vm2712, %v3602, %v3832
        %v3834 = vsel %vm2700, %v3610, %v3606
        %v3835 = vsel %vm2702, %v3614, %v3834
        %v3836 = vsel %vm2704, %v3618, %v3835
        %v3837 = vsel %vm2706, %v3622, %v3836
        %v3838 = vsel %vm2708, %v3626, %v3837
        %v3839 = vsel %vm2710, %v3630, %v3838
        %v3840 = vsel %vm2712, %v3634, %v3839
        %v3841 = vsel %vm2700, %v3642, %v3638
        %v3842 = vsel %vm2702, %v3646, %v3841
        %v3843 = vsel %vm2704, %v3650, %v3842
        %v3844 = vsel %vm2706, %v3654, %v3843
        %v3845 = vsel %vm2708, %v3658, %v3844
        %v3846 = vsel %vm2710, %v3662, %v3845
        %v3847 = vsel %vm2712, %v3666, %v3846
        %v3848 = vsel %vm2700, %v3674, %v3670
        %v3849 = vsel %vm2702, %v3678, %v3848
        %v3850 = vsel %vm2704, %v3682, %v3849
        %v3851 = vsel %vm2706, %v3686, %v3850
        %v3852 = vsel %vm2708, %v3690, %v3851
        %v3853 = vsel %vm2710, %v3694, %v3852
        %v3854 = vsel %vm2712, %v3698, %v3853
        %v3855 = vsel %vm2700, %v3706, %v3702
        %v3856 = vsel %vm2702, %v3710, %v3855
        %v3857 = vsel %vm2704, %v3714, %v3856
        %v3858 = vsel %vm2706, %v3718, %v3857
        %v3859 = vsel %vm2708, %v3722, %v3858
        %v3860 = vsel %vm2710, %v3726, %v3859
        %v3861 = vsel %vm2712, %v3730, %v3860
        %v3862 = vsel %vm2700, %v3738, %v3734
        %v3863 = vsel %vm2702, %v3742, %v3862
        %v3864 = vsel %vm2704, %v3746, %v3863
        %v3865 = vsel %vm2706, %v3750, %v3864
        %v3866 = vsel %vm2708, %v3754, %v3865
        %v3867 = vsel %vm2710, %v3758, %v3866
        %v3868 = vsel %vm2712, %v3762, %v3867
        %v3869 = vsel %vm2700, %v3770, %v3766
        %v3870 = vsel %vm2702, %v3774, %v3869
        %v3871 = vsel %vm2704, %v3778, %v3870
        %v3872 = vsel %vm2706, %v3782, %v3871
        %v3873 = vsel %vm2708, %v3786, %v3872
        %v3874 = vsel %vm2710, %v3790, %v3873
        %v3875 = vsel %vm2712, %v3794, %v3874
        %v3876 = vsel %vm2700, %v3802, %v3798
        %v3877 = vsel %vm2702, %v3806, %v3876
        %v3878 = vsel %vm2704, %v3810, %v3877
        %v3879 = vsel %vm2706, %v3814, %v3878
        %v3880 = vsel %vm2708, %v3818, %v3879
        %v3881 = vsel %vm2710, %v3822, %v3880
        %v3882 = vsel %vm2712, %v3826, %v3881
        %v3891 = vsel %vm1863, %v3833, 0.0
        %3892 = vadd.xlane.f32.xlu0 %v3891
        %v3893 = vpop.xlane.xlu0 %3892
        %v3894 = vsel %vm1863, %v3840, 0.0
        %3895 = vadd.xlane.f32.xlu0 %v3894
        %v3896 = vpop.xlane.xlu0 %3895
        %v3897 = vsel %vm1863, %v3847, 0.0
        %3898 = vadd.xlane.f32.xlu0 %v3897
        %v3899 = vpop.xlane.xlu0 %3898
        %v3900 = vsel %vm1863, %v3854, 0.0
        %3901 = vadd.xlane.f32.xlu0 %v3900
        %v3902 = vpop.xlane.xlu0 %3901
        %v3903 = vsel %vm1863, %v3861, 0.0
        %3904 = vadd.xlane.f32.xlu0 %v3903
        %v3905 = vpop.xlane.xlu0 %3904
        %v3906 = vsel %vm1863, %v3868, 0.0
        %3907 = vadd.xlane.f32.xlu0 %v3906
        %v3908 = vpop.xlane.xlu0 %3907
        %v3909 = vsel %vm1863, %v3875, 0.0
        %3910 = vadd.xlane.f32.xlu0 %v3909
        %v3911 = vpop.xlane.xlu0 %3910
        %v3912 = vsel %vm1863, %v3882, 0.0
        %3913 = vadd.xlane.f32.xlu0 %v3912
        %v3914 = vpop.xlane.xlu0 %3913
        %v3915 = vrcp.pop %v3893
        %v3916 = vrcp.pop %v3896
        %v3917 = vrcp.pop %v3899
        %v3918 = vrcp.pop %v3902
        %v3919 = vrcp.pop %v3905
        %v3920 = vrcp.pop %v3908
        %v3921 = vrcp.pop %v3911
        %v3922 = vrcp.pop %v3914
        %v3931 = vlaneseq
        %v3932 = vshrl.u32 %v3931, 7
        %v3933 = vsub.s32 0, %v3932
        %v3934 = vrot.slane %v3915, %v3933
        %v3935 = vlaneseq
        %v3936 = vshrl.u32 %v3935, 7
        %v3937 = vsub.s32 1, %v3936
        %v3938 = vrot.slane %v3915, %v3937
        %v3939 = vlaneseq
        %v3940 = vshrl.u32 %v3939, 7
        %v3941 = vsub.s32 2, %v3940
        %v3942 = vrot.slane %v3915, %v3941
        %v3943 = vlaneseq
        %v3944 = vshrl.u32 %v3943, 7
        %v3945 = vsub.s32 3, %v3944
        %v3946 = vrot.slane %v3915, %v3945
        %v3947 = vlaneseq
        %v3948 = vshrl.u32 %v3947, 7
        %v3949 = vsub.s32 4, %v3948
        %v3950 = vrot.slane %v3915, %v3949
        %v3951 = vlaneseq
        %v3952 = vshrl.u32 %v3951, 7
        %v3953 = vsub.s32 5, %v3952
        %v3954 = vrot.slane %v3915, %v3953
        %v3955 = vlaneseq
        %v3956 = vshrl.u32 %v3955, 7
        %v3957 = vsub.s32 6, %v3956
        %v3958 = vrot.slane %v3915, %v3957
        %v3959 = vlaneseq
        %v3960 = vshrl.u32 %v3959, 7
        %v3961 = vsub.s32 7, %v3960
        %v3962 = vrot.slane %v3915, %v3961
        %v3963 = vlaneseq
        %v3964 = vshrl.u32 %v3963, 7
        %v3965 = vsub.s32 0, %v3964
        %v3966 = vrot.slane %v3916, %v3965
        %v3967 = vlaneseq
        %v3968 = vshrl.u32 %v3967, 7
        %v3969 = vsub.s32 1, %v3968
        %v3970 = vrot.slane %v3916, %v3969
        %v3971 = vlaneseq
        %v3972 = vshrl.u32 %v3971, 7
        %v3973 = vsub.s32 2, %v3972
        %v3974 = vrot.slane %v3916, %v3973
        %v3975 = vlaneseq
        %v3976 = vshrl.u32 %v3975, 7
        %v3977 = vsub.s32 3, %v3976
        %v3978 = vrot.slane %v3916, %v3977
        %v3979 = vlaneseq
        %v3980 = vshrl.u32 %v3979, 7
        %v3981 = vsub.s32 4, %v3980
        %v3982 = vrot.slane %v3916, %v3981
        %v3983 = vlaneseq
        %v3984 = vshrl.u32 %v3983, 7
        %v3985 = vsub.s32 5, %v3984
        %v3986 = vrot.slane %v3916, %v3985
        %v3987 = vlaneseq
        %v3988 = vshrl.u32 %v3987, 7
        %v3989 = vsub.s32 6, %v3988
        %v3990 = vrot.slane %v3916, %v3989
        %v3991 = vlaneseq
        %v3992 = vshrl.u32 %v3991, 7
        %v3993 = vsub.s32 7, %v3992
        %v3994 = vrot.slane %v3916, %v3993
        %v3995 = vlaneseq
        %v3996 = vshrl.u32 %v3995, 7
        %v3997 = vsub.s32 0, %v3996
        %v3998 = vrot.slane %v3917, %v3997
        %v3999 = vlaneseq
        %v4000 = vshrl.u32 %v3999, 7
        %v4001 = vsub.s32 1, %v4000
        %v4002 = vrot.slane %v3917, %v4001
        %v4003 = vlaneseq
        %v4004 = vshrl.u32 %v4003, 7
        %v4005 = vsub.s32 2, %v4004
        %v4006 = vrot.slane %v3917, %v4005
        %v4007 = vlaneseq
        %v4008 = vshrl.u32 %v4007, 7
        %v4009 = vsub.s32 3, %v4008
        %v4010 = vrot.slane %v3917, %v4009
        %v4011 = vlaneseq
        %v4012 = vshrl.u32 %v4011, 7
        %v4013 = vsub.s32 4, %v4012
        %v4014 = vrot.slane %v3917, %v4013
        %v4015 = vlaneseq
        %v4016 = vshrl.u32 %v4015, 7
        %v4017 = vsub.s32 5, %v4016
        %v4018 = vrot.slane %v3917, %v4017
        %v4019 = vlaneseq
        %v4020 = vshrl.u32 %v4019, 7
        %v4021 = vsub.s32 6, %v4020
        %v4022 = vrot.slane %v3917, %v4021
        %v4023 = vlaneseq
        %v4024 = vshrl.u32 %v4023, 7
        %v4025 = vsub.s32 7, %v4024
        %v4026 = vrot.slane %v3917, %v4025
        %v4027 = vlaneseq
        %v4028 = vshrl.u32 %v4027, 7
        %v4029 = vsub.s32 0, %v4028
        %v4030 = vrot.slane %v3918, %v4029
        %v4031 = vlaneseq
        %v4032 = vshrl.u32 %v4031, 7
        %v4033 = vsub.s32 1, %v4032
        %v4034 = vrot.slane %v3918, %v4033
        %v4035 = vlaneseq
        %v4036 = vshrl.u32 %v4035, 7
        %v4037 = vsub.s32 2, %v4036
        %v4038 = vrot.slane %v3918, %v4037
        %v4039 = vlaneseq
        %v4040 = vshrl.u32 %v4039, 7
        %v4041 = vsub.s32 3, %v4040
        %v4042 = vrot.slane %v3918, %v4041
        %v4043 = vlaneseq
        %v4044 = vshrl.u32 %v4043, 7
        %v4045 = vsub.s32 4, %v4044
        %v4046 = vrot.slane %v3918, %v4045
        %v4047 = vlaneseq
        %v4048 = vshrl.u32 %v4047, 7
        %v4049 = vsub.s32 5, %v4048
        %v4050 = vrot.slane %v3918, %v4049
        %v4051 = vlaneseq
        %v4052 = vshrl.u32 %v4051, 7
        %v4053 = vsub.s32 6, %v4052
        %v4054 = vrot.slane %v3918, %v4053
        %v4055 = vlaneseq
        %v4056 = vshrl.u32 %v4055, 7
        %v4057 = vsub.s32 7, %v4056
        %v4058 = vrot.slane %v3918, %v4057
        %v4059 = vlaneseq
        %v4060 = vshrl.u32 %v4059, 7
        %v4061 = vsub.s32 0, %v4060
        %v4062 = vrot.slane %v3919, %v4061
        %v4063 = vlaneseq
        %v4064 = vshrl.u32 %v4063, 7
        %v4065 = vsub.s32 1, %v4064
        %v4066 = vrot.slane %v3919, %v4065
        %v4067 = vlaneseq
        %v4068 = vshrl.u32 %v4067, 7
        %v4069 = vsub.s32 2, %v4068
        %v4070 = vrot.slane %v3919, %v4069
        %v4071 = vlaneseq
        %v4072 = vshrl.u32 %v4071, 7
        %v4073 = vsub.s32 3, %v4072
        %v4074 = vrot.slane %v3919, %v4073
        %v4075 = vlaneseq
        %v4076 = vshrl.u32 %v4075, 7
        %v4077 = vsub.s32 4, %v4076
        %v4078 = vrot.slane %v3919, %v4077
        %v4079 = vlaneseq
        %v4080 = vshrl.u32 %v4079, 7
        %v4081 = vsub.s32 5, %v4080
        %v4082 = vrot.slane %v3919, %v4081
        %v4083 = vlaneseq
        %v4084 = vshrl.u32 %v4083, 7
        %v4085 = vsub.s32 6, %v4084
        %v4086 = vrot.slane %v3919, %v4085
        %v4087 = vlaneseq
        %v4088 = vshrl.u32 %v4087, 7
        %v4089 = vsub.s32 7, %v4088
        %v4090 = vrot.slane %v3919, %v4089
        %v4091 = vlaneseq
        %v4092 = vshrl.u32 %v4091, 7
        %v4093 = vsub.s32 0, %v4092
        %v4094 = vrot.slane %v3920, %v4093
        %v4095 = vlaneseq
        %v4096 = vshrl.u32 %v4095, 7
        %v4097 = vsub.s32 1, %v4096
        %v4098 = vrot.slane %v3920, %v4097
        %v4099 = vlaneseq
        %v4100 = vshrl.u32 %v4099, 7
        %v4101 = vsub.s32 2, %v4100
        %v4102 = vrot.slane %v3920, %v4101
        %v4103 = vlaneseq
        %v4104 = vshrl.u32 %v4103, 7
        %v4105 = vsub.s32 3, %v4104
        %v4106 = vrot.slane %v3920, %v4105
        %v4107 = vlaneseq
        %v4108 = vshrl.u32 %v4107, 7
        %v4109 = vsub.s32 4, %v4108
        %v4110 = vrot.slane %v3920, %v4109
        %v4111 = vlaneseq
        %v4112 = vshrl.u32 %v4111, 7
        %v4113 = vsub.s32 5, %v4112
        %v4114 = vrot.slane %v3920, %v4113
        %v4115 = vlaneseq
        %v4116 = vshrl.u32 %v4115, 7
        %v4117 = vsub.s32 6, %v4116
        %v4118 = vrot.slane %v3920, %v4117
        %v4119 = vlaneseq
        %v4120 = vshrl.u32 %v4119, 7
        %v4121 = vsub.s32 7, %v4120
        %v4122 = vrot.slane %v3920, %v4121
        %v4123 = vlaneseq
        %v4124 = vshrl.u32 %v4123, 7
        %v4125 = vsub.s32 0, %v4124
        %v4126 = vrot.slane %v3921, %v4125
        %v4127 = vlaneseq
        %v4128 = vshrl.u32 %v4127, 7
        %v4129 = vsub.s32 1, %v4128
        %v4130 = vrot.slane %v3921, %v4129
        %v4131 = vlaneseq
        %v4132 = vshrl.u32 %v4131, 7
        %v4133 = vsub.s32 2, %v4132
        %v4134 = vrot.slane %v3921, %v4133
        %v4135 = vlaneseq
        %v4136 = vshrl.u32 %v4135, 7
        %v4137 = vsub.s32 3, %v4136
        %v4138 = vrot.slane %v3921, %v4137
        %v4139 = vlaneseq
        %v4140 = vshrl.u32 %v4139, 7
        %v4141 = vsub.s32 4, %v4140
        %v4142 = vrot.slane %v3921, %v4141
        %v4143 = vlaneseq
        %v4144 = vshrl.u32 %v4143, 7
        %v4145 = vsub.s32 5, %v4144
        %v4146 = vrot.slane %v3921, %v4145
        %v4147 = vlaneseq
        %v4148 = vshrl.u32 %v4147, 7
        %v4149 = vsub.s32 6, %v4148
        %v4150 = vrot.slane %v3921, %v4149
        %v4151 = vlaneseq
        %v4152 = vshrl.u32 %v4151, 7
        %v4153 = vsub.s32 7, %v4152
        %v4154 = vrot.slane %v3921, %v4153
        %v4155 = vlaneseq
        %v4156 = vshrl.u32 %v4155, 7
        %v4157 = vsub.s32 0, %v4156
        %v4158 = vrot.slane %v3922, %v4157
        %v4159 = vlaneseq
        %v4160 = vshrl.u32 %v4159, 7
        %v4161 = vsub.s32 1, %v4160
        %v4162 = vrot.slane %v3922, %v4161
        %v4163 = vlaneseq
        %v4164 = vshrl.u32 %v4163, 7
        %v4165 = vsub.s32 2, %v4164
        %v4166 = vrot.slane %v3922, %v4165
        %v4167 = vlaneseq
        %v4168 = vshrl.u32 %v4167, 7
        %v4169 = vsub.s32 3, %v4168
        %v4170 = vrot.slane %v3922, %v4169
        %v4171 = vlaneseq
        %v4172 = vshrl.u32 %v4171, 7
        %v4173 = vsub.s32 4, %v4172
        %v4174 = vrot.slane %v3922, %v4173
        %v4175 = vlaneseq
        %v4176 = vshrl.u32 %v4175, 7
        %v4177 = vsub.s32 5, %v4176
        %v4178 = vrot.slane %v3922, %v4177
        %v4179 = vlaneseq
        %v4180 = vshrl.u32 %v4179, 7
        %v4181 = vsub.s32 6, %v4180
        %v4182 = vrot.slane %v3922, %v4181
        %v4183 = vlaneseq
        %v4184 = vshrl.u32 %v4183, 7
        %v4185 = vsub.s32 7, %v4184
        %v4186 = vrot.slane %v3922, %v4185
        %v4251 = vmul.f32 %v3188, %v3934
        %v4252 = vmul.f32 %v3190, %v3938
        %v4253 = vmul.f32 %v3192, %v3942
        %v4254 = vmul.f32 %v3194, %v3946
        %v4255 = vmul.f32 %v3196, %v3950
        %v4256 = vmul.f32 %v3198, %v3954
        %v4257 = vmul.f32 %v3200, %v3958
        %v4258 = vmul.f32 %v3202, %v3962
        %v4259 = vmul.f32 %v3204, %v3966
        %v4260 = vmul.f32 %v3206, %v3970
        %v4261 = vmul.f32 %v3208, %v3974
        %v4262 = vmul.f32 %v3210, %v3978
        %v4263 = vmul.f32 %v3212, %v3982
        %v4264 = vmul.f32 %v3214, %v3986
        %v4265 = vmul.f32 %v3216, %v3990
        %v4266 = vmul.f32 %v3218, %v3994
        %v4267 = vmul.f32 %v3220, %v3998
        %v4268 = vmul.f32 %v3222, %v4002
        %v4269 = vmul.f32 %v3224, %v4006
        %v4270 = vmul.f32 %v3226, %v4010
        %v4271 = vmul.f32 %v3228, %v4014
        %v4272 = vmul.f32 %v3230, %v4018
        %v4273 = vmul.f32 %v3232, %v4022
        %v4274 = vmul.f32 %v3234, %v4026
        %v4275 = vmul.f32 %v3236, %v4030
        %v4276 = vmul.f32 %v3238, %v4034
        %v4277 = vmul.f32 %v3240, %v4038
        %v4278 = vmul.f32 %v3242, %v4042
        %v4279 = vmul.f32 %v3244, %v4046
        %v4280 = vmul.f32 %v3246, %v4050
        %v4281 = vmul.f32 %v3248, %v4054
        %v4282 = vmul.f32 %v3250, %v4058
        %v4283 = vmul.f32 %v3252, %v4062
        %v4284 = vmul.f32 %v3254, %v4066
        %v4285 = vmul.f32 %v3256, %v4070
        %v4286 = vmul.f32 %v3258, %v4074
        %v4287 = vmul.f32 %v3260, %v4078
        %v4288 = vmul.f32 %v3262, %v4082
        %v4289 = vmul.f32 %v3264, %v4086
        %v4290 = vmul.f32 %v3266, %v4090
        %v4291 = vmul.f32 %v3268, %v4094
        %v4292 = vmul.f32 %v3270, %v4098
        %v4293 = vmul.f32 %v3272, %v4102
        %v4294 = vmul.f32 %v3274, %v4106
        %v4295 = vmul.f32 %v3276, %v4110
        %v4296 = vmul.f32 %v3278, %v4114
        %v4297 = vmul.f32 %v3280, %v4118
        %v4298 = vmul.f32 %v3282, %v4122
        %v4299 = vmul.f32 %v3284, %v4126
        %v4300 = vmul.f32 %v3286, %v4130
        %v4301 = vmul.f32 %v3288, %v4134
        %v4302 = vmul.f32 %v3290, %v4138
        %v4303 = vmul.f32 %v3292, %v4142
        %v4304 = vmul.f32 %v3294, %v4146
        %v4305 = vmul.f32 %v3296, %v4150
        %v4306 = vmul.f32 %v3298, %v4154
        %v4307 = vmul.f32 %v3300, %v4158
        %v4308 = vmul.f32 %v3302, %v4162
        %v4309 = vmul.f32 %v3304, %v4166
        %v4310 = vmul.f32 %v3306, %v4170
        %v4311 = vmul.f32 %v3308, %v4174
        %v4312 = vmul.f32 %v3310, %v4178
        %v4313 = vmul.f32 %v3312, %v4182
        %v4314 = vmul.f32 %v3314, %v4186
        %v4315 = vld [vmem:[#allocation13] sm:$0x1]
        %v4317 = vlaneseq
        %v4318 = vshrl.u32 %v4317, 7
        %v4319 = vsub.s32 0, %v4318
        %v4320 = vrot.slane %v4315, %v4319
        %4330 = vset.pattern.permute.xlu0 0
        %4331 = vperm.xlu0 %4330, %v4251
        %v4332 = vpop.permute.xlu0 %4331
        %4333 = vset.pattern.permute.xlu0 0
        %4334 = vperm.xlu0 %4333, %v4252
        %v4335 = vpop.permute.xlu0 %4334
        %4336 = vset.pattern.permute.xlu0 0
        %4337 = vperm.xlu0 %4336, %v4253
        %v4338 = vpop.permute.xlu0 %4337
        %4339 = vset.pattern.permute.xlu0 0
        %4340 = vperm.xlu0 %4339, %v4254
        %v4341 = vpop.permute.xlu0 %4340
        %4342 = vset.pattern.permute.xlu0 0
        %4343 = vperm.xlu0 %4342, %v4255
        %v4344 = vpop.permute.xlu0 %4343
        %4345 = vset.pattern.permute.xlu0 0
        %4346 = vperm.xlu0 %4345, %v4256
        %v4347 = vpop.permute.xlu0 %4346
        %4348 = vset.pattern.permute.xlu0 0
        %4349 = vperm.xlu0 %4348, %v4257
        %v4350 = vpop.permute.xlu0 %4349
        %4351 = vset.pattern.permute.xlu0 0
        %4352 = vperm.xlu0 %4351, %v4258
        %v4353 = vpop.permute.xlu0 %4352
        %v4354 = vlaneseq
        %v4355 = vshrl.u32 %v4354, 7
        %v4356 = vsub.s32 %v2443, %v4355
        %v4357 = vrot.slane %v4332, %v4356
        %v4358 = vlaneseq
        %v4359 = vshrl.u32 %v4358, 7
        %v4360 = vsub.s32 %v2443, %v4359
        %v4361 = vrot.slane %v4335, %v4360
        %v4362 = vlaneseq
        %v4363 = vshrl.u32 %v4362, 7
        %v4364 = vsub.s32 %v2443, %v4363
        %v4365 = vrot.slane %v4338, %v4364
        %v4366 = vlaneseq
        %v4367 = vshrl.u32 %v4366, 7
        %v4368 = vsub.s32 %v2443, %v4367
        %v4369 = vrot.slane %v4341, %v4368
        %v4370 = vlaneseq
        %v4371 = vshrl.u32 %v4370, 7
        %v4372 = vsub.s32 %v2443, %v4371
        %v4373 = vrot.slane %v4344, %v4372
        %v4374 = vlaneseq
        %v4375 = vshrl.u32 %v4374, 7
        %v4376 = vsub.s32 %v2443, %v4375
        %v4377 = vrot.slane %v4347, %v4376
        %v4378 = vlaneseq
        %v4379 = vshrl.u32 %v4378, 7
        %v4380 = vsub.s32 %v2443, %v4379
        %v4381 = vrot.slane %v4350, %v4380
        %v4382 = vlaneseq
        %v4383 = vshrl.u32 %v4382, 7
        %v4384 = vsub.s32 %v2443, %v4383
        %v4385 = vrot.slane %v4353, %v4384
        %v4386 = vsel %vm2700, %v4361, %v4357
        %v4387 = vsel %vm2702, %v4365, %v4386
        %v4388 = vsel %vm2704, %v4369, %v4387
        %v4389 = vsel %vm2706, %v4373, %v4388
        %v4390 = vsel %vm2708, %v4377, %v4389
        %v4391 = vsel %vm2710, %v4381, %v4390
        %v4392 = vsel %vm2712, %v4385, %v4391
        %v4393 = vsel %vm1863, %v4392, 0
        %4395 = vmatprep.subr.mxu0 0.0
        %4396 = vmatpush1.msra.mxu0 0.0
        %4397 = vmatprep.subr.mxu0 0.0
        %4398 = vmatpush1.msra.mxu0 0.0
        %4399 = vmatprep.subr.mxu0 0.0
        %4400 = vmatpush1.msra.mxu0 0.0
        %4401 = vmatprep.subr.mxu0 0.0
        %4402 = vmatpush1.msra.mxu0 0.0
        %4403 = vmatprep.subr.mxu0 0.0
        %4404 = vmatpush1.msra.mxu0 0.0
        %4405 = vmatprep.subr.mxu0 0.0
        %4406 = vmatpush1.msra.mxu0 0.0
        %4407 = vmatprep.subr.mxu0 0.0
        %4408 = vmatpush1.msra.mxu0 0.0
        %4409 = vmatprep.subr.mxu0 0.0
        %4410 = vmatpush1.msra.mxu0 0.0
        %4411 = vmatprep.subr.mxu0 0.0
        %4412 = vmatpush1.msra.mxu0 0.0
        %4413 = vmatprep.subr.mxu0 0.0
        %4414 = vmatpush1.msra.mxu0 0.0
        %4415 = vmatprep.subr.mxu0 0.0
        %4416 = vmatpush1.msra.mxu0 0.0
        %4417 = vmatprep.subr.mxu0 0.0
        %4418 = vmatpush1.msra.mxu0 0.0
        %4419 = vmatprep.subr.mxu0 0.0
        %4420 = vmatpush1.msra.mxu0 0.0
        %4421 = vmatprep.subr.mxu0 0.0
        %4422 = vmatpush1.msra.mxu0 0.0
        %4423 = vmatprep.subr.mxu0 0.0
        %4424 = vmatpush1.msra.mxu0 0.0
        %4425 = vmatprep.subr.mxu0 0.0
        %4426 = vmatpush1.msra.mxu0 %v592
        %4427 = vmatprep.subr.mxu0 0.0
        %4428 = vmatpush2.msra.mxu0 0.0
        %4429 = vmatprep.subr.mxu0 0.0
        %4430 = vmatpush2.msra.mxu0 0.0
        %4431 = vmatprep.subr.mxu0 0.0
        %4432 = vmatpush2.msra.mxu0 0.0
        %4433 = vmatprep.subr.mxu0 0.0
        %4434 = vmatpush2.msra.mxu0 0.0
        %4435 = vmatprep.subr.mxu0 0.0
        %4436 = vmatpush2.msra.mxu0 0.0
        %4437 = vmatprep.subr.mxu0 0.0
        %4438 = vmatpush2.msra.mxu0 0.0
        %4439 = vmatprep.subr.mxu0 0.0
        %4440 = vmatpush2.msra.mxu0 0.0
        %4441 = vmatprep.subr.mxu0 0.0
        %4442 = vmatpush2.msra.mxu0 0.0
        %4443 = vmatprep.subr.mxu0 0.0
        %4444 = vmatpush2.msra.mxu0 0.0
        %4445 = vmatprep.subr.mxu0 0.0
        %4446 = vmatpush2.msra.mxu0 0.0
        %4447 = vmatprep.subr.mxu0 0.0
        %4448 = vmatpush2.msra.mxu0 0.0
        %4449 = vmatprep.subr.mxu0 0.0
        %4450 = vmatpush2.msra.mxu0 0.0
        %4451 = vmatprep.subr.mxu0 0.0
        %4452 = vmatpush2.msra.mxu0 0.0
        %4453 = vmatprep.subr.mxu0 0.0
        %4454 = vmatpush2.msra.mxu0 0.0
        %4455 = vmatprep.subr.mxu0 0.0
        %4456 = vmatpush2.msra.mxu0 0.0
        %4457 = vmatprep.subr.mxu0 0.0
        %4458 = vmatpush2.msra.mxu0 0.0
        %4459 = vmatprep.mubr.f32.mxu0 0.0
        %4460 = vmatmul.mubr.f32.gmra.mxu0 %v4393
        %v4461 = vpop.f32.mrf.mxu0
        %v4462 = vadd.f32 %v4320, %v4461
        %v4463 = vpop.f32.mrf.mxu0
        %4464 = vdwg.mxu0
        %4473 = vset.pattern.permute.xlu0 0
        %4474 = vperm.xlu0 %4473, %v4259
        %v4475 = vpop.permute.xlu0 %4474
        %4476 = vset.pattern.permute.xlu0 0
        %4477 = vperm.xlu0 %4476, %v4260
        %v4478 = vpop.permute.xlu0 %4477
        %4479 = vset.pattern.permute.xlu0 0
        %4480 = vperm.xlu0 %4479, %v4261
        %v4481 = vpop.permute.xlu0 %4480
        %4482 = vset.pattern.permute.xlu0 0
        %4483 = vperm.xlu0 %4482, %v4262
        %v4484 = vpop.permute.xlu0 %4483
        %4485 = vset.pattern.permute.xlu0 0
        %4486 = vperm.xlu0 %4485, %v4263
        %v4487 = vpop.permute.xlu0 %4486
        %4488 = vset.pattern.permute.xlu0 0
        %4489 = vperm.xlu0 %4488, %v4264
        %v4490 = vpop.permute.xlu0 %4489
        %4491 = vset.pattern.permute.xlu0 0
        %4492 = vperm.xlu0 %4491, %v4265
        %v4493 = vpop.permute.xlu0 %4492
        %4494 = vset.pattern.permute.xlu0 0
        %4495 = vperm.xlu0 %4494, %v4266
        %v4496 = vpop.permute.xlu0 %4495
        %v4497 = vlaneseq
        %v4498 = vshrl.u32 %v4497, 7
        %v4499 = vsub.s32 %v2443, %v4498
        %v4500 = vrot.slane %v4475, %v4499
        %v4501 = vlaneseq
        %v4502 = vshrl.u32 %v4501, 7
        %v4503 = vsub.s32 %v2443, %v4502
        %v4504 = vrot.slane %v4478, %v4503
        %v4505 = vlaneseq
        %v4506 = vshrl.u32 %v4505, 7
        %v4507 = vsub.s32 %v2443, %v4506
        %v4508 = vrot.slane %v4481, %v4507
        %v4509 = vlaneseq
        %v4510 = vshrl.u32 %v4509, 7
        %v4511 = vsub.s32 %v2443, %v4510
        %v4512 = vrot.slane %v4484, %v4511
        %v4513 = vlaneseq
        %v4514 = vshrl.u32 %v4513, 7
        %v4515 = vsub.s32 %v2443, %v4514
        %v4516 = vrot.slane %v4487, %v4515
        %v4517 = vlaneseq
        %v4518 = vshrl.u32 %v4517, 7
        %v4519 = vsub.s32 %v2443, %v4518
        %v4520 = vrot.slane %v4490, %v4519
        %v4521 = vlaneseq
        %v4522 = vshrl.u32 %v4521, 7
        %v4523 = vsub.s32 %v2443, %v4522
        %v4524 = vrot.slane %v4493, %v4523
        %v4525 = vlaneseq
        %v4526 = vshrl.u32 %v4525, 7
        %v4527 = vsub.s32 %v2443, %v4526
        %v4528 = vrot.slane %v4496, %v4527
        %v4529 = vsel %vm2700, %v4504, %v4500
        %v4530 = vsel %vm2702, %v4508, %v4529
        %v4531 = vsel %vm2704, %v4512, %v4530
        %v4532 = vsel %vm2706, %v4516, %v4531
        %v4533 = vsel %vm2708, %v4520, %v4532
        %v4534 = vsel %vm2710, %v4524, %v4533
        %v4535 = vsel %vm2712, %v4528, %v4534
        %v4536 = vsel %vm1863, %v4535, 0
        %4538 = vmatprep.subr.mxu0 0.0
        %4539 = vmatpush1.msra.mxu0 0.0
        %4540 = vmatprep.subr.mxu0 0.0
        %4541 = vmatpush1.msra.mxu0 0.0
        %4542 = vmatprep.subr.mxu0 0.0
        %4543 = vmatpush1.msra.mxu0 0.0
        %4544 = vmatprep.subr.mxu0 0.0
        %4545 = vmatpush1.msra.mxu0 0.0
        %4546 = vmatprep.subr.mxu0 0.0
        %4547 = vmatpush1.msra.mxu0 0.0
        %4548 = vmatprep.subr.mxu0 0.0
        %4549 = vmatpush1.msra.mxu0 0.0
        %4550 = vmatprep.subr.mxu0 0.0
        %4551 = vmatpush1.msra.mxu0 0.0
        %4552 = vmatprep.subr.mxu0 0.0
        %4553 = vmatpush1.msra.mxu0 0.0
        %4554 = vmatprep.subr.mxu0 0.0
        %4555 = vmatpush1.msra.mxu0 0.0
        %4556 = vmatprep.subr.mxu0 0.0
        %4557 = vmatpush1.msra.mxu0 0.0
        %4558 = vmatprep.subr.mxu0 0.0
        %4559 = vmatpush1.msra.mxu0 0.0
        %4560 = vmatprep.subr.mxu0 0.0
        %4561 = vmatpush1.msra.mxu0 0.0
        %4562 = vmatprep.subr.mxu0 0.0
        %4563 = vmatpush1.msra.mxu0 0.0
        %4564 = vmatprep.subr.mxu0 0.0
        %4565 = vmatpush1.msra.mxu0 0.0
        %4566 = vmatprep.subr.mxu0 0.0
        %4567 = vmatpush1.msra.mxu0 0.0
        %4568 = vmatprep.subr.mxu0 0.0
        %4569 = vmatpush1.msra.mxu0 %v597
        %4570 = vmatprep.subr.mxu0 0.0
        %4571 = vmatpush2.msra.mxu0 0.0
        %4572 = vmatprep.subr.mxu0 0.0
        %4573 = vmatpush2.msra.mxu0 0.0
        %4574 = vmatprep.subr.mxu0 0.0
        %4575 = vmatpush2.msra.mxu0 0.0
        %4576 = vmatprep.subr.mxu0 0.0
        %4577 = vmatpush2.msra.mxu0 0.0
        %4578 = vmatprep.subr.mxu0 0.0
        %4579 = vmatpush2.msra.mxu0 0.0
        %4580 = vmatprep.subr.mxu0 0.0
        %4581 = vmatpush2.msra.mxu0 0.0
        %4582 = vmatprep.subr.mxu0 0.0
        %4583 = vmatpush2.msra.mxu0 0.0
        %4584 = vmatprep.subr.mxu0 0.0
        %4585 = vmatpush2.msra.mxu0 0.0
        %4586 = vmatprep.subr.mxu0 0.0
        %4587 = vmatpush2.msra.mxu0 0.0
        %4588 = vmatprep.subr.mxu0 0.0
        %4589 = vmatpush2.msra.mxu0 0.0
        %4590 = vmatprep.subr.mxu0 0.0
        %4591 = vmatpush2.msra.mxu0 0.0
        %4592 = vmatprep.subr.mxu0 0.0
        %4593 = vmatpush2.msra.mxu0 0.0
        %4594 = vmatprep.subr.mxu0 0.0
        %4595 = vmatpush2.msra.mxu0 0.0
        %4596 = vmatprep.subr.mxu0 0.0
        %4597 = vmatpush2.msra.mxu0 0.0
        %4598 = vmatprep.subr.mxu0 0.0
        %4599 = vmatpush2.msra.mxu0 0.0
        %4600 = vmatprep.subr.mxu0 0.0
        %4601 = vmatpush2.msra.mxu0 0.0
        %4602 = vmatprep.mubr.f32.mxu0 0.0
        %4603 = vmatmul.mubr.f32.gmra.mxu0 %v4536
        %v4604 = vpop.f32.mrf.mxu0
        %v4605 = vadd.f32 %v4320, %v4604
        %v4606 = vpop.f32.mrf.mxu0
        %4607 = vdwg.mxu0
        %4616 = vset.pattern.permute.xlu0 0
        %4617 = vperm.xlu0 %4616, %v4267
        %v4618 = vpop.permute.xlu0 %4617
        %4619 = vset.pattern.permute.xlu0 0
        %4620 = vperm.xlu0 %4619, %v4268
        %v4621 = vpop.permute.xlu0 %4620
        %4622 = vset.pattern.permute.xlu0 0
        %4623 = vperm.xlu0 %4622, %v4269
        %v4624 = vpop.permute.xlu0 %4623
        %4625 = vset.pattern.permute.xlu0 0
        %4626 = vperm.xlu0 %4625, %v4270
        %v4627 = vpop.permute.xlu0 %4626
        %4628 = vset.pattern.permute.xlu0 0
        %4629 = vperm.xlu0 %4628, %v4271
        %v4630 = vpop.permute.xlu0 %4629
        %4631 = vset.pattern.permute.xlu0 0
        %4632 = vperm.xlu0 %4631, %v4272
        %v4633 = vpop.permute.xlu0 %4632
        %4634 = vset.pattern.permute.xlu0 0
        %4635 = vperm.xlu0 %4634, %v4273
        %v4636 = vpop.permute.xlu0 %4635
        %4637 = vset.pattern.permute.xlu0 0
        %4638 = vperm.xlu0 %4637, %v4274
        %v4639 = vpop.permute.xlu0 %4638
        %v4640 = vlaneseq
        %v4641 = vshrl.u32 %v4640, 7
        %v4642 = vsub.s32 %v2443, %v4641
        %v4643 = vrot.slane %v4618, %v4642
        %v4644 = vlaneseq
        %v4645 = vshrl.u32 %v4644, 7
        %v4646 = vsub.s32 %v2443, %v4645
        %v4647 = vrot.slane %v4621, %v4646
        %v4648 = vlaneseq
        %v4649 = vshrl.u32 %v4648, 7
        %v4650 = vsub.s32 %v2443, %v4649
        %v4651 = vrot.slane %v4624, %v4650
        %v4652 = vlaneseq
        %v4653 = vshrl.u32 %v4652, 7
        %v4654 = vsub.s32 %v2443, %v4653
        %v4655 = vrot.slane %v4627, %v4654
        %v4656 = vlaneseq
        %v4657 = vshrl.u32 %v4656, 7
        %v4658 = vsub.s32 %v2443, %v4657
        %v4659 = vrot.slane %v4630, %v4658
        %v4660 = vlaneseq
        %v4661 = vshrl.u32 %v4660, 7
        %v4662 = vsub.s32 %v2443, %v4661
        %v4663 = vrot.slane %v4633, %v4662
        %v4664 = vlaneseq
        %v4665 = vshrl.u32 %v4664, 7
        %v4666 = vsub.s32 %v2443, %v4665
        %v4667 = vrot.slane %v4636, %v4666
        %v4668 = vlaneseq
        %v4669 = vshrl.u32 %v4668, 7
        %v4670 = vsub.s32 %v2443, %v4669
        %v4671 = vrot.slane %v4639, %v4670
        %v4672 = vsel %vm2700, %v4647, %v4643
        %v4673 = vsel %vm2702, %v4651, %v4672
        %v4674 = vsel %vm2704, %v4655, %v4673
        %v4675 = vsel %vm2706, %v4659, %v4674
        %v4676 = vsel %vm2708, %v4663, %v4675
        %v4677 = vsel %vm2710, %v4667, %v4676
        %v4678 = vsel %vm2712, %v4671, %v4677
        %v4679 = vsel %vm1863, %v4678, 0
        %4681 = vmatprep.subr.mxu0 0.0
        %4682 = vmatpush1.msra.mxu0 0.0
        %4683 = vmatprep.subr.mxu0 0.0
        %4684 = vmatpush1.msra.mxu0 0.0
        %4685 = vmatprep.subr.mxu0 0.0
        %4686 = vmatpush1.msra.mxu0 0.0
        %4687 = vmatprep.subr.mxu0 0.0
        %4688 = vmatpush1.msra.mxu0 0.0
        %4689 = vmatprep.subr.mxu0 0.0
        %4690 = vmatpush1.msra.mxu0 0.0
        %4691 = vmatprep.subr.mxu0 0.0
        %4692 = vmatpush1.msra.mxu0 0.0
        %4693 = vmatprep.subr.mxu0 0.0
        %4694 = vmatpush1.msra.mxu0 0.0
        %4695 = vmatprep.subr.mxu0 0.0
        %4696 = vmatpush1.msra.mxu0 0.0
        %4697 = vmatprep.subr.mxu0 0.0
        %4698 = vmatpush1.msra.mxu0 0.0
        %4699 = vmatprep.subr.mxu0 0.0
        %4700 = vmatpush1.msra.mxu0 0.0
        %4701 = vmatprep.subr.mxu0 0.0
        %4702 = vmatpush1.msra.mxu0 0.0
        %4703 = vmatprep.subr.mxu0 0.0
        %4704 = vmatpush1.msra.mxu0 0.0
        %4705 = vmatprep.subr.mxu0 0.0
        %4706 = vmatpush1.msra.mxu0 0.0
        %4707 = vmatprep.subr.mxu0 0.0
        %4708 = vmatpush1.msra.mxu0 0.0
        %4709 = vmatprep.subr.mxu0 0.0
        %4710 = vmatpush1.msra.mxu0 0.0
        %4711 = vmatprep.subr.mxu0 0.0
        %4712 = vmatpush1.msra.mxu0 %v602
        %4713 = vmatprep.subr.mxu0 0.0
        %4714 = vmatpush2.msra.mxu0 0.0
        %4715 = vmatprep.subr.mxu0 0.0
        %4716 = vmatpush2.msra.mxu0 0.0
        %4717 = vmatprep.subr.mxu0 0.0
        %4718 = vmatpush2.msra.mxu0 0.0
        %4719 = vmatprep.subr.mxu0 0.0
        %4720 = vmatpush2.msra.mxu0 0.0
        %4721 = vmatprep.subr.mxu0 0.0
        %4722 = vmatpush2.msra.mxu0 0.0
        %4723 = vmatprep.subr.mxu0 0.0
        %4724 = vmatpush2.msra.mxu0 0.0
        %4725 = vmatprep.subr.mxu0 0.0
        %4726 = vmatpush2.msra.mxu0 0.0
        %4727 = vmatprep.subr.mxu0 0.0
        %4728 = vmatpush2.msra.mxu0 0.0
        %4729 = vmatprep.subr.mxu0 0.0
        %4730 = vmatpush2.msra.mxu0 0.0
        %4731 = vmatprep.subr.mxu0 0.0
        %4732 = vmatpush2.msra.mxu0 0.0
        %4733 = vmatprep.subr.mxu0 0.0
        %4734 = vmatpush2.msra.mxu0 0.0
        %4735 = vmatprep.subr.mxu0 0.0
        %4736 = vmatpush2.msra.mxu0 0.0
        %4737 = vmatprep.subr.mxu0 0.0
        %4738 = vmatpush2.msra.mxu0 0.0
        %4739 = vmatprep.subr.mxu0 0.0
        %4740 = vmatpush2.msra.mxu0 0.0
        %4741 = vmatprep.subr.mxu0 0.0
        %4742 = vmatpush2.msra.mxu0 0.0
        %4743 = vmatprep.subr.mxu0 0.0
        %4744 = vmatpush2.msra.mxu0 0.0
        %4745 = vmatprep.mubr.f32.mxu0 0.0
        %4746 = vmatmul.mubr.f32.gmra.mxu0 %v4679
        %v4747 = vpop.f32.mrf.mxu0
        %v4748 = vadd.f32 %v4320, %v4747
        %v4749 = vpop.f32.mrf.mxu0
        %4750 = vdwg.mxu0
        %4759 = vset.pattern.permute.xlu0 0
        %4760 = vperm.xlu0 %4759, %v4275
        %v4761 = vpop.permute.xlu0 %4760
        %4762 = vset.pattern.permute.xlu0 0
        %4763 = vperm.xlu0 %4762, %v4276
        %v4764 = vpop.permute.xlu0 %4763
        %4765 = vset.pattern.permute.xlu0 0
        %4766 = vperm.xlu0 %4765, %v4277
        %v4767 = vpop.permute.xlu0 %4766
        %4768 = vset.pattern.permute.xlu0 0
        %4769 = vperm.xlu0 %4768, %v4278
        %v4770 = vpop.permute.xlu0 %4769
        %4771 = vset.pattern.permute.xlu0 0
        %4772 = vperm.xlu0 %4771, %v4279
        %v4773 = vpop.permute.xlu0 %4772
        %4774 = vset.pattern.permute.xlu0 0
        %4775 = vperm.xlu0 %4774, %v4280
        %v4776 = vpop.permute.xlu0 %4775
        %4777 = vset.pattern.permute.xlu0 0
        %4778 = vperm.xlu0 %4777, %v4281
        %v4779 = vpop.permute.xlu0 %4778
        %4780 = vset.pattern.permute.xlu0 0
        %4781 = vperm.xlu0 %4780, %v4282
        %v4782 = vpop.permute.xlu0 %4781
        %v4783 = vlaneseq
        %v4784 = vshrl.u32 %v4783, 7
        %v4785 = vsub.s32 %v2443, %v4784
        %v4786 = vrot.slane %v4761, %v4785
        %v4787 = vlaneseq
        %v4788 = vshrl.u32 %v4787, 7
        %v4789 = vsub.s32 %v2443, %v4788
        %v4790 = vrot.slane %v4764, %v4789
        %v4791 = vlaneseq
        %v4792 = vshrl.u32 %v4791, 7
        %v4793 = vsub.s32 %v2443, %v4792
        %v4794 = vrot.slane %v4767, %v4793
        %v4795 = vlaneseq
        %v4796 = vshrl.u32 %v4795, 7
        %v4797 = vsub.s32 %v2443, %v4796
        %v4798 = vrot.slane %v4770, %v4797
        %v4799 = vlaneseq
        %v4800 = vshrl.u32 %v4799, 7
        %v4801 = vsub.s32 %v2443, %v4800
        %v4802 = vrot.slane %v4773, %v4801
        %v4803 = vlaneseq
        %v4804 = vshrl.u32 %v4803, 7
        %v4805 = vsub.s32 %v2443, %v4804
        %v4806 = vrot.slane %v4776, %v4805
        %v4807 = vlaneseq
        %v4808 = vshrl.u32 %v4807, 7
        %v4809 = vsub.s32 %v2443, %v4808
        %v4810 = vrot.slane %v4779, %v4809
        %v4811 = vlaneseq
        %v4812 = vshrl.u32 %v4811, 7
        %v4813 = vsub.s32 %v2443, %v4812
        %v4814 = vrot.slane %v4782, %v4813
        %v4815 = vsel %vm2700, %v4790, %v4786
        %v4816 = vsel %vm2702, %v4794, %v4815
        %v4817 = vsel %vm2704, %v4798, %v4816
        %v4818 = vsel %vm2706, %v4802, %v4817
        %v4819 = vsel %vm2708, %v4806, %v4818
        %v4820 = vsel %vm2710, %v4810, %v4819
        %v4821 = vsel %vm2712, %v4814, %v4820
        %v4822 = vsel %vm1863, %v4821, 0
        %4824 = vmatprep.subr.mxu0 0.0
        %4825 = vmatpush1.msra.mxu0 0.0
        %4826 = vmatprep.subr.mxu0 0.0
        %4827 = vmatpush1.msra.mxu0 0.0
        %4828 = vmatprep.subr.mxu0 0.0
        %4829 = vmatpush1.msra.mxu0 0.0
        %4830 = vmatprep.subr.mxu0 0.0
        %4831 = vmatpush1.msra.mxu0 0.0
        %4832 = vmatprep.subr.mxu0 0.0
        %4833 = vmatpush1.msra.mxu0 0.0
        %4834 = vmatprep.subr.mxu0 0.0
        %4835 = vmatpush1.msra.mxu0 0.0
        %4836 = vmatprep.subr.mxu0 0.0
        %4837 = vmatpush1.msra.mxu0 0.0
        %4838 = vmatprep.subr.mxu0 0.0
        %4839 = vmatpush1.msra.mxu0 0.0
        %4840 = vmatprep.subr.mxu0 0.0
        %4841 = vmatpush1.msra.mxu0 0.0
        %4842 = vmatprep.subr.mxu0 0.0
        %4843 = vmatpush1.msra.mxu0 0.0
        %4844 = vmatprep.subr.mxu0 0.0
        %4845 = vmatpush1.msra.mxu0 0.0
        %4846 = vmatprep.subr.mxu0 0.0
        %4847 = vmatpush1.msra.mxu0 0.0
        %4848 = vmatprep.subr.mxu0 0.0
        %4849 = vmatpush1.msra.mxu0 0.0
        %4850 = vmatprep.subr.mxu0 0.0
        %4851 = vmatpush1.msra.mxu0 0.0
        %4852 = vmatprep.subr.mxu0 0.0
        %4853 = vmatpush1.msra.mxu0 0.0
        %4854 = vmatprep.subr.mxu0 0.0
        %4855 = vmatpush1.msra.mxu0 %v607
        %4856 = vmatprep.subr.mxu0 0.0
        %4857 = vmatpush2.msra.mxu0 0.0
        %4858 = vmatprep.subr.mxu0 0.0
        %4859 = vmatpush2.msra.mxu0 0.0
        %4860 = vmatprep.subr.mxu0 0.0
        %4861 = vmatpush2.msra.mxu0 0.0
        %4862 = vmatprep.subr.mxu0 0.0
        %4863 = vmatpush2.msra.mxu0 0.0
        %4864 = vmatprep.subr.mxu0 0.0
        %4865 = vmatpush2.msra.mxu0 0.0
        %4866 = vmatprep.subr.mxu0 0.0
        %4867 = vmatpush2.msra.mxu0 0.0
        %4868 = vmatprep.subr.mxu0 0.0
        %4869 = vmatpush2.msra.mxu0 0.0
        %4870 = vmatprep.subr.mxu0 0.0
        %4871 = vmatpush2.msra.mxu0 0.0
        %4872 = vmatprep.subr.mxu0 0.0
        %4873 = vmatpush2.msra.mxu0 0.0
        %4874 = vmatprep.subr.mxu0 0.0
        %4875 = vmatpush2.msra.mxu0 0.0
        %4876 = vmatprep.subr.mxu0 0.0
        %4877 = vmatpush2.msra.mxu0 0.0
        %4878 = vmatprep.subr.mxu0 0.0
        %4879 = vmatpush2.msra.mxu0 0.0
        %4880 = vmatprep.subr.mxu0 0.0
        %4881 = vmatpush2.msra.mxu0 0.0
        %4882 = vmatprep.subr.mxu0 0.0
        %4883 = vmatpush2.msra.mxu0 0.0
        %4884 = vmatprep.subr.mxu0 0.0
        %4885 = vmatpush2.msra.mxu0 0.0
        %4886 = vmatprep.subr.mxu0 0.0
        %4887 = vmatpush2.msra.mxu0 0.0
        %4888 = vmatprep.mubr.f32.mxu0 0.0
        %4889 = vmatmul.mubr.f32.gmra.mxu0 %v4822
        %v4890 = vpop.f32.mrf.mxu0
        %v4891 = vadd.f32 %v4320, %v4890
        %v4892 = vpop.f32.mrf.mxu0
        %4893 = vdwg.mxu0
        %4902 = vset.pattern.permute.xlu0 0
        %4903 = vperm.xlu0 %4902, %v4283
        %v4904 = vpop.permute.xlu0 %4903
        %4905 = vset.pattern.permute.xlu0 0
        %4906 = vperm.xlu0 %4905, %v4284
        %v4907 = vpop.permute.xlu0 %4906
        %4908 = vset.pattern.permute.xlu0 0
        %4909 = vperm.xlu0 %4908, %v4285
        %v4910 = vpop.permute.xlu0 %4909
        %4911 = vset.pattern.permute.xlu0 0
        %4912 = vperm.xlu0 %4911, %v4286
        %v4913 = vpop.permute.xlu0 %4912
        %4914 = vset.pattern.permute.xlu0 0
        %4915 = vperm.xlu0 %4914, %v4287
        %v4916 = vpop.permute.xlu0 %4915
        %4917 = vset.pattern.permute.xlu0 0
        %4918 = vperm.xlu0 %4917, %v4288
        %v4919 = vpop.permute.xlu0 %4918
        %4920 = vset.pattern.permute.xlu0 0
        %4921 = vperm.xlu0 %4920, %v4289
        %v4922 = vpop.permute.xlu0 %4921
        %4923 = vset.pattern.permute.xlu0 0
        %4924 = vperm.xlu0 %4923, %v4290
        %v4925 = vpop.permute.xlu0 %4924
        %v4926 = vlaneseq
        %v4927 = vshrl.u32 %v4926, 7
        %v4928 = vsub.s32 %v2443, %v4927
        %v4929 = vrot.slane %v4904, %v4928
        %v4930 = vlaneseq
        %v4931 = vshrl.u32 %v4930, 7
        %v4932 = vsub.s32 %v2443, %v4931
        %v4933 = vrot.slane %v4907, %v4932
        %v4934 = vlaneseq
        %v4935 = vshrl.u32 %v4934, 7
        %v4936 = vsub.s32 %v2443, %v4935
        %v4937 = vrot.slane %v4910, %v4936
        %v4938 = vlaneseq
        %v4939 = vshrl.u32 %v4938, 7
        %v4940 = vsub.s32 %v2443, %v4939
        %v4941 = vrot.slane %v4913, %v4940
        %v4942 = vlaneseq
        %v4943 = vshrl.u32 %v4942, 7
        %v4944 = vsub.s32 %v2443, %v4943
        %v4945 = vrot.slane %v4916, %v4944
        %v4946 = vlaneseq
        %v4947 = vshrl.u32 %v4946, 7
        %v4948 = vsub.s32 %v2443, %v4947
        %v4949 = vrot.slane %v4919, %v4948
        %v4950 = vlaneseq
        %v4951 = vshrl.u32 %v4950, 7
        %v4952 = vsub.s32 %v2443, %v4951
        %v4953 = vrot.slane %v4922, %v4952
        %v4954 = vlaneseq
        %v4955 = vshrl.u32 %v4954, 7
        %v4956 = vsub.s32 %v2443, %v4955
        %v4957 = vrot.slane %v4925, %v4956
        %v4958 = vsel %vm2700, %v4933, %v4929
        %v4959 = vsel %vm2702, %v4937, %v4958
        %v4960 = vsel %vm2704, %v4941, %v4959
        %v4961 = vsel %vm2706, %v4945, %v4960
        %v4962 = vsel %vm2708, %v4949, %v4961
        %v4963 = vsel %vm2710, %v4953, %v4962
        %v4964 = vsel %vm2712, %v4957, %v4963
        %v4965 = vsel %vm1863, %v4964, 0
        %4967 = vmatprep.subr.mxu0 0.0
        %4968 = vmatpush1.msra.mxu0 0.0
        %4969 = vmatprep.subr.mxu0 0.0
        %4970 = vmatpush1.msra.mxu0 0.0
        %4971 = vmatprep.subr.mxu0 0.0
        %4972 = vmatpush1.msra.mxu0 0.0
        %4973 = vmatprep.subr.mxu0 0.0
        %4974 = vmatpush1.msra.mxu0 0.0
        %4975 = vmatprep.subr.mxu0 0.0
        %4976 = vmatpush1.msra.mxu0 0.0
        %4977 = vmatprep.subr.mxu0 0.0
        %4978 = vmatpush1.msra.mxu0 0.0
        %4979 = vmatprep.subr.mxu0 0.0
        %4980 = vmatpush1.msra.mxu0 0.0
        %4981 = vmatprep.subr.mxu0 0.0
        %4982 = vmatpush1.msra.mxu0 0.0
        %4983 = vmatprep.subr.mxu0 0.0
        %4984 = vmatpush1.msra.mxu0 0.0
        %4985 = vmatprep.subr.mxu0 0.0
        %4986 = vmatpush1.msra.mxu0 0.0
        %4987 = vmatprep.subr.mxu0 0.0
        %4988 = vmatpush1.msra.mxu0 0.0
        %4989 = vmatprep.subr.mxu0 0.0
        %4990 = vmatpush1.msra.mxu0 0.0
        %4991 = vmatprep.subr.mxu0 0.0
        %4992 = vmatpush1.msra.mxu0 0.0
        %4993 = vmatprep.subr.mxu0 0.0
        %4994 = vmatpush1.msra.mxu0 0.0
        %4995 = vmatprep.subr.mxu0 0.0
        %4996 = vmatpush1.msra.mxu0 0.0
        %4997 = vmatprep.subr.mxu0 0.0
        %4998 = vmatpush1.msra.mxu0 %v612
        %4999 = vmatprep.subr.mxu0 0.0
        %5000 = vmatpush2.msra.mxu0 0.0
        %5001 = vmatprep.subr.mxu0 0.0
        %5002 = vmatpush2.msra.mxu0 0.0
        %5003 = vmatprep.subr.mxu0 0.0
        %5004 = vmatpush2.msra.mxu0 0.0
        %5005 = vmatprep.subr.mxu0 0.0
        %5006 = vmatpush2.msra.mxu0 0.0
        %5007 = vmatprep.subr.mxu0 0.0
        %5008 = vmatpush2.msra.mxu0 0.0
        %5009 = vmatprep.subr.mxu0 0.0
        %5010 = vmatpush2.msra.mxu0 0.0
        %5011 = vmatprep.subr.mxu0 0.0
        %5012 = vmatpush2.msra.mxu0 0.0
        %5013 = vmatprep.subr.mxu0 0.0
        %5014 = vmatpush2.msra.mxu0 0.0
        %5015 = vmatprep.subr.mxu0 0.0
        %5016 = vmatpush2.msra.mxu0 0.0
        %5017 = vmatprep.subr.mxu0 0.0
        %5018 = vmatpush2.msra.mxu0 0.0
        %5019 = vmatprep.subr.mxu0 0.0
        %5020 = vmatpush2.msra.mxu0 0.0
        %5021 = vmatprep.subr.mxu0 0.0
        %5022 = vmatpush2.msra.mxu0 0.0
        %5023 = vmatprep.subr.mxu0 0.0
        %5024 = vmatpush2.msra.mxu0 0.0
        %5025 = vmatprep.subr.mxu0 0.0
        %5026 = vmatpush2.msra.mxu0 0.0
        %5027 = vmatprep.subr.mxu0 0.0
        %5028 = vmatpush2.msra.mxu0 0.0
        %5029 = vmatprep.subr.mxu0 0.0
        %5030 = vmatpush2.msra.mxu0 0.0
        %5031 = vmatprep.mubr.f32.mxu0 0.0
        %5032 = vmatmul.mubr.f32.gmra.mxu0 %v4965
        %v5033 = vpop.f32.mrf.mxu0
        %v5034 = vadd.f32 %v4320, %v5033
        %v5035 = vpop.f32.mrf.mxu0
        %5036 = vdwg.mxu0
        %5045 = vset.pattern.permute.xlu0 0
        %5046 = vperm.xlu0 %5045, %v4291
        %v5047 = vpop.permute.xlu0 %5046
        %5048 = vset.pattern.permute.xlu0 0
        %5049 = vperm.xlu0 %5048, %v4292
        %v5050 = vpop.permute.xlu0 %5049
        %5051 = vset.pattern.permute.xlu0 0
        %5052 = vperm.xlu0 %5051, %v4293
        %v5053 = vpop.permute.xlu0 %5052
        %5054 = vset.pattern.permute.xlu0 0
        %5055 = vperm.xlu0 %5054, %v4294
        %v5056 = vpop.permute.xlu0 %5055
        %5057 = vset.pattern.permute.xlu0 0
        %5058 = vperm.xlu0 %5057, %v4295
        %v5059 = vpop.permute.xlu0 %5058
        %5060 = vset.pattern.permute.xlu0 0
        %5061 = vperm.xlu0 %5060, %v4296
        %v5062 = vpop.permute.xlu0 %5061
        %5063 = vset.pattern.permute.xlu0 0
        %5064 = vperm.xlu0 %5063, %v4297
        %v5065 = vpop.permute.xlu0 %5064
        %5066 = vset.pattern.permute.xlu0 0
        %5067 = vperm.xlu0 %5066, %v4298
        %v5068 = vpop.permute.xlu0 %5067
        %v5069 = vlaneseq
        %v5070 = vshrl.u32 %v5069, 7
        %v5071 = vsub.s32 %v2443, %v5070
        %v5072 = vrot.slane %v5047, %v5071
        %v5073 = vlaneseq
        %v5074 = vshrl.u32 %v5073, 7
        %v5075 = vsub.s32 %v2443, %v5074
        %v5076 = vrot.slane %v5050, %v5075
        %v5077 = vlaneseq
        %v5078 = vshrl.u32 %v5077, 7
        %v5079 = vsub.s32 %v2443, %v5078
        %v5080 = vrot.slane %v5053, %v5079
        %v5081 = vlaneseq
        %v5082 = vshrl.u32 %v5081, 7
        %v5083 = vsub.s32 %v2443, %v5082
        %v5084 = vrot.slane %v5056, %v5083
        %v5085 = vlaneseq
        %v5086 = vshrl.u32 %v5085, 7
        %v5087 = vsub.s32 %v2443, %v5086
        %v5088 = vrot.slane %v5059, %v5087
        %v5089 = vlaneseq
        %v5090 = vshrl.u32 %v5089, 7
        %v5091 = vsub.s32 %v2443, %v5090
        %v5092 = vrot.slane %v5062, %v5091
        %v5093 = vlaneseq
        %v5094 = vshrl.u32 %v5093, 7
        %v5095 = vsub.s32 %v2443, %v5094
        %v5096 = vrot.slane %v5065, %v5095
        %v5097 = vlaneseq
        %v5098 = vshrl.u32 %v5097, 7
        %v5099 = vsub.s32 %v2443, %v5098
        %v5100 = vrot.slane %v5068, %v5099
        %v5101 = vsel %vm2700, %v5076, %v5072
        %v5102 = vsel %vm2702, %v5080, %v5101
        %v5103 = vsel %vm2704, %v5084, %v5102
        %v5104 = vsel %vm2706, %v5088, %v5103
        %v5105 = vsel %vm2708, %v5092, %v5104
        %v5106 = vsel %vm2710, %v5096, %v5105
        %v5107 = vsel %vm2712, %v5100, %v5106
        %v5108 = vsel %vm1863, %v5107, 0
        %5110 = vmatprep.subr.mxu0 0.0
        %5111 = vmatpush1.msra.mxu0 0.0
        %5112 = vmatprep.subr.mxu0 0.0
        %5113 = vmatpush1.msra.mxu0 0.0
        %5114 = vmatprep.subr.mxu0 0.0
        %5115 = vmatpush1.msra.mxu0 0.0
        %5116 = vmatprep.subr.mxu0 0.0
        %5117 = vmatpush1.msra.mxu0 0.0
        %5118 = vmatprep.subr.mxu0 0.0
        %5119 = vmatpush1.msra.mxu0 0.0
        %5120 = vmatprep.subr.mxu0 0.0
        %5121 = vmatpush1.msra.mxu0 0.0
        %5122 = vmatprep.subr.mxu0 0.0
        %5123 = vmatpush1.msra.mxu0 0.0
        %5124 = vmatprep.subr.mxu0 0.0
        %5125 = vmatpush1.msra.mxu0 0.0
        %5126 = vmatprep.subr.mxu0 0.0
        %5127 = vmatpush1.msra.mxu0 0.0
        %5128 = vmatprep.subr.mxu0 0.0
        %5129 = vmatpush1.msra.mxu0 0.0
        %5130 = vmatprep.subr.mxu0 0.0
        %5131 = vmatpush1.msra.mxu0 0.0
        %5132 = vmatprep.subr.mxu0 0.0
        %5133 = vmatpush1.msra.mxu0 0.0
        %5134 = vmatprep.subr.mxu0 0.0
        %5135 = vmatpush1.msra.mxu0 0.0
        %5136 = vmatprep.subr.mxu0 0.0
        %5137 = vmatpush1.msra.mxu0 0.0
        %5138 = vmatprep.subr.mxu0 0.0
        %5139 = vmatpush1.msra.mxu0 0.0
        %5140 = vmatprep.subr.mxu0 0.0
        %5141 = vmatpush1.msra.mxu0 %v617
        %5142 = vmatprep.subr.mxu0 0.0
        %5143 = vmatpush2.msra.mxu0 0.0
        %5144 = vmatprep.subr.mxu0 0.0
        %5145 = vmatpush2.msra.mxu0 0.0
        %5146 = vmatprep.subr.mxu0 0.0
        %5147 = vmatpush2.msra.mxu0 0.0
        %5148 = vmatprep.subr.mxu0 0.0
        %5149 = vmatpush2.msra.mxu0 0.0
        %5150 = vmatprep.subr.mxu0 0.0
        %5151 = vmatpush2.msra.mxu0 0.0
        %5152 = vmatprep.subr.mxu0 0.0
        %5153 = vmatpush2.msra.mxu0 0.0
        %5154 = vmatprep.subr.mxu0 0.0
        %5155 = vmatpush2.msra.mxu0 0.0
        %5156 = vmatprep.subr.mxu0 0.0
        %5157 = vmatpush2.msra.mxu0 0.0
        %5158 = vmatprep.subr.mxu0 0.0
        %5159 = vmatpush2.msra.mxu0 0.0
        %5160 = vmatprep.subr.mxu0 0.0
        %5161 = vmatpush2.msra.mxu0 0.0
        %5162 = vmatprep.subr.mxu0 0.0
        %5163 = vmatpush2.msra.mxu0 0.0
        %5164 = vmatprep.subr.mxu0 0.0
        %5165 = vmatpush2.msra.mxu0 0.0
        %5166 = vmatprep.subr.mxu0 0.0
        %5167 = vmatpush2.msra.mxu0 0.0
        %5168 = vmatprep.subr.mxu0 0.0
        %5169 = vmatpush2.msra.mxu0 0.0
        %5170 = vmatprep.subr.mxu0 0.0
        %5171 = vmatpush2.msra.mxu0 0.0
        %5172 = vmatprep.subr.mxu0 0.0
        %5173 = vmatpush2.msra.mxu0 0.0
        %5174 = vmatprep.mubr.f32.mxu0 0.0
        %5175 = vmatmul.mubr.f32.gmra.mxu0 %v5108
        %v5176 = vpop.f32.mrf.mxu0
        %v5177 = vadd.f32 %v4320, %v5176
        %v5178 = vpop.f32.mrf.mxu0
        %5179 = vdwg.mxu0
        %5188 = vset.pattern.permute.xlu0 0
        %5189 = vperm.xlu0 %5188, %v4299
        %v5190 = vpop.permute.xlu0 %5189
        %5191 = vset.pattern.permute.xlu0 0
        %5192 = vperm.xlu0 %5191, %v4300
        %v5193 = vpop.permute.xlu0 %5192
        %5194 = vset.pattern.permute.xlu0 0
        %5195 = vperm.xlu0 %5194, %v4301
        %v5196 = vpop.permute.xlu0 %5195
        %5197 = vset.pattern.permute.xlu0 0
        %5198 = vperm.xlu0 %5197, %v4302
        %v5199 = vpop.permute.xlu0 %5198
        %5200 = vset.pattern.permute.xlu0 0
        %5201 = vperm.xlu0 %5200, %v4303
        %v5202 = vpop.permute.xlu0 %5201
        %5203 = vset.pattern.permute.xlu0 0
        %5204 = vperm.xlu0 %5203, %v4304
        %v5205 = vpop.permute.xlu0 %5204
        %5206 = vset.pattern.permute.xlu0 0
        %5207 = vperm.xlu0 %5206, %v4305
        %v5208 = vpop.permute.xlu0 %5207
        %5209 = vset.pattern.permute.xlu0 0
        %5210 = vperm.xlu0 %5209, %v4306
        %v5211 = vpop.permute.xlu0 %5210
        %v5212 = vlaneseq
        %v5213 = vshrl.u32 %v5212, 7
        %v5214 = vsub.s32 %v2443, %v5213
        %v5215 = vrot.slane %v5190, %v5214
        %v5216 = vlaneseq
        %v5217 = vshrl.u32 %v5216, 7
        %v5218 = vsub.s32 %v2443, %v5217
        %v5219 = vrot.slane %v5193, %v5218
        %v5220 = vlaneseq
        %v5221 = vshrl.u32 %v5220, 7
        %v5222 = vsub.s32 %v2443, %v5221
        %v5223 = vrot.slane %v5196, %v5222
        %v5224 = vlaneseq
        %v5225 = vshrl.u32 %v5224, 7
        %v5226 = vsub.s32 %v2443, %v5225
        %v5227 = vrot.slane %v5199, %v5226
        %v5228 = vlaneseq
        %v5229 = vshrl.u32 %v5228, 7
        %v5230 = vsub.s32 %v2443, %v5229
        %v5231 = vrot.slane %v5202, %v5230
        %v5232 = vlaneseq
        %v5233 = vshrl.u32 %v5232, 7
        %v5234 = vsub.s32 %v2443, %v5233
        %v5235 = vrot.slane %v5205, %v5234
        %v5236 = vlaneseq
        %v5237 = vshrl.u32 %v5236, 7
        %v5238 = vsub.s32 %v2443, %v5237
        %v5239 = vrot.slane %v5208, %v5238
        %v5240 = vlaneseq
        %v5241 = vshrl.u32 %v5240, 7
        %v5242 = vsub.s32 %v2443, %v5241
        %v5243 = vrot.slane %v5211, %v5242
        %v5244 = vsel %vm2700, %v5219, %v5215
        %v5245 = vsel %vm2702, %v5223, %v5244
        %v5246 = vsel %vm2704, %v5227, %v5245
        %v5247 = vsel %vm2706, %v5231, %v5246
        %v5248 = vsel %vm2708, %v5235, %v5247
        %v5249 = vsel %vm2710, %v5239, %v5248
        %v5250 = vsel %vm2712, %v5243, %v5249
        %v5251 = vsel %vm1863, %v5250, 0
        %5253 = vmatprep.subr.mxu0 0.0
        %5254 = vmatpush1.msra.mxu0 0.0
        %5255 = vmatprep.subr.mxu0 0.0
        %5256 = vmatpush1.msra.mxu0 0.0
        %5257 = vmatprep.subr.mxu0 0.0
        %5258 = vmatpush1.msra.mxu0 0.0
        %5259 = vmatprep.subr.mxu0 0.0
        %5260 = vmatpush1.msra.mxu0 0.0
        %5261 = vmatprep.subr.mxu0 0.0
        %5262 = vmatpush1.msra.mxu0 0.0
        %5263 = vmatprep.subr.mxu0 0.0
        %5264 = vmatpush1.msra.mxu0 0.0
        %5265 = vmatprep.subr.mxu0 0.0
        %5266 = vmatpush1.msra.mxu0 0.0
        %5267 = vmatprep.subr.mxu0 0.0
        %5268 = vmatpush1.msra.mxu0 0.0
        %5269 = vmatprep.subr.mxu0 0.0
        %5270 = vmatpush1.msra.mxu0 0.0
        %5271 = vmatprep.subr.mxu0 0.0
        %5272 = vmatpush1.msra.mxu0 0.0
        %5273 = vmatprep.subr.mxu0 0.0
        %5274 = vmatpush1.msra.mxu0 0.0
        %5275 = vmatprep.subr.mxu0 0.0
        %5276 = vmatpush1.msra.mxu0 0.0
        %5277 = vmatprep.subr.mxu0 0.0
        %5278 = vmatpush1.msra.mxu0 0.0
        %5279 = vmatprep.subr.mxu0 0.0
        %5280 = vmatpush1.msra.mxu0 0.0
        %5281 = vmatprep.subr.mxu0 0.0
        %5282 = vmatpush1.msra.mxu0 0.0
        %5283 = vmatprep.subr.mxu0 0.0
        %5284 = vmatpush1.msra.mxu0 %v622
        %5285 = vmatprep.subr.mxu0 0.0
        %5286 = vmatpush2.msra.mxu0 0.0
        %5287 = vmatprep.subr.mxu0 0.0
        %5288 = vmatpush2.msra.mxu0 0.0
        %5289 = vmatprep.subr.mxu0 0.0
        %5290 = vmatpush2.msra.mxu0 0.0
        %5291 = vmatprep.subr.mxu0 0.0
        %5292 = vmatpush2.msra.mxu0 0.0
        %5293 = vmatprep.subr.mxu0 0.0
        %5294 = vmatpush2.msra.mxu0 0.0
        %5295 = vmatprep.subr.mxu0 0.0
        %5296 = vmatpush2.msra.mxu0 0.0
        %5297 = vmatprep.subr.mxu0 0.0
        %5298 = vmatpush2.msra.mxu0 0.0
        %5299 = vmatprep.subr.mxu0 0.0
        %5300 = vmatpush2.msra.mxu0 0.0
        %5301 = vmatprep.subr.mxu0 0.0
        %5302 = vmatpush2.msra.mxu0 0.0
        %5303 = vmatprep.subr.mxu0 0.0
        %5304 = vmatpush2.msra.mxu0 0.0
        %5305 = vmatprep.subr.mxu0 0.0
        %5306 = vmatpush2.msra.mxu0 0.0
        %5307 = vmatprep.subr.mxu0 0.0
        %5308 = vmatpush2.msra.mxu0 0.0
        %5309 = vmatprep.subr.mxu0 0.0
        %5310 = vmatpush2.msra.mxu0 0.0
        %5311 = vmatprep.subr.mxu0 0.0
        %5312 = vmatpush2.msra.mxu0 0.0
        %5313 = vmatprep.subr.mxu0 0.0
        %5314 = vmatpush2.msra.mxu0 0.0
        %5315 = vmatprep.subr.mxu0 0.0
        %5316 = vmatpush2.msra.mxu0 0.0
        %5317 = vmatprep.mubr.f32.mxu0 0.0
        %5318 = vmatmul.mubr.f32.gmra.mxu0 %v5251
        %v5319 = vpop.f32.mrf.mxu0
        %v5320 = vadd.f32 %v4320, %v5319
        %v5321 = vpop.f32.mrf.mxu0
        %5322 = vdwg.mxu0
        %5331 = vset.pattern.permute.xlu0 0
        %5332 = vperm.xlu0 %5331, %v4307
        %v5333 = vpop.permute.xlu0 %5332
        %5334 = vset.pattern.permute.xlu0 0
        %5335 = vperm.xlu0 %5334, %v4308
        %v5336 = vpop.permute.xlu0 %5335
        %5337 = vset.pattern.permute.xlu0 0
        %5338 = vperm.xlu0 %5337, %v4309
        %v5339 = vpop.permute.xlu0 %5338
        %5340 = vset.pattern.permute.xlu0 0
        %5341 = vperm.xlu0 %5340, %v4310
        %v5342 = vpop.permute.xlu0 %5341
        %5343 = vset.pattern.permute.xlu0 0
        %5344 = vperm.xlu0 %5343, %v4311
        %v5345 = vpop.permute.xlu0 %5344
        %5346 = vset.pattern.permute.xlu0 0
        %5347 = vperm.xlu0 %5346, %v4312
        %v5348 = vpop.permute.xlu0 %5347
        %5349 = vset.pattern.permute.xlu0 0
        %5350 = vperm.xlu0 %5349, %v4313
        %v5351 = vpop.permute.xlu0 %5350
        %5352 = vset.pattern.permute.xlu0 0
        %5353 = vperm.xlu0 %5352, %v4314
        %v5354 = vpop.permute.xlu0 %5353
        %v5355 = vlaneseq
        %v5356 = vshrl.u32 %v5355, 7
        %v5357 = vsub.s32 %v2443, %v5356
        %v5358 = vrot.slane %v5333, %v5357
        %v5359 = vlaneseq
        %v5360 = vshrl.u32 %v5359, 7
        %v5361 = vsub.s32 %v2443, %v5360
        %v5362 = vrot.slane %v5336, %v5361
        %v5363 = vlaneseq
        %v5364 = vshrl.u32 %v5363, 7
        %v5365 = vsub.s32 %v2443, %v5364
        %v5366 = vrot.slane %v5339, %v5365
        %v5367 = vlaneseq
        %v5368 = vshrl.u32 %v5367, 7
        %v5369 = vsub.s32 %v2443, %v5368
        %v5370 = vrot.slane %v5342, %v5369
        %v5371 = vlaneseq
        %v5372 = vshrl.u32 %v5371, 7
        %v5373 = vsub.s32 %v2443, %v5372
        %v5374 = vrot.slane %v5345, %v5373
        %v5375 = vlaneseq
        %v5376 = vshrl.u32 %v5375, 7
        %v5377 = vsub.s32 %v2443, %v5376
        %v5378 = vrot.slane %v5348, %v5377
        %v5379 = vlaneseq
        %v5380 = vshrl.u32 %v5379, 7
        %v5381 = vsub.s32 %v2443, %v5380
        %v5382 = vrot.slane %v5351, %v5381
        %v5383 = vlaneseq
        %v5384 = vshrl.u32 %v5383, 7
        %v5385 = vsub.s32 %v2443, %v5384
        %v5386 = vrot.slane %v5354, %v5385
        %v5387 = vsel %vm2700, %v5362, %v5358
        %v5388 = vsel %vm2702, %v5366, %v5387
        %v5389 = vsel %vm2704, %v5370, %v5388
        %v5390 = vsel %vm2706, %v5374, %v5389
        %v5391 = vsel %vm2708, %v5378, %v5390
        %v5392 = vsel %vm2710, %v5382, %v5391
        %v5393 = vsel %vm2712, %v5386, %v5392
        %v5394 = vsel %vm1863, %v5393, 0
        %5396 = vmatprep.subr.mxu0 0.0
        %5397 = vmatpush1.msra.mxu0 0.0
        %5398 = vmatprep.subr.mxu0 0.0
        %5399 = vmatpush1.msra.mxu0 0.0
        %5400 = vmatprep.subr.mxu0 0.0
        %5401 = vmatpush1.msra.mxu0 0.0
        %5402 = vmatprep.subr.mxu0 0.0
        %5403 = vmatpush1.msra.mxu0 0.0
        %5404 = vmatprep.subr.mxu0 0.0
        %5405 = vmatpush1.msra.mxu0 0.0
        %5406 = vmatprep.subr.mxu0 0.0
        %5407 = vmatpush1.msra.mxu0 0.0
        %5408 = vmatprep.subr.mxu0 0.0
        %5409 = vmatpush1.msra.mxu0 0.0
        %5410 = vmatprep.subr.mxu0 0.0
        %5411 = vmatpush1.msra.mxu0 0.0
        %5412 = vmatprep.subr.mxu0 0.0
        %5413 = vmatpush1.msra.mxu0 0.0
        %5414 = vmatprep.subr.mxu0 0.0
        %5415 = vmatpush1.msra.mxu0 0.0
        %5416 = vmatprep.subr.mxu0 0.0
        %5417 = vmatpush1.msra.mxu0 0.0
        %5418 = vmatprep.subr.mxu0 0.0
        %5419 = vmatpush1.msra.mxu0 0.0
        %5420 = vmatprep.subr.mxu0 0.0
        %5421 = vmatpush1.msra.mxu0 0.0
        %5422 = vmatprep.subr.mxu0 0.0
        %5423 = vmatpush1.msra.mxu0 0.0
        %5424 = vmatprep.subr.mxu0 0.0
        %5425 = vmatpush1.msra.mxu0 0.0
        %5426 = vmatprep.subr.mxu0 0.0
        %5427 = vmatpush1.msra.mxu0 %v627
        %5428 = vmatprep.subr.mxu0 0.0
        %5429 = vmatpush2.msra.mxu0 0.0
        %5430 = vmatprep.subr.mxu0 0.0
        %5431 = vmatpush2.msra.mxu0 0.0
        %5432 = vmatprep.subr.mxu0 0.0
        %5433 = vmatpush2.msra.mxu0 0.0
        %5434 = vmatprep.subr.mxu0 0.0
        %5435 = vmatpush2.msra.mxu0 0.0
        %5436 = vmatprep.subr.mxu0 0.0
        %5437 = vmatpush2.msra.mxu0 0.0
        %5438 = vmatprep.subr.mxu0 0.0
        %5439 = vmatpush2.msra.mxu0 0.0
        %5440 = vmatprep.subr.mxu0 0.0
        %5441 = vmatpush2.msra.mxu0 0.0
        %5442 = vmatprep.subr.mxu0 0.0
        %5443 = vmatpush2.msra.mxu0 0.0
        %5444 = vmatprep.subr.mxu0 0.0
        %5445 = vmatpush2.msra.mxu0 0.0
        %5446 = vmatprep.subr.mxu0 0.0
        %5447 = vmatpush2.msra.mxu0 0.0
        %5448 = vmatprep.subr.mxu0 0.0
        %5449 = vmatpush2.msra.mxu0 0.0
        %5450 = vmatprep.subr.mxu0 0.0
        %5451 = vmatpush2.msra.mxu0 0.0
        %5452 = vmatprep.subr.mxu0 0.0
        %5453 = vmatpush2.msra.mxu0 0.0
        %5454 = vmatprep.subr.mxu0 0.0
        %5455 = vmatpush2.msra.mxu0 0.0
        %5456 = vmatprep.subr.mxu0 0.0
        %5457 = vmatpush2.msra.mxu0 0.0
        %5458 = vmatprep.subr.mxu0 0.0
        %5459 = vmatpush2.msra.mxu0 0.0
        %5460 = vmatprep.mubr.f32.mxu0 0.0
        %5461 = vmatmul.mubr.f32.gmra.mxu0 %v5394
        %v5462 = vpop.f32.mrf.mxu0
        %v5463 = vadd.f32 %v4320, %v5462
        %v5464 = vpop.f32.mrf.mxu0
        %5465 = vdwg.mxu0
        %v5466 = vmax.f32 %v4462, 0.0
        %v5467 = vmax.f32 %v4605, 0.0
        %v5468 = vmax.f32 %v4748, 0.0
        %v5469 = vmax.f32 %v4891, 0.0
        %v5470 = vmax.f32 %v5034, 0.0
        %v5471 = vmax.f32 %v5177, 0.0
        %v5472 = vmax.f32 %v5320, 0.0
        %v5473 = vmax.f32 %v5463, 0.0
        %v5474 = vcombine.low %v5466, %v5468
        %v5475 = vcombine.high %v5466, %v5468
        %v5477 = vunpack.c.l.s4 1983009808
        %v5478 = vunpack.c.0.s8 %v5477
        %v5479 = vlaneseq
        %v5480 = vshrl.u32 %v5479, 7
        %v5481 = vsub.s32 %v5478, %v5480
        %v5482 = vrot.slane %v5474, %v5481
        %v5484 = vunpack.c.l.s4 1983009808
        %v5485 = vunpack.c.0.s8 %v5484
        %v5486 = vlaneseq
        %v5487 = vshrl.u32 %v5486, 7
        %v5488 = vsub.s32 %v5485, %v5487
        %v5489 = vrot.slane %v5475, %v5488
        %v5490 = vcombine.low %v5467, %v5469
        %v5491 = vcombine.high %v5467, %v5469
        %v5493 = vunpack.c.l.s4 1983009808
        %v5494 = vunpack.c.0.s8 %v5493
        %v5495 = vlaneseq
        %v5496 = vshrl.u32 %v5495, 7
        %v5497 = vsub.s32 %v5494, %v5496
        %v5498 = vrot.slane %v5490, %v5497
        %v5500 = vunpack.c.l.s4 1983009808
        %v5501 = vunpack.c.0.s8 %v5500
        %v5502 = vlaneseq
        %v5503 = vshrl.u32 %v5502, 7
        %v5504 = vsub.s32 %v5501, %v5503
        %v5505 = vrot.slane %v5491, %v5504
        %v5506 = vcombine.low %v5470, %v5472
        %v5507 = vcombine.high %v5470, %v5472
        %v5509 = vunpack.c.l.s4 1983009808
        %v5510 = vunpack.c.0.s8 %v5509
        %v5511 = vlaneseq
        %v5512 = vshrl.u32 %v5511, 7
        %v5513 = vsub.s32 %v5510, %v5512
        %v5514 = vrot.slane %v5506, %v5513
        %v5516 = vunpack.c.l.s4 1983009808
        %v5517 = vunpack.c.0.s8 %v5516
        %v5518 = vlaneseq
        %v5519 = vshrl.u32 %v5518, 7
        %v5520 = vsub.s32 %v5517, %v5519
        %v5521 = vrot.slane %v5507, %v5520
        %v5522 = vcombine.low %v5471, %v5473
        %v5523 = vcombine.high %v5471, %v5473
        %v5525 = vunpack.c.l.s4 1983009808
        %v5526 = vunpack.c.0.s8 %v5525
        %v5527 = vlaneseq
        %v5528 = vshrl.u32 %v5527, 7
        %v5529 = vsub.s32 %v5526, %v5528
        %v5530 = vrot.slane %v5522, %v5529
        %v5532 = vunpack.c.l.s4 1983009808
        %v5533 = vunpack.c.0.s8 %v5532
        %v5534 = vlaneseq
        %v5535 = vshrl.u32 %v5534, 7
        %v5536 = vsub.s32 %v5533, %v5535
        %v5537 = vrot.slane %v5523, %v5536
        %v5538 = vcombine.low %v5482, %v5498
        %v5539 = vcombine.high %v5482, %v5498
        %v5541 = vunpack.c.l.s4 1934713408
        %v5542 = vunpack.c.0.s8 %v5541
        %v5543 = vlaneseq
        %v5544 = vshrl.u32 %v5543, 7
        %v5545 = vsub.s32 %v5542, %v5544
        %v5546 = vrot.slane %v5538, %v5545
        %v5548 = vunpack.c.l.s4 1934713408
        %v5549 = vunpack.c.0.s8 %v5548
        %v5550 = vlaneseq
        %v5551 = vshrl.u32 %v5550, 7
        %v5552 = vsub.s32 %v5549, %v5551
        %v5553 = vrot.slane %v5539, %v5552
        %v5554 = vcombine.low %v5489, %v5505
        %v5555 = vcombine.high %v5489, %v5505
        %v5557 = vunpack.c.l.s4 1934713408
        %v5558 = vunpack.c.0.s8 %v5557
        %v5559 = vlaneseq
        %v5560 = vshrl.u32 %v5559, 7
        %v5561 = vsub.s32 %v5558, %v5560
        %v5562 = vrot.slane %v5554, %v5561
        %v5564 = vunpack.c.l.s4 1934713408
        %v5565 = vunpack.c.0.s8 %v5564
        %v5566 = vlaneseq
        %v5567 = vshrl.u32 %v5566, 7
        %v5568 = vsub.s32 %v5565, %v5567
        %v5569 = vrot.slane %v5555, %v5568
        %v5570 = vcombine.low %v5514, %v5530
        %v5571 = vcombine.high %v5514, %v5530
        %v5573 = vunpack.c.l.s4 1934713408
        %v5574 = vunpack.c.0.s8 %v5573
        %v5575 = vlaneseq
        %v5576 = vshrl.u32 %v5575, 7
        %v5577 = vsub.s32 %v5574, %v5576
        %v5578 = vrot.slane %v5570, %v5577
        %v5580 = vunpack.c.l.s4 1934713408
        %v5581 = vunpack.c.0.s8 %v5580
        %v5582 = vlaneseq
        %v5583 = vshrl.u32 %v5582, 7
        %v5584 = vsub.s32 %v5581, %v5583
        %v5585 = vrot.slane %v5571, %v5584
        %v5586 = vcombine.low %v5521, %v5537
        %v5587 = vcombine.high %v5521, %v5537
        %v5589 = vunpack.c.l.s4 1934713408
        %v5590 = vunpack.c.0.s8 %v5589
        %v5591 = vlaneseq
        %v5592 = vshrl.u32 %v5591, 7
        %v5593 = vsub.s32 %v5590, %v5592
        %v5594 = vrot.slane %v5586, %v5593
        %v5596 = vunpack.c.l.s4 1934713408
        %v5597 = vunpack.c.0.s8 %v5596
        %v5598 = vlaneseq
        %v5599 = vshrl.u32 %v5598, 7
        %v5600 = vsub.s32 %v5597, %v5599
        %v5601 = vrot.slane %v5587, %v5600
        %v5602 = vcombine.low %v5546, %v5578
        %v5603 = vcombine.high %v5546, %v5578
        %v5604 = vcombine.low %v5553, %v5585
        %v5605 = vcombine.high %v5553, %v5585
        %v5606 = vcombine.low %v5562, %v5594
        %v5607 = vcombine.high %v5562, %v5594
        %v5608 = vcombine.low %v5569, %v5601
        %v5609 = vcombine.high %v5569, %v5601
        %5611 = vrot.lane.b32.xlu0 %v5603, 8
        %v5612 = vpop.permute.xlu0 %5611
        %5615 = vrot.lane.b32.xlu0 %v5604, 16
        %v5616 = vpop.permute.xlu0 %5615
        %5619 = vrot.lane.b32.xlu0 %v5605, 24
        %v5620 = vpop.permute.xlu0 %5619
        %5623 = vrot.lane.b32.xlu0 %v5606, 32
        %v5624 = vpop.permute.xlu0 %5623
        %5627 = vrot.lane.b32.xlu0 %v5607, 40
        %v5628 = vpop.permute.xlu0 %5627
        %5631 = vrot.lane.b32.xlu0 %v5608, 48
        %v5632 = vpop.permute.xlu0 %5631
        %5635 = vrot.lane.b32.xlu0 %v5609, 56
        %v5636 = vpop.permute.xlu0 %5635
        %v5638 = vsel %vm1863, %v5602, %v5612
        %v5639 = vsel %vm500, %v5638, %v5616
        %vm5640 = vcmask 195584
        %v5641 = vsel %vm5640, %v5639, %v5620
        %vm5642 = vcmask 261120
        %v5643 = vsel %vm5642, %v5641, %v5624
        %vm5644 = vcmask 326656
        %v5645 = vsel %vm5644, %v5643, %v5628
        %vm5646 = vcmask 392192
        %v5647 = vsel %vm5646, %v5645, %v5632
        %vm5648 = vcmask 457728
        %v5649 = vsel %vm5648, %v5647, %v5636
        %v5650 = vld [vmem:[%s9] sm:$0xff]
        %v5651 = vld [vmem:[%s9 + $0x8] sm:$0xff]
        %v5652 = vld [vmem:[%s9 + $0x10] sm:$0xff]
        %v5653 = vld [vmem:[%s9 + $0x18] sm:$0xff]
        %v5654 = vld [vmem:[%s9 + $0x20] sm:$0xff]
        %v5655 = vld [vmem:[%s9 + $0x28] sm:$0xff]
        %v5656 = vld [vmem:[%s9 + $0x30] sm:$0xff]
        %v5657 = vld [vmem:[%s9 + $0x38] sm:$0xff]
        %v5658 = vld [vmem:[%s10] sm:$0x1]
        %v5660 = vlaneseq
        %v5661 = vshrl.u32 %v5660, 7
        %v5662 = vsub.s32 0, %v5661
        %v5663 = vrot.slane %v5658, %v5662
        %vm5665 = vcmask 523264
        %v5667 = vsel %vm5665, %v5649, 0
        %5669 = vmatprep.subr.mxu0 0.0
        %5670 = vmatpush1.msra.mxu0 0.0
        %5671 = vmatprep.subr.mxu0 0.0
        %5672 = vmatpush1.msra.mxu0 0.0
        %5673 = vmatprep.subr.mxu0 0.0
        %5674 = vmatpush1.msra.mxu0 0.0
        %5675 = vmatprep.subr.mxu0 0.0
        %5676 = vmatpush1.msra.mxu0 0.0
        %5677 = vmatprep.subr.mxu0 0.0
        %5678 = vmatpush1.msra.mxu0 0.0
        %5679 = vmatprep.subr.mxu0 0.0
        %5680 = vmatpush1.msra.mxu0 0.0
        %5681 = vmatprep.subr.mxu0 0.0
        %5682 = vmatpush1.msra.mxu0 0.0
        %5683 = vmatprep.subr.mxu0 0.0
        %5684 = vmatpush1.msra.mxu0 0.0
        %5685 = vmatprep.subr.mxu0 0.0
        %5686 = vmatpush1.msra.mxu0 %v5657
        %5687 = vmatprep.subr.mxu0 0.0
        %5688 = vmatpush1.msra.mxu0 %v5656
        %5689 = vmatprep.subr.mxu0 0.0
        %5690 = vmatpush1.msra.mxu0 %v5655
        %5691 = vmatprep.subr.mxu0 0.0
        %5692 = vmatpush1.msra.mxu0 %v5654
        %5693 = vmatprep.subr.mxu0 0.0
        %5694 = vmatpush1.msra.mxu0 %v5653
        %5695 = vmatprep.subr.mxu0 0.0
        %5696 = vmatpush1.msra.mxu0 %v5652
        %5697 = vmatprep.subr.mxu0 0.0
        %5698 = vmatpush1.msra.mxu0 %v5651
        %5699 = vmatprep.subr.mxu0 0.0
        %5700 = vmatpush1.msra.mxu0 %v5650
        %5701 = vmatprep.subr.mxu0 0.0
        %5702 = vmatpush2.msra.mxu0 0.0
        %5703 = vmatprep.subr.mxu0 0.0
        %5704 = vmatpush2.msra.mxu0 0.0
        %5705 = vmatprep.subr.mxu0 0.0
        %5706 = vmatpush2.msra.mxu0 0.0
        %5707 = vmatprep.subr.mxu0 0.0
        %5708 = vmatpush2.msra.mxu0 0.0
        %5709 = vmatprep.subr.mxu0 0.0
        %5710 = vmatpush2.msra.mxu0 0.0
        %5711 = vmatprep.subr.mxu0 0.0
        %5712 = vmatpush2.msra.mxu0 0.0
        %5713 = vmatprep.subr.mxu0 0.0
        %5714 = vmatpush2.msra.mxu0 0.0
        %5715 = vmatprep.subr.mxu0 0.0
        %5716 = vmatpush2.msra.mxu0 0.0
        %5717 = vmatprep.subr.mxu0 0.0
        %5718 = vmatpush2.msra.mxu0 0.0
        %5719 = vmatprep.subr.mxu0 0.0
        %5720 = vmatpush2.msra.mxu0 0.0
        %5721 = vmatprep.subr.mxu0 0.0
        %5722 = vmatpush2.msra.mxu0 0.0
        %5723 = vmatprep.subr.mxu0 0.0
        %5724 = vmatpush2.msra.mxu0 0.0
        %5725 = vmatprep.subr.mxu0 0.0
        %5726 = vmatpush2.msra.mxu0 0.0
        %5727 = vmatprep.subr.mxu0 0.0
        %5728 = vmatpush2.msra.mxu0 0.0
        %5729 = vmatprep.subr.mxu0 0.0
        %5730 = vmatpush2.msra.mxu0 0.0
        %5731 = vmatprep.subr.mxu0 0.0
        %5732 = vmatpush2.msra.mxu0 0.0
        %5733 = vmatprep.mubr.f32.mxu0 0.0
        %5734 = vmatmul.mubr.f32.gmra.mxu0 %v5667
        %v5735 = vpop.f32.mrf.mxu0
        %v5736 = vadd.f32 %v5663, %v5735
        %v5737 = vpop.f32.mrf.mxu0
        %5738 = vdwg.mxu0
        %v5739 = vmax.f32 %v5736, 0.0
        %5740 = vst [vmem:[%s481] sm:$0xff] %v5739
        %s5741 = sand.u32 %s275, 1
        %s5742 = scalar_lea.sflag [#allocation4], %s5741
        %s5743 = sand.u32 %s275, 1
        %s5744 = smul.addr %s5743, 8
        %s5745 = scalar_lea.vmem [#allocation14], %s5744
        // Predicated region
        $region93: #{tpu_custom_call.1} parent=63 // pred_check
          %p5746 = pneg %p285
        $region94: #{tpu_custom_call.1} parent=63 // pred_check_branch
          %5748 = sbr.rel (%p5746) target = $region96
        $region95: #{tpu_custom_call.1} parent=63 // pred_region
          %s5750 = ssub.s32 128, 128
          %5751 = vsyncadd %s5742, %s5750
          %s5752 = smul.addr %s31, 128
          %s5753 = scalar_lea.hbm %s11, %s5752
          %s5755 = sshll.u32 %s5745, 4
          %s5756 = int_to_ptr.vmem [resolvable:$true] %s5755
          %5758 = dma.vmem_to_hbm [thread:$0]  %s5756, 128, %s5753, %s5742
        $region96: #{tpu_custom_call.1} parent=63 // pred_fallthru
          _
      $region64: #{tpu_custom_call.1} parent=5 // pred_fallthru
        _
      %p5759 = scmp.le.s32.totalorder 2, %s26
      // Predicated region
      $region97: #{tpu_custom_call.1} parent=5 // pred_check
        %p5760 = pneg %p5759
      $region98: #{tpu_custom_call.1} parent=5 // pred_check_branch
        %5762 = sbr.rel (%p5760) target = $region100
      $region99: #{tpu_custom_call.1} parent=5 // pred_region
        %s5763 = ssub.s32 %s26, 2
        // Predicated region
        $region101: #{tpu_custom_call.1} parent=99 // pred_check
          %p5764 = pneg %p291
        $region102: #{tpu_custom_call.1} parent=99 // pred_check_branch
          %5766 = sbr.rel (%p5764) target = $region104
        $region103: #{tpu_custom_call.1} parent=99 // pred_region
          %s5767 = sand.u32 %s276, 1
          %s5768 = scalar_lea.sflag [#allocation4], %s5767
          %s5769 = sand.u32 %s276, 1
          %s5770 = smul.addr %s5769, 8
          %s5771 = scalar_lea.vmem [#allocation14], %s5770
          %5772 = dma.done %s5768, 128
        $region104: #{tpu_custom_call.1} parent=99 // pred_fallthru
          _
      $region100: #{tpu_custom_call.1} parent=5 // pred_fallthru
        _
    $region6: #{tpu_custom_call.1} parent=1 // loop_footer
      %s30 = sadd.s32 1, %s26
    $region7: #{tpu_custom_call.1} parent=1 // loop_footer_branch
      %25 = sbr.rel target = $region3
    $region8: #{tpu_custom_call.1} parent=1 // loop_exit
      _
    %5773 = vsyncpa [#allocation3], 1
    %s5774 = scalar_lea.sflag [#allocation3], 1
    %5775 = vsyncpa %s5774, 1
    %5776 = vsyncpa [#allocation6], 1
    %5777 = vsyncpa [#allocation9], 1
    %5778 = vsyncpa [#allocation12], 1
    %5779 = vsyncpa [#allocation4], 1
    %s5780 = scalar_lea.sflag [#allocation4], 1
    %5781 = vsyncpa %s5780, 1

</llo_original>
